<compile_context>
chip_gen: v7x
topology: tpu7x:2x2x1
jax: 0.10.0
libtpu: 0.0.40
codegen_flags: <defaults>
</compile_context>

<pallas_src>
import functools

import jax
import jax.numpy as jnp
import numpy as np
from jax.experimental import pallas as pl
from jax.experimental.pallas import tpu as pltpu

LN_EPS = 1e-5  # nn.LayerNorm default

# parameter order: must match the kernel signature below
PARAM_KEYS = ("ln1_g", "ln1_b", "wq", "wk", "wv", "wo", "bo",
              "ln2_g", "ln2_b", "w1", "b1", "w2", "b2")


# ---------------------------------------------------------------------------
# in-kernel helpers
# ---------------------------------------------------------------------------
def _layernorm(x, g, b):
    mean = jnp.mean(x, axis=-1, keepdims=True)
    var = jnp.mean(jnp.square(x - mean), axis=-1, keepdims=True)
    return (x - mean) * jax.lax.rsqrt(var + LN_EPS) * g + b


def _gelu_exact(x):
    # PyTorch nn.GELU default = exact erf gelu (kept for parity with the module).
    return 0.5 * x * (1.0 + jax.lax.erf(x * (2.0 ** -0.5)))


# ---------------------------------------------------------------------------
# fused multi-layer Pallas kernel (one batch tile per grid step, all layers of
# the chunk run back-to-back with the activation resident in VMEM/vregs)
# ---------------------------------------------------------------------------
def encoder_chunk_kernel(x_ref,
                         ln1_g_ref, ln1_b_ref, wq_ref, wk_ref, wv_ref, wo_ref, bo_ref,
                         ln2_g_ref, ln2_b_ref, w1_ref, b1_ref, w2_ref, b2_ref,
                         o_ref, *, n_layers, heads, dim_head, seq, batch_tile):
    bf16, f32 = jnp.bfloat16, jnp.float32

    x = x_ref[...].astype(f32)                       # (M, dim), M = batch_tile*seq
    m, dim = x.shape

    for l in range(n_layers):                        # static unroll over chunk depth
        # ---------------- attention block (PreNorm + residual) ----------------
        xn = _layernorm(x, ln1_g_ref[l], ln1_b_ref[l]).astype(bf16)

        # per-layer weight slabs: leading-axis loads (cheap, no relayout)
        wq_l = wq_ref[l]                             # (heads, dim, dk)  bf16, scale baked in
        wk_l = wk_ref[l]
        wv_l = wv_ref[l]
        wo_l = wo_ref[l]                             # (heads, dk, dim)  bf16

        attn = jnp.zeros((m, dim), f32)
        for h in range(heads):                       # small static head loop
            # 2D MXU matmuls with M = batch_tile*seq rows; head selection is a
            # free leading-axis index (no lane slicing of a wide QKV tensor).
            q = jnp.dot(xn, wq_l[h], preferred_element_type=f32)   # (M, dk)
            k = jnp.dot(xn, wk_l[h], preferred_element_type=f32)
            v = jnp.dot(xn, wv_l[h], preferred_element_type=f32)

            # split rows back into (batch_tile, seq, dk): leading-dim split only,
            # minor (lane) dim untouched -> layout no-op.
            q3 = q.reshape(batch_tile, seq, dim_head).astype(bf16)
            k3 = k.reshape(batch_tile, seq, dim_head).astype(bf16)
            v3 = v.reshape(batch_tile, seq, dim_head).astype(bf16)

            # contract the last dims directly: no explicit k.T / XLU transpose.
            dots = jnp.einsum('bnd,bmd->bnm', q3, k3,
                              preferred_element_type=f32)           # (bt, n, n)
            dots = dots - jnp.max(dots, axis=-1, keepdims=True)
            e = jnp.exp(dots)
            p = e * pl.reciprocal(jnp.sum(e, axis=-1, keepdims=True), approx=True)

            ctx = jnp.einsum('bnm,bmd->bnd', p.astype(bf16), v3,
                             preferred_element_type=f32)            # (bt, n, dk)

            # fuse the output projection into the head loop: accumulate directly
            # into an (M, dim) f32 accumulator -- no (M, inner) concat is formed.
            ctx2 = ctx.reshape(m, dim_head).astype(bf16)
            attn = attn + jnp.dot(ctx2, wo_l[h], preferred_element_type=f32)

        x = attn + bo_ref[l] + x                     # to_out bias + residual

        # ---------------- feed-forward block (PreNorm + residual) ----------------
        xn2 = _layernorm(x, ln2_g_ref[l], ln2_b_ref[l]).astype(bf16)
        hdn = jnp.dot(xn2, w1_ref[l], preferred_element_type=f32) + b1_ref[l]
        hdn = _gelu_exact(hdn)
        # Dropout(p=0.0) is the identity in forward semantics.
        y = jnp.dot(hdn.astype(bf16), w2_ref[l], preferred_element_type=f32) + b2_ref[l]
        x = y + x                                    # residual

    o_ref[...] = x.astype(o_ref.dtype)


# ---------------------------------------------------------------------------
# sizing helpers (generation-aware)
# ---------------------------------------------------------------------------
def _vmem_limit_bytes():
    # ~48 MiB on v7x (64 MiB physical VMEM), ~96 MiB on v5e/v6e (128 MiB physical).
    try:
        cap = int(pltpu.get_tpu_info().vmem_capacity_bytes)
    except Exception:
        cap = 64 << 20  # conservative (v7x-sized) fallback
    return min(100 << 20, max(32 << 20, (cap * 3) // 4))


def _pick_batch_tile(batch, seq, dim, hidden, vmem_limit):
    # Largest divisor of `batch` whose per-block working set fits a fraction of
    # VMEM; bigger tiles give the MXU M = bt*seq rows and amortize the ~0.35us
    # per-grid-step pipeline overhead.
    budget = vmem_limit // 4
    per_row_bytes = 4 * (3 * dim + hidden + seq)     # rough f32 live bytes per row
    best = 1
    for bt in range(1, batch + 1):
        if batch % bt == 0 and bt * seq * per_row_bytes <= budget:
            best = bt
    return best


# ---------------------------------------------------------------------------
# one pallas_call per depth-chunk
# ---------------------------------------------------------------------------
def _encoder_chunk_call(x2, params, *, heads, dim_head, batch, seq, vmem_limit):
    m_total, dim = x2.shape
    n_layers = params["ln1_g"].shape[0]
    hidden = params["w1"].shape[-1]

    bt = _pick_batch_tile(batch, seq, dim, hidden, vmem_limit)
    m_blk = bt * seq

    kernel = functools.partial(encoder_chunk_kernel, n_layers=n_layers, heads=heads,
                               dim_head=dim_head, seq=seq, batch_tile=bt)

    def _wspec(arr):
        # Constant block index -> Pallas fetches the weight once and reuses it
        # across grid steps.  TODO(synk): pipeline_mode=pl.Buffered(1) on v7x to
        # avoid the double-buffered copy at realistic dims.
        nd = arr.ndim
        return pl.BlockSpec(arr.shape, lambda i, _nd=nd: (0,) * _nd)

    in_specs = [pl.BlockSpec((m_blk, dim), lambda i: (i, 0))]       # x rows
    in_specs += [_wspec(params[k]) for k in PARAM_KEYS]

    return pl.pallas_call(
        kernel,
        out_shape=jax.ShapeDtypeStruct((m_total, dim), x2.dtype),
        grid=(batch // bt,),
        in_specs=in_specs,
        out_specs=pl.BlockSpec((m_blk, dim), lambda i: (i, 0)),
        compiler_params=pltpu.CompilerParams(
            dimension_semantics=("parallel",),
            vmem_limit_bytes=vmem_limit),
    )(x2, *[params[k] for k in PARAM_KEYS])


def encoder_forward(x, chunks, *, heads, dim_head):
    b, n, dim = x.shape
    vmem_limit = _vmem_limit_bytes()
    x2 = x.reshape(b * n, dim)                        # fold batch into the matmul M dim
    for ch in chunks:
        x2 = _encoder_chunk_call(x2, ch, heads=heads, dim_head=dim_head,
                                 batch=b, seq=n, vmem_limit=vmem_limit)
    return x2.reshape(b, n, dim)


# ---------------------------------------------------------------------------
# one-time parameter preparation (hoisted bf16 casts, per-head layouts, depth chunking)
# ---------------------------------------------------------------------------
def prepare_params(layers, *, heads, dim_head):
    bf16 = jnp.bfloat16
    scale = dim_head ** -0.5
    inner = heads * dim_head

    prepped = []
    for (ln1_g, ln1_b, wq, wkv, wo, bo, ln2_g, ln2_b, w1, b1, w2, b2) in layers:
        dim = wq.shape[0]
        hidden = w1.shape[1]

        def per_head(w):                              # (dim, inner) -> (heads, dim, dk)
            return jnp.transpose(w.reshape(dim, heads, dim_head), (1, 0, 2)).astype(bf16)

        prepped.append(dict(
            ln1_g=ln1_g.reshape(1, dim).astype(jnp.float32),
            ln1_b=ln1_b.reshape(1, dim).astype(jnp.float32),
            wq=per_head(wq * scale),                  # attention scale baked into Wq
            wk=per_head(wkv[:, :inner]),
            wv=per_head(wkv[:, inner:]),
            wo=wo.reshape(heads, dim_head, dim).astype(bf16),
            bo=bo.reshape(1, dim).astype(jnp.float32),
            ln2_g=ln2_g.reshape(1, dim).astype(jnp.float32),
            ln2_b=ln2_b.reshape(1, dim).astype(jnp.float32),
            w1=w1.astype(bf16), b1=b1.reshape(1, hidden).astype(jnp.float32),
            w2=w2.astype(bf16), b2=b2.reshape(1, dim).astype(jnp.float32),
        ))

    # Chunk consecutive layers so each chunk's stacked weights fit a VMEM budget;
    # each chunk is a single fused pallas_call (activation stays on chip between layers).
    budget = _vmem_limit_bytes() // 3
    chunks_of_layers, cur, cur_bytes = [], [], 0
    for p in prepped:
        nbytes = sum(int(np.prod(v.shape)) * v.dtype.itemsize for v in p.values())
        if cur and cur_bytes + nbytes > budget:
            chunks_of_layers.append(cur)
            cur, cur_bytes = [], 0
        cur.append(p)
        cur_bytes += nbytes
    if cur:
        chunks_of_layers.append(cur)

    return [{k: jnp.stack([p[k] for p in c]) for k in PARAM_KEYS}
            for c in chunks_of_layers]


# ---------------------------------------------------------------------------
# pure-JAX reference (f32, matches PyTorch module semantics)
# ---------------------------------------------------------------------------
def _ln_ref(x, g, b):
    mean = x.mean(-1, keepdims=True)
    var = ((x - mean) ** 2).mean(-1, keepdims=True)
    return (x - mean) / jnp.sqrt(var + LN_EPS) * g + b


def _layer_ref(x, p, heads, dim_head):
    ln1_g, ln1_b, wq, wkv, wo, bo, ln2_g, ln2_b, w1, b1, w2, b2 = p
    b, n, dim = x.shape
    inner = heads * dim_head

    xn = _ln_ref(x, ln1_g, ln1_b)
    q = xn @ wq
    kv = xn @ wkv
    k, v = kv[..., :inner], kv[..., inner:]
    split = lambda t: t.reshape(b, n, heads, dim_head).transpose(0, 2, 1, 3)
    q, k, v = map(split, (q, k, v))
    dots = jnp.einsum('bhid,bhjd->bhij', q, k) * dim_head ** -0.5
    attn = jax.nn.softmax(dots, axis=-1)
    out = jnp.einsum('bhij,bhjd->bhid', attn, v)
    out = out.transpose(0, 2, 1, 3).reshape(b, n, inner)
    x = out @ wo + bo + x

    xn2 = _ln_ref(x, ln2_g, ln2_b)
    h = xn2 @ w1 + b1
    h = 0.5 * h * (1.0 + jax.lax.erf(h * (2.0 ** -0.5)))
    return h @ w2 + b2 + x


def encoder_ref(x, layers, *, heads, dim_head):
    for p in layers:
        x = _layer_ref(x, p, heads, dim_head)
    return x


# ---------------------------------------------------------------------------
# deterministic parameter init (PyTorch-equivalent layout, f32)
# ---------------------------------------------------------------------------
def init_params(key, dim, depth, heads, dim_head, ff_mult=4):
    inner = heads * dim_head
    hidden = dim * ff_mult
    layers = []
    for _ in range(depth):
        keys = jax.random.split(key, 13)
        key = keys[0]
        layers.append((
            1.0 + 0.1 * jax.random.normal(keys[1], (dim,), jnp.float32),        # LN1 gamma
            0.1 * jax.random.normal(keys[2], (dim,), jnp.float32),              # LN1 beta
            0.05 * jax.random.normal(keys[3], (dim, inner), jnp.float32),       # Wq
            0.05 * jax.random.normal(keys[4], (dim, 2 * inner), jnp.float32),   # Wkv
            0.05 * jax.random.normal(keys[5], (inner, dim), jnp.float32),       # Wo
            0.05 * jax.random.normal(keys[6], (dim,), jnp.float32),             # bo
            1.0 + 0.1 * jax.random.normal(keys[7], (dim,), jnp.float32),        # LN2 gamma
            0.1 * jax.random.normal(keys[8], (dim,), jnp.float32),              # LN2 beta
            0.05 * jax.random.normal(keys[9], (dim, hidden), jnp.float32),      # W1
            0.05 * jax.random.normal(keys[10], (hidden,), jnp.float32),         # b1
            0.05 * jax.random.normal(keys[11], (hidden, dim), jnp.float32),     # W2
            0.05 * jax.random.normal(keys[12], (dim,), jnp.float32),            # b2
        ))
    return layers


# ---------------------------------------------------------------------------
if __name__ == "__main__":
    # small shapes consistent with the module
    batch, seq, dim = 2, 8, 32
    heads, dim_head, depth = 4, 8, 2

    key = jax.random.PRNGKey(0)
    kx, kp = jax.random.split(key)
    x = jax.random.normal(kx, (batch, seq, dim), jnp.float32)
    layers = init_params(kp, dim, depth, heads, dim_head)

    # one-time weight preparation (bf16 cast + per-head layout + depth chunking)
    chunks = prepare_params(layers, heads=heads, dim_head=dim_head)

    out = jax.block_until_ready(encoder_forward(x, chunks, heads=heads, dim_head=dim_head))
    ref = jax.block_until_ready(encoder_ref(x, layers, heads=heads, dim_head=dim_head))

    # bf16 matmul operands + approx reciprocal in the kernel vs f32 reference
    np.testing.assert_allclose(np.asarray(out), np.asarray(ref), rtol=3e-2, atol=3e-2)

    print("KERNEL_OK")
</pallas_src>

<mosaic_0001>
module attributes {stable_mosaic.version = 11 : i64} {
  func.func @encoder_chunk_kernel(%arg0: i32, %arg1: memref<16x32xf32, #tpu.memory_space<vmem>>, %arg2: memref<2x1x32xf32, #tpu.memory_space<vmem>>, %arg3: memref<2x1x32xf32, #tpu.memory_space<vmem>>, %arg4: memref<2x4x32x8xbf16, #tpu.memory_space<vmem>>, %arg5: memref<2x4x32x8xbf16, #tpu.memory_space<vmem>>, %arg6: memref<2x4x32x8xbf16, #tpu.memory_space<vmem>>, %arg7: memref<2x4x8x32xbf16, #tpu.memory_space<vmem>>, %arg8: memref<2x1x32xf32, #tpu.memory_space<vmem>>, %arg9: memref<2x1x32xf32, #tpu.memory_space<vmem>>, %arg10: memref<2x1x32xf32, #tpu.memory_space<vmem>>, %arg11: memref<2x32x128xbf16, #tpu.memory_space<vmem>>, %arg12: memref<2x1x128xf32, #tpu.memory_space<vmem>>, %arg13: memref<2x128x32xbf16, #tpu.memory_space<vmem>>, %arg14: memref<2x1x32xf32, #tpu.memory_space<vmem>>, %arg15: memref<16x32xf32, #tpu.memory_space<vmem>>) attributes {dimension_semantics = [#tpu.dimension_semantics<parallel>], iteration_bounds = array<i64: 1>, scalar_prefetch = 0 : i64, scratch_operands = 0 : i64, tpu.core_type = #tpu.core_type<tc>, window_params = [{transform_indices = @transform_0, window_bounds = array<i64: 16, 32>}, {pipeline_mode = #tpu.pipeline_mode<synchronous>, transform_indices = @transform_1, window_bounds = array<i64: 2, 1, 32>}, {pipeline_mode = #tpu.pipeline_mode<synchronous>, transform_indices = @transform_2, window_bounds = array<i64: 2, 1, 32>}, {pipeline_mode = #tpu.pipeline_mode<synchronous>, transform_indices = @transform_3, window_bounds = array<i64: 2, 4, 32, 8>}, {pipeline_mode = #tpu.pipeline_mode<synchronous>, transform_indices = @transform_4, window_bounds = array<i64: 2, 4, 32, 8>}, {pipeline_mode = #tpu.pipeline_mode<synchronous>, transform_indices = @transform_5, window_bounds = array<i64: 2, 4, 32, 8>}, {pipeline_mode = #tpu.pipeline_mode<synchronous>, transform_indices = @transform_6, window_bounds = array<i64: 2, 4, 8, 32>}, {pipeline_mode = #tpu.pipeline_mode<synchronous>, transform_indices = @transform_7, window_bounds = array<i64: 2, 1, 32>}, {pipeline_mode = #tpu.pipeline_mode<synchronous>, transform_indices = @transform_8, window_bounds = array<i64: 2, 1, 32>}, {pipeline_mode = #tpu.pipeline_mode<synchronous>, transform_indices = @transform_9, window_bounds = array<i64: 2, 1, 32>}, {pipeline_mode = #tpu.pipeline_mode<synchronous>, transform_indices = @transform_10, window_bounds = array<i64: 2, 32, 128>}, {pipeline_mode = #tpu.pipeline_mode<synchronous>, transform_indices = @transform_11, window_bounds = array<i64: 2, 1, 128>}, {pipeline_mode = #tpu.pipeline_mode<synchronous>, transform_indices = @transform_12, window_bounds = array<i64: 2, 128, 32>}, {pipeline_mode = #tpu.pipeline_mode<synchronous>, transform_indices = @transform_13, window_bounds = array<i64: 2, 1, 32>}, {transform_indices = @transform_14, window_bounds = array<i64: 16, 32>}]} {
    %c0 = arith.constant 0 : index
    %c0_0 = arith.constant 0 : index
    %0 = vector.load %arg1[%c0, %c0_0] : memref<16x32xf32, #tpu.memory_space<vmem>>, vector<16x32xf32>
    %c0_1 = arith.constant 0 : index
    %c0_2 = arith.constant 0 : index
    %c0_3 = arith.constant 0 : index
    %1 = vector.load %arg2[%c0_1, %c0_2, %c0_3] : memref<2x1x32xf32, #tpu.memory_space<vmem>>, vector<1x1x32xf32>
    %2 = vector.shape_cast %1 : vector<1x1x32xf32> to vector<1x32xf32>
    %c0_4 = arith.constant 0 : index
    %c0_5 = arith.constant 0 : index
    %c0_6 = arith.constant 0 : index
    %3 = vector.load %arg3[%c0_4, %c0_5, %c0_6] : memref<2x1x32xf32, #tpu.memory_space<vmem>>, vector<1x1x32xf32>
    %4 = vector.shape_cast %3 : vector<1x1x32xf32> to vector<1x32xf32>
    %cst = arith.constant dense<0.000000e+00> : vector<16xf32>
    %5 = vector.multi_reduction <add>, %0, %cst [1] : vector<16x32xf32> to vector<16xf32>
    %6 = vector.shape_cast %5 : vector<16xf32> to vector<16x1xf32>
    %cst_7 = arith.constant 3.200000e+01 : f32
    %7 = vector.broadcast %cst_7 : f32 to vector<16x1xf32>
    %8 = arith.divf %6, %7 : vector<16x1xf32>
    %9 = vector.broadcast %8 : vector<16x1xf32> to vector<16x32xf32>
    %10 = arith.subf %0, %9 : vector<16x32xf32>
    %11 = arith.mulf %10, %10 : vector<16x32xf32>
    %cst_8 = arith.constant dense<0.000000e+00> : vector<16xf32>
    %12 = vector.multi_reduction <add>, %11, %cst_8 [1] : vector<16x32xf32> to vector<16xf32>
    %13 = vector.shape_cast %12 : vector<16xf32> to vector<16x1xf32>
    %cst_9 = arith.constant 3.200000e+01 : f32
    %14 = vector.broadcast %cst_9 : f32 to vector<16x1xf32>
    %15 = arith.divf %13, %14 : vector<16x1xf32>
    %16 = vector.broadcast %8 : vector<16x1xf32> to vector<16x32xf32>
    %17 = arith.subf %0, %16 : vector<16x32xf32>
    %cst_10 = arith.constant 9.99999974E-6 : f32
    %18 = vector.broadcast %cst_10 : f32 to vector<16x1xf32>
    %19 = arith.addf %15, %18 : vector<16x1xf32>
    %20 = math.rsqrt %19 : vector<16x1xf32>
    %21 = vector.broadcast %20 : vector<16x1xf32> to vector<16x32xf32>
    %22 = arith.mulf %17, %21 : vector<16x32xf32>
    %23 = vector.broadcast %2 : vector<1x32xf32> to vector<16x32xf32>
    %24 = arith.mulf %22, %23 : vector<16x32xf32>
    %25 = vector.broadcast %4 : vector<1x32xf32> to vector<16x32xf32>
    %26 = arith.addf %24, %25 : vector<16x32xf32>
    %27 = arith.truncf %26 : vector<16x32xf32> to vector<16x32xbf16>
    %c0_11 = arith.constant 0 : index
    %c0_12 = arith.constant 0 : index
    %c0_13 = arith.constant 0 : index
    %c0_14 = arith.constant 0 : index
    %28 = vector.load %arg4[%c0_11, %c0_12, %c0_13, %c0_14] : memref<2x4x32x8xbf16, #tpu.memory_space<vmem>>, vector<1x4x32x8xbf16>
    %29 = vector.shape_cast %28 : vector<1x4x32x8xbf16> to vector<4x32x8xbf16>
    %c0_15 = arith.constant 0 : index
    %c0_16 = arith.constant 0 : index
    %c0_17 = arith.constant 0 : index
    %c0_18 = arith.constant 0 : index
    %30 = vector.load %arg5[%c0_15, %c0_16, %c0_17, %c0_18] : memref<2x4x32x8xbf16, #tpu.memory_space<vmem>>, vector<1x4x32x8xbf16>
    %31 = vector.shape_cast %30 : vector<1x4x32x8xbf16> to vector<4x32x8xbf16>
    %c0_19 = arith.constant 0 : index
    %c0_20 = arith.constant 0 : index
    %c0_21 = arith.constant 0 : index
    %c0_22 = arith.constant 0 : index
    %32 = vector.load %arg6[%c0_19, %c0_20, %c0_21, %c0_22] : memref<2x4x32x8xbf16, #tpu.memory_space<vmem>>, vector<1x4x32x8xbf16>
    %33 = vector.shape_cast %32 : vector<1x4x32x8xbf16> to vector<4x32x8xbf16>
    %c0_23 = arith.constant 0 : index
    %c0_24 = arith.constant 0 : index
    %c0_25 = arith.constant 0 : index
    %c0_26 = arith.constant 0 : index
    %34 = vector.load %arg7[%c0_23, %c0_24, %c0_25, %c0_26] : memref<2x4x8x32xbf16, #tpu.memory_space<vmem>>, vector<1x4x8x32xbf16>
    %35 = vector.shape_cast %34 : vector<1x4x8x32xbf16> to vector<4x8x32xbf16>
    %cst_27 = arith.constant 0.000000e+00 : f32
    %36 = vector.broadcast %cst_27 : f32 to vector<16x32xf32>
    %37 = vector.extract_strided_slice %29 {offsets = [0, 0, 0], sizes = [1, 32, 8], strides = [1, 1, 1]} : vector<4x32x8xbf16> to vector<1x32x8xbf16>
    %38 = vector.shape_cast %37 : vector<1x32x8xbf16> to vector<32x8xbf16>
    %cst_28 = arith.constant dense<0.000000e+00> : vector<16x8xf32>
    %39 = tpu.matmul %27, %38, %cst_28 {dimension_numbers = #tpu.dot_dimension_numbers<[1], [0], [0], [1], [0, 0, 1, 1], [], []>} : vector<16x32xbf16>, vector<32x8xbf16>, vector<16x8xf32> -> vector<16x8xf32>
    %40 = vector.extract_strided_slice %31 {offsets = [0, 0, 0], sizes = [1, 32, 8], strides = [1, 1, 1]} : vector<4x32x8xbf16> to vector<1x32x8xbf16>
    %41 = vector.shape_cast %40 : vector<1x32x8xbf16> to vector<32x8xbf16>
    %cst_29 = arith.constant dense<0.000000e+00> : vector<16x8xf32>
    %42 = tpu.matmul %27, %41, %cst_29 {dimension_numbers = #tpu.dot_dimension_numbers<[1], [0], [0], [1], [0, 0, 1, 1], [], []>} : vector<16x32xbf16>, vector<32x8xbf16>, vector<16x8xf32> -> vector<16x8xf32>
    %43 = vector.extract_strided_slice %33 {offsets = [0, 0, 0], sizes = [1, 32, 8], strides = [1, 1, 1]} : vector<4x32x8xbf16> to vector<1x32x8xbf16>
    %44 = vector.shape_cast %43 : vector<1x32x8xbf16> to vector<32x8xbf16>
    %cst_30 = arith.constant dense<0.000000e+00> : vector<16x8xf32>
    %45 = tpu.matmul %27, %44, %cst_30 {dimension_numbers = #tpu.dot_dimension_numbers<[1], [0], [0], [1], [0, 0, 1, 1], [], []>} : vector<16x32xbf16>, vector<32x8xbf16>, vector<16x8xf32> -> vector<16x8xf32>
    %46 = vector.shape_cast %39 : vector<16x8xf32> to vector<2x8x8xf32>
    %47 = arith.truncf %46 : vector<2x8x8xf32> to vector<2x8x8xbf16>
    %48 = vector.shape_cast %42 : vector<16x8xf32> to vector<2x8x8xf32>
    %49 = arith.truncf %48 : vector<2x8x8xf32> to vector<2x8x8xbf16>
    %50 = vector.shape_cast %45 : vector<16x8xf32> to vector<2x8x8xf32>
    %51 = arith.truncf %50 : vector<2x8x8xf32> to vector<2x8x8xbf16>
    "tpu.trace_start"() <{level = 10 : i32, message = "bnd,bmd->bnm"}> : () -> ()
    %cst_31 = arith.constant dense<0.000000e+00> : vector<2x8x8xf32>
    %52 = tpu.matmul %47, %49, %cst_31 {dimension_numbers = #tpu.dot_dimension_numbers<[2], [2], [1], [1], [0, 0, 0, 1, 1, 1], [0], [0]>} : vector<2x8x8xbf16>, vector<2x8x8xbf16>, vector<2x8x8xf32> -> vector<2x8x8xf32>
    "tpu.trace_stop"() : () -> ()
    %cst_32 = arith.constant dense<0xFF800000> : vector<2x8xf32>
    %53 = vector.multi_reduction <maximumf>, %52, %cst_32 [2] : vector<2x8x8xf32> to vector<2x8xf32>
    %54 = vector.shape_cast %53 : vector<2x8xf32> to vector<2x8x1xf32>
    %55 = vector.broadcast %54 : vector<2x8x1xf32> to vector<2x8x8xf32>
    %56 = arith.subf %52, %55 : vector<2x8x8xf32>
    %57 = math.exp %56 : vector<2x8x8xf32>
    %cst_33 = arith.constant dense<0.000000e+00> : vector<2x8xf32>
    %58 = vector.multi_reduction <add>, %57, %cst_33 [2] : vector<2x8x8xf32> to vector<2x8xf32>
    %59 = vector.shape_cast %58 : vector<2x8xf32> to vector<2x8x1xf32>
    %60 = tpu.reciprocal %59 {approx = true} : vector<2x8x1xf32> -> vector<2x8x1xf32>
    %61 = vector.broadcast %60 : vector<2x8x1xf32> to vector<2x8x8xf32>
    %62 = arith.mulf %57, %61 : vector<2x8x8xf32>
    %63 = arith.truncf %62 : vector<2x8x8xf32> to vector<2x8x8xbf16>
    "tpu.trace_start"() <{level = 10 : i32, message = "bnm,bmd->bnd"}> : () -> ()
    %cst_34 = arith.constant dense<0.000000e+00> : vector<2x8x8xf32>
    %64 = tpu.matmul %63, %51, %cst_34 {dimension_numbers = #tpu.dot_dimension_numbers<[2], [1], [1], [2], [0, 0, 0, 1, 1, 2], [0], [0]>} : vector<2x8x8xbf16>, vector<2x8x8xbf16>, vector<2x8x8xf32> -> vector<2x8x8xf32>
    "tpu.trace_stop"() : () -> ()
    %65 = vector.shape_cast %64 : vector<2x8x8xf32> to vector<16x8xf32>
    %66 = arith.truncf %65 : vector<16x8xf32> to vector<16x8xbf16>
    %67 = vector.extract_strided_slice %35 {offsets = [0, 0, 0], sizes = [1, 8, 32], strides = [1, 1, 1]} : vector<4x8x32xbf16> to vector<1x8x32xbf16>
    %68 = vector.shape_cast %67 : vector<1x8x32xbf16> to vector<8x32xbf16>
    %cst_35 = arith.constant dense<0.000000e+00> : vector<16x32xf32>
    %69 = tpu.matmul %66, %68, %cst_35 {dimension_numbers = #tpu.dot_dimension_numbers<[1], [0], [0], [1], [0, 0, 1, 1], [], []>} : vector<16x8xbf16>, vector<8x32xbf16>, vector<16x32xf32> -> vector<16x32xf32>
    %70 = arith.addf %36, %69 : vector<16x32xf32>
    %71 = vector.extract_strided_slice %29 {offsets = [1, 0, 0], sizes = [1, 32, 8], strides = [1, 1, 1]} : vector<4x32x8xbf16> to vector<1x32x8xbf16>
    %72 = vector.shape_cast %71 : vector<1x32x8xbf16> to vector<32x8xbf16>
    %cst_36 = arith.constant dense<0.000000e+00> : vector<16x8xf32>
    %73 = tpu.matmul %27, %72, %cst_36 {dimension_numbers = #tpu.dot_dimension_numbers<[1], [0], [0], [1], [0, 0, 1, 1], [], []>} : vector<16x32xbf16>, vector<32x8xbf16>, vector<16x8xf32> -> vector<16x8xf32>
    %74 = vector.extract_strided_slice %31 {offsets = [1, 0, 0], sizes = [1, 32, 8], strides = [1, 1, 1]} : vector<4x32x8xbf16> to vector<1x32x8xbf16>
    %75 = vector.shape_cast %74 : vector<1x32x8xbf16> to vector<32x8xbf16>
    %cst_37 = arith.constant dense<0.000000e+00> : vector<16x8xf32>
    %76 = tpu.matmul %27, %75, %cst_37 {dimension_numbers = #tpu.dot_dimension_numbers<[1], [0], [0], [1], [0, 0, 1, 1], [], []>} : vector<16x32xbf16>, vector<32x8xbf16>, vector<16x8xf32> -> vector<16x8xf32>
    %77 = vector.extract_strided_slice %33 {offsets = [1, 0, 0], sizes = [1, 32, 8], strides = [1, 1, 1]} : vector<4x32x8xbf16> to vector<1x32x8xbf16>
    %78 = vector.shape_cast %77 : vector<1x32x8xbf16> to vector<32x8xbf16>
    %cst_38 = arith.constant dense<0.000000e+00> : vector<16x8xf32>
    %79 = tpu.matmul %27, %78, %cst_38 {dimension_numbers = #tpu.dot_dimension_numbers<[1], [0], [0], [1], [0, 0, 1, 1], [], []>} : vector<16x32xbf16>, vector<32x8xbf16>, vector<16x8xf32> -> vector<16x8xf32>
    %80 = vector.shape_cast %73 : vector<16x8xf32> to vector<2x8x8xf32>
    %81 = arith.truncf %80 : vector<2x8x8xf32> to vector<2x8x8xbf16>
    %82 = vector.shape_cast %76 : vector<16x8xf32> to vector<2x8x8xf32>
    %83 = arith.truncf %82 : vector<2x8x8xf32> to vector<2x8x8xbf16>
    %84 = vector.shape_cast %79 : vector<16x8xf32> to vector<2x8x8xf32>
    %85 = arith.truncf %84 : vector<2x8x8xf32> to vector<2x8x8xbf16>
    "tpu.trace_start"() <{level = 10 : i32, message = "bnd,bmd->bnm"}> : () -> ()
    %cst_39 = arith.constant dense<0.000000e+00> : vector<2x8x8xf32>
    %86 = tpu.matmul %81, %83, %cst_39 {dimension_numbers = #tpu.dot_dimension_numbers<[2], [2], [1], [1], [0, 0, 0, 1, 1, 1], [0], [0]>} : vector<2x8x8xbf16>, vector<2x8x8xbf16>, vector<2x8x8xf32> -> vector<2x8x8xf32>
    "tpu.trace_stop"() : () -> ()
    %cst_40 = arith.constant dense<0xFF800000> : vector<2x8xf32>
    %87 = vector.multi_reduction <maximumf>, %86, %cst_40 [2] : vector<2x8x8xf32> to vector<2x8xf32>
    %88 = vector.shape_cast %87 : vector<2x8xf32> to vector<2x8x1xf32>
    %89 = vector.broadcast %88 : vector<2x8x1xf32> to vector<2x8x8xf32>
    %90 = arith.subf %86, %89 : vector<2x8x8xf32>
    %91 = math.exp %90 : vector<2x8x8xf32>
    %cst_41 = arith.constant dense<0.000000e+00> : vector<2x8xf32>
    %92 = vector.multi_reduction <add>, %91, %cst_41 [2] : vector<2x8x8xf32> to vector<2x8xf32>
    %93 = vector.shape_cast %92 : vector<2x8xf32> to vector<2x8x1xf32>
    %94 = tpu.reciprocal %93 {approx = true} : vector<2x8x1xf32> -> vector<2x8x1xf32>
    %95 = vector.broadcast %94 : vector<2x8x1xf32> to vector<2x8x8xf32>
    %96 = arith.mulf %91, %95 : vector<2x8x8xf32>
    %97 = arith.truncf %96 : vector<2x8x8xf32> to vector<2x8x8xbf16>
    "tpu.trace_start"() <{level = 10 : i32, message = "bnm,bmd->bnd"}> : () -> ()
    %cst_42 = arith.constant dense<0.000000e+00> : vector<2x8x8xf32>
    %98 = tpu.matmul %97, %85, %cst_42 {dimension_numbers = #tpu.dot_dimension_numbers<[2], [1], [1], [2], [0, 0, 0, 1, 1, 2], [0], [0]>} : vector<2x8x8xbf16>, vector<2x8x8xbf16>, vector<2x8x8xf32> -> vector<2x8x8xf32>
    "tpu.trace_stop"() : () -> ()
    %99 = vector.shape_cast %98 : vector<2x8x8xf32> to vector<16x8xf32>
    %100 = arith.truncf %99 : vector<16x8xf32> to vector<16x8xbf16>
    %101 = vector.extract_strided_slice %35 {offsets = [1, 0, 0], sizes = [1, 8, 32], strides = [1, 1, 1]} : vector<4x8x32xbf16> to vector<1x8x32xbf16>
    %102 = vector.shape_cast %101 : vector<1x8x32xbf16> to vector<8x32xbf16>
    %cst_43 = arith.constant dense<0.000000e+00> : vector<16x32xf32>
    %103 = tpu.matmul %100, %102, %cst_43 {dimension_numbers = #tpu.dot_dimension_numbers<[1], [0], [0], [1], [0, 0, 1, 1], [], []>} : vector<16x8xbf16>, vector<8x32xbf16>, vector<16x32xf32> -> vector<16x32xf32>
    %104 = arith.addf %70, %103 : vector<16x32xf32>
    %105 = vector.extract_strided_slice %29 {offsets = [2, 0, 0], sizes = [1, 32, 8], strides = [1, 1, 1]} : vector<4x32x8xbf16> to vector<1x32x8xbf16>
    %106 = vector.shape_cast %105 : vector<1x32x8xbf16> to vector<32x8xbf16>
    %cst_44 = arith.constant dense<0.000000e+00> : vector<16x8xf32>
    %107 = tpu.matmul %27, %106, %cst_44 {dimension_numbers = #tpu.dot_dimension_numbers<[1], [0], [0], [1], [0, 0, 1, 1], [], []>} : vector<16x32xbf16>, vector<32x8xbf16>, vector<16x8xf32> -> vector<16x8xf32>
    %108 = vector.extract_strided_slice %31 {offsets = [2, 0, 0], sizes = [1, 32, 8], strides = [1, 1, 1]} : vector<4x32x8xbf16> to vector<1x32x8xbf16>
    %109 = vector.shape_cast %108 : vector<1x32x8xbf16> to vector<32x8xbf16>
    %cst_45 = arith.constant dense<0.000000e+00> : vector<16x8xf32>
    %110 = tpu.matmul %27, %109, %cst_45 {dimension_numbers = #tpu.dot_dimension_numbers<[1], [0], [0], [1], [0, 0, 1, 1], [], []>} : vector<16x32xbf16>, vector<32x8xbf16>, vector<16x8xf32> -> vector<16x8xf32>
    %111 = vector.extract_strided_slice %33 {offsets = [2, 0, 0], sizes = [1, 32, 8], strides = [1, 1, 1]} : vector<4x32x8xbf16> to vector<1x32x8xbf16>
    %112 = vector.shape_cast %111 : vector<1x32x8xbf16> to vector<32x8xbf16>
    %cst_46 = arith.constant dense<0.000000e+00> : vector<16x8xf32>
    %113 = tpu.matmul %27, %112, %cst_46 {dimension_numbers = #tpu.dot_dimension_numbers<[1], [0], [0], [1], [0, 0, 1, 1], [], []>} : vector<16x32xbf16>, vector<32x8xbf16>, vector<16x8xf32> -> vector<16x8xf32>
    %114 = vector.shape_cast %107 : vector<16x8xf32> to vector<2x8x8xf32>
    %115 = arith.truncf %114 : vector<2x8x8xf32> to vector<2x8x8xbf16>
    %116 = vector.shape_cast %110 : vector<16x8xf32> to vector<2x8x8xf32>
    %117 = arith.truncf %116 : vector<2x8x8xf32> to vector<2x8x8xbf16>
    %118 = vector.shape_cast %113 : vector<16x8xf32> to vector<2x8x8xf32>
    %119 = arith.truncf %118 : vector<2x8x8xf32> to vector<2x8x8xbf16>
    "tpu.trace_start"() <{level = 10 : i32, message = "bnd,bmd->bnm"}> : () -> ()
    %cst_47 = arith.constant dense<0.000000e+00> : vector<2x8x8xf32>
    %120 = tpu.matmul %115, %117, %cst_47 {dimension_numbers = #tpu.dot_dimension_numbers<[2], [2], [1], [1], [0, 0, 0, 1, 1, 1], [0], [0]>} : vector<2x8x8xbf16>, vector<2x8x8xbf16>, vector<2x8x8xf32> -> vector<2x8x8xf32>
    "tpu.trace_stop"() : () -> ()
    %cst_48 = arith.constant dense<0xFF800000> : vector<2x8xf32>
    %121 = vector.multi_reduction <maximumf>, %120, %cst_48 [2] : vector<2x8x8xf32> to vector<2x8xf32>
    %122 = vector.shape_cast %121 : vector<2x8xf32> to vector<2x8x1xf32>
    %123 = vector.broadcast %122 : vector<2x8x1xf32> to vector<2x8x8xf32>
    %124 = arith.subf %120, %123 : vector<2x8x8xf32>
    %125 = math.exp %124 : vector<2x8x8xf32>
    %cst_49 = arith.constant dense<0.000000e+00> : vector<2x8xf32>
    %126 = vector.multi_reduction <add>, %125, %cst_49 [2] : vector<2x8x8xf32> to vector<2x8xf32>
    %127 = vector.shape_cast %126 : vector<2x8xf32> to vector<2x8x1xf32>
    %128 = tpu.reciprocal %127 {approx = true} : vector<2x8x1xf32> -> vector<2x8x1xf32>
    %129 = vector.broadcast %128 : vector<2x8x1xf32> to vector<2x8x8xf32>
    %130 = arith.mulf %125, %129 : vector<2x8x8xf32>
    %131 = arith.truncf %130 : vector<2x8x8xf32> to vector<2x8x8xbf16>
    "tpu.trace_start"() <{level = 10 : i32, message = "bnm,bmd->bnd"}> : () -> ()
    %cst_50 = arith.constant dense<0.000000e+00> : vector<2x8x8xf32>
    %132 = tpu.matmul %131, %119, %cst_50 {dimension_numbers = #tpu.dot_dimension_numbers<[2], [1], [1], [2], [0, 0, 0, 1, 1, 2], [0], [0]>} : vector<2x8x8xbf16>, vector<2x8x8xbf16>, vector<2x8x8xf32> -> vector<2x8x8xf32>
    "tpu.trace_stop"() : () -> ()
    %133 = vector.shape_cast %132 : vector<2x8x8xf32> to vector<16x8xf32>
    %134 = arith.truncf %133 : vector<16x8xf32> to vector<16x8xbf16>
    %135 = vector.extract_strided_slice %35 {offsets = [2, 0, 0], sizes = [1, 8, 32], strides = [1, 1, 1]} : vector<4x8x32xbf16> to vector<1x8x32xbf16>
    %136 = vector.shape_cast %135 : vector<1x8x32xbf16> to vector<8x32xbf16>
    %cst_51 = arith.constant dense<0.000000e+00> : vector<16x32xf32>
    %137 = tpu.matmul %134, %136, %cst_51 {dimension_numbers = #tpu.dot_dimension_numbers<[1], [0], [0], [1], [0, 0, 1, 1], [], []>} : vector<16x8xbf16>, vector<8x32xbf16>, vector<16x32xf32> -> vector<16x32xf32>
    %138 = arith.addf %104, %137 : vector<16x32xf32>
    %139 = vector.extract_strided_slice %29 {offsets = [3, 0, 0], sizes = [1, 32, 8], strides = [1, 1, 1]} : vector<4x32x8xbf16> to vector<1x32x8xbf16>
    %140 = vector.shape_cast %139 : vector<1x32x8xbf16> to vector<32x8xbf16>
    %cst_52 = arith.constant dense<0.000000e+00> : vector<16x8xf32>
    %141 = tpu.matmul %27, %140, %cst_52 {dimension_numbers = #tpu.dot_dimension_numbers<[1], [0], [0], [1], [0, 0, 1, 1], [], []>} : vector<16x32xbf16>, vector<32x8xbf16>, vector<16x8xf32> -> vector<16x8xf32>
    %142 = vector.extract_strided_slice %31 {offsets = [3, 0, 0], sizes = [1, 32, 8], strides = [1, 1, 1]} : vector<4x32x8xbf16> to vector<1x32x8xbf16>
    %143 = vector.shape_cast %142 : vector<1x32x8xbf16> to vector<32x8xbf16>
    %cst_53 = arith.constant dense<0.000000e+00> : vector<16x8xf32>
    %144 = tpu.matmul %27, %143, %cst_53 {dimension_numbers = #tpu.dot_dimension_numbers<[1], [0], [0], [1], [0, 0, 1, 1], [], []>} : vector<16x32xbf16>, vector<32x8xbf16>, vector<16x8xf32> -> vector<16x8xf32>
    %145 = vector.extract_strided_slice %33 {offsets = [3, 0, 0], sizes = [1, 32, 8], strides = [1, 1, 1]} : vector<4x32x8xbf16> to vector<1x32x8xbf16>
    %146 = vector.shape_cast %145 : vector<1x32x8xbf16> to vector<32x8xbf16>
    %cst_54 = arith.constant dense<0.000000e+00> : vector<16x8xf32>
    %147 = tpu.matmul %27, %146, %cst_54 {dimension_numbers = #tpu.dot_dimension_numbers<[1], [0], [0], [1], [0, 0, 1, 1], [], []>} : vector<16x32xbf16>, vector<32x8xbf16>, vector<16x8xf32> -> vector<16x8xf32>
    %148 = vector.shape_cast %141 : vector<16x8xf32> to vector<2x8x8xf32>
    %149 = arith.truncf %148 : vector<2x8x8xf32> to vector<2x8x8xbf16>
    %150 = vector.shape_cast %144 : vector<16x8xf32> to vector<2x8x8xf32>
    %151 = arith.truncf %150 : vector<2x8x8xf32> to vector<2x8x8xbf16>
    %152 = vector.shape_cast %147 : vector<16x8xf32> to vector<2x8x8xf32>
    %153 = arith.truncf %152 : vector<2x8x8xf32> to vector<2x8x8xbf16>
    "tpu.trace_start"() <{level = 10 : i32, message = "bnd,bmd->bnm"}> : () -> ()
    %cst_55 = arith.constant dense<0.000000e+00> : vector<2x8x8xf32>
    %154 = tpu.matmul %149, %151, %cst_55 {dimension_numbers = #tpu.dot_dimension_numbers<[2], [2], [1], [1], [0, 0, 0, 1, 1, 1], [0], [0]>} : vector<2x8x8xbf16>, vector<2x8x8xbf16>, vector<2x8x8xf32> -> vector<2x8x8xf32>
    "tpu.trace_stop"() : () -> ()
    %cst_56 = arith.constant dense<0xFF800000> : vector<2x8xf32>
    %155 = vector.multi_reduction <maximumf>, %154, %cst_56 [2] : vector<2x8x8xf32> to vector<2x8xf32>
    %156 = vector.shape_cast %155 : vector<2x8xf32> to vector<2x8x1xf32>
    %157 = vector.broadcast %156 : vector<2x8x1xf32> to vector<2x8x8xf32>
    %158 = arith.subf %154, %157 : vector<2x8x8xf32>
    %159 = math.exp %158 : vector<2x8x8xf32>
    %cst_57 = arith.constant dense<0.000000e+00> : vector<2x8xf32>
    %160 = vector.multi_reduction <add>, %159, %cst_57 [2] : vector<2x8x8xf32> to vector<2x8xf32>
    %161 = vector.shape_cast %160 : vector<2x8xf32> to vector<2x8x1xf32>
    %162 = tpu.reciprocal %161 {approx = true} : vector<2x8x1xf32> -> vector<2x8x1xf32>
    %163 = vector.broadcast %162 : vector<2x8x1xf32> to vector<2x8x8xf32>
    %164 = arith.mulf %159, %163 : vector<2x8x8xf32>
    %165 = arith.truncf %164 : vector<2x8x8xf32> to vector<2x8x8xbf16>
    "tpu.trace_start"() <{level = 10 : i32, message = "bnm,bmd->bnd"}> : () -> ()
    %cst_58 = arith.constant dense<0.000000e+00> : vector<2x8x8xf32>
    %166 = tpu.matmul %165, %153, %cst_58 {dimension_numbers = #tpu.dot_dimension_numbers<[2], [1], [1], [2], [0, 0, 0, 1, 1, 2], [0], [0]>} : vector<2x8x8xbf16>, vector<2x8x8xbf16>, vector<2x8x8xf32> -> vector<2x8x8xf32>
    "tpu.trace_stop"() : () -> ()
    %167 = vector.shape_cast %166 : vector<2x8x8xf32> to vector<16x8xf32>
    %168 = arith.truncf %167 : vector<16x8xf32> to vector<16x8xbf16>
    %169 = vector.extract_strided_slice %35 {offsets = [3, 0, 0], sizes = [1, 8, 32], strides = [1, 1, 1]} : vector<4x8x32xbf16> to vector<1x8x32xbf16>
    %170 = vector.shape_cast %169 : vector<1x8x32xbf16> to vector<8x32xbf16>
    %cst_59 = arith.constant dense<0.000000e+00> : vector<16x32xf32>
    %171 = tpu.matmul %168, %170, %cst_59 {dimension_numbers = #tpu.dot_dimension_numbers<[1], [0], [0], [1], [0, 0, 1, 1], [], []>} : vector<16x8xbf16>, vector<8x32xbf16>, vector<16x32xf32> -> vector<16x32xf32>
    %172 = arith.addf %138, %171 : vector<16x32xf32>
    %c0_60 = arith.constant 0 : index
    %c0_61 = arith.constant 0 : index
    %c0_62 = arith.constant 0 : index
    %173 = vector.load %arg8[%c0_60, %c0_61, %c0_62] : memref<2x1x32xf32, #tpu.memory_space<vmem>>, vector<1x1x32xf32>
    %174 = vector.shape_cast %173 : vector<1x1x32xf32> to vector<1x32xf32>
    %175 = vector.broadcast %174 : vector<1x32xf32> to vector<16x32xf32>
    %176 = arith.addf %172, %175 : vector<16x32xf32>
    %177 = arith.addf %176, %0 : vector<16x32xf32>
    %c0_63 = arith.constant 0 : index
    %c0_64 = arith.constant 0 : index
    %c0_65 = arith.constant 0 : index
    %178 = vector.load %arg9[%c0_63, %c0_64, %c0_65] : memref<2x1x32xf32, #tpu.memory_space<vmem>>, vector<1x1x32xf32>
    %179 = vector.shape_cast %178 : vector<1x1x32xf32> to vector<1x32xf32>
    %c0_66 = arith.constant 0 : index
    %c0_67 = arith.constant 0 : index
    %c0_68 = arith.constant 0 : index
    %180 = vector.load %arg10[%c0_66, %c0_67, %c0_68] : memref<2x1x32xf32, #tpu.memory_space<vmem>>, vector<1x1x32xf32>
    %181 = vector.shape_cast %180 : vector<1x1x32xf32> to vector<1x32xf32>
    %cst_69 = arith.constant dense<0.000000e+00> : vector<16xf32>
    %182 = vector.multi_reduction <add>, %177, %cst_69 [1] : vector<16x32xf32> to vector<16xf32>
    %183 = vector.shape_cast %182 : vector<16xf32> to vector<16x1xf32>
    %cst_70 = arith.constant 3.200000e+01 : f32
    %184 = vector.broadcast %cst_70 : f32 to vector<16x1xf32>
    %185 = arith.divf %183, %184 : vector<16x1xf32>
    %186 = vector.broadcast %185 : vector<16x1xf32> to vector<16x32xf32>
    %187 = arith.subf %177, %186 : vector<16x32xf32>
    %188 = arith.mulf %187, %187 : vector<16x32xf32>
    %cst_71 = arith.constant dense<0.000000e+00> : vector<16xf32>
    %189 = vector.multi_reduction <add>, %188, %cst_71 [1] : vector<16x32xf32> to vector<16xf32>
    %190 = vector.shape_cast %189 : vector<16xf32> to vector<16x1xf32>
    %cst_72 = arith.constant 3.200000e+01 : f32
    %191 = vector.broadcast %cst_72 : f32 to vector<16x1xf32>
    %192 = arith.divf %190, %191 : vector<16x1xf32>
    %193 = vector.broadcast %185 : vector<16x1xf32> to vector<16x32xf32>
    %194 = arith.subf %177, %193 : vector<16x32xf32>
    %cst_73 = arith.constant 9.99999974E-6 : f32
    %195 = vector.broadcast %cst_73 : f32 to vector<16x1xf32>
    %196 = arith.addf %192, %195 : vector<16x1xf32>
    %197 = math.rsqrt %196 : vector<16x1xf32>
    %198 = vector.broadcast %197 : vector<16x1xf32> to vector<16x32xf32>
    %199 = arith.mulf %194, %198 : vector<16x32xf32>
    %200 = vector.broadcast %179 : vector<1x32xf32> to vector<16x32xf32>
    %201 = arith.mulf %199, %200 : vector<16x32xf32>
    %202 = vector.broadcast %181 : vector<1x32xf32> to vector<16x32xf32>
    %203 = arith.addf %201, %202 : vector<16x32xf32>
    %204 = arith.truncf %203 : vector<16x32xf32> to vector<16x32xbf16>
    %c0_74 = arith.constant 0 : index
    %c0_75 = arith.constant 0 : index
    %c0_76 = arith.constant 0 : index
    %205 = vector.load %arg11[%c0_74, %c0_75, %c0_76] : memref<2x32x128xbf16, #tpu.memory_space<vmem>>, vector<1x32x128xbf16>
    %206 = vector.shape_cast %205 : vector<1x32x128xbf16> to vector<32x128xbf16>
    %cst_77 = arith.constant dense<0.000000e+00> : vector<16x128xf32>
    %207 = tpu.matmul %204, %206, %cst_77 {dimension_numbers = #tpu.dot_dimension_numbers<[1], [0], [0], [1], [0, 0, 1, 1], [], []>} : vector<16x32xbf16>, vector<32x128xbf16>, vector<16x128xf32> -> vector<16x128xf32>
    %c0_78 = arith.constant 0 : index
    %c0_79 = arith.constant 0 : index
    %c0_80 = arith.constant 0 : index
    %208 = vector.load %arg12[%c0_78, %c0_79, %c0_80] : memref<2x1x128xf32, #tpu.memory_space<vmem>>, vector<1x1x128xf32>
    %209 = vector.shape_cast %208 : vector<1x1x128xf32> to vector<1x128xf32>
    %210 = vector.broadcast %209 : vector<1x128xf32> to vector<16x128xf32>
    %211 = arith.addf %207, %210 : vector<16x128xf32>
    %cst_81 = arith.constant 5.000000e-01 : f32
    %212 = vector.broadcast %cst_81 : f32 to vector<16x128xf32>
    %213 = arith.mulf %212, %211 : vector<16x128xf32>
    %cst_82 = arith.constant 0.707106769 : f32
    %214 = vector.broadcast %cst_82 : f32 to vector<16x128xf32>
    %215 = arith.mulf %211, %214 : vector<16x128xf32>
    %216 = math.erf %215 : vector<16x128xf32>
    %cst_83 = arith.constant 1.000000e+00 : f32
    %217 = vector.broadcast %cst_83 : f32 to vector<16x128xf32>
    %218 = arith.addf %217, %216 : vector<16x128xf32>
    %219 = arith.mulf %213, %218 : vector<16x128xf32>
    %220 = arith.truncf %219 : vector<16x128xf32> to vector<16x128xbf16>
    %c0_84 = arith.constant 0 : index
    %c0_85 = arith.constant 0 : index
    %c0_86 = arith.constant 0 : index
    %221 = vector.load %arg13[%c0_84, %c0_85, %c0_86] : memref<2x128x32xbf16, #tpu.memory_space<vmem>>, vector<1x128x32xbf16>
    %222 = vector.shape_cast %221 : vector<1x128x32xbf16> to vector<128x32xbf16>
    %cst_87 = arith.constant dense<0.000000e+00> : vector<16x32xf32>
    %223 = tpu.matmul %220, %222, %cst_87 {dimension_numbers = #tpu.dot_dimension_numbers<[1], [0], [0], [1], [0, 0, 1, 1], [], []>} : vector<16x128xbf16>, vector<128x32xbf16>, vector<16x32xf32> -> vector<16x32xf32>
    %c0_88 = arith.constant 0 : index
    %c0_89 = arith.constant 0 : index
    %c0_90 = arith.constant 0 : index
    %224 = vector.load %arg14[%c0_88, %c0_89, %c0_90] : memref<2x1x32xf32, #tpu.memory_space<vmem>>, vector<1x1x32xf32>
    %225 = vector.shape_cast %224 : vector<1x1x32xf32> to vector<1x32xf32>
    %226 = vector.broadcast %225 : vector<1x32xf32> to vector<16x32xf32>
    %227 = arith.addf %223, %226 : vector<16x32xf32>
    %228 = arith.addf %227, %177 : vector<16x32xf32>
    %c1 = arith.constant 1 : index
    %c0_91 = arith.constant 0 : index
    %c0_92 = arith.constant 0 : index
    %229 = vector.load %arg2[%c1, %c0_91, %c0_92] : memref<2x1x32xf32, #tpu.memory_space<vmem>>, vector<1x1x32xf32>
    %230 = vector.shape_cast %229 : vector<1x1x32xf32> to vector<1x32xf32>
    %c1_93 = arith.constant 1 : index
    %c0_94 = arith.constant 0 : index
    %c0_95 = arith.constant 0 : index
    %231 = vector.load %arg3[%c1_93, %c0_94, %c0_95] : memref<2x1x32xf32, #tpu.memory_space<vmem>>, vector<1x1x32xf32>
    %232 = vector.shape_cast %231 : vector<1x1x32xf32> to vector<1x32xf32>
    %cst_96 = arith.constant dense<0.000000e+00> : vector<16xf32>
    %233 = vector.multi_reduction <add>, %228, %cst_96 [1] : vector<16x32xf32> to vector<16xf32>
    %234 = vector.shape_cast %233 : vector<16xf32> to vector<16x1xf32>
    %cst_97 = arith.constant 3.200000e+01 : f32
    %235 = vector.broadcast %cst_97 : f32 to vector<16x1xf32>
    %236 = arith.divf %234, %235 : vector<16x1xf32>
    %237 = vector.broadcast %236 : vector<16x1xf32> to vector<16x32xf32>
    %238 = arith.subf %228, %237 : vector<16x32xf32>
    %239 = arith.mulf %238, %238 : vector<16x32xf32>
    %cst_98 = arith.constant dense<0.000000e+00> : vector<16xf32>
    %240 = vector.multi_reduction <add>, %239, %cst_98 [1] : vector<16x32xf32> to vector<16xf32>
    %241 = vector.shape_cast %240 : vector<16xf32> to vector<16x1xf32>
    %cst_99 = arith.constant 3.200000e+01 : f32
    %242 = vector.broadcast %cst_99 : f32 to vector<16x1xf32>
    %243 = arith.divf %241, %242 : vector<16x1xf32>
    %244 = vector.broadcast %236 : vector<16x1xf32> to vector<16x32xf32>
    %245 = arith.subf %228, %244 : vector<16x32xf32>
    %cst_100 = arith.constant 9.99999974E-6 : f32
    %246 = vector.broadcast %cst_100 : f32 to vector<16x1xf32>
    %247 = arith.addf %243, %246 : vector<16x1xf32>
    %248 = math.rsqrt %247 : vector<16x1xf32>
    %249 = vector.broadcast %248 : vector<16x1xf32> to vector<16x32xf32>
    %250 = arith.mulf %245, %249 : vector<16x32xf32>
    %251 = vector.broadcast %230 : vector<1x32xf32> to vector<16x32xf32>
    %252 = arith.mulf %250, %251 : vector<16x32xf32>
    %253 = vector.broadcast %232 : vector<1x32xf32> to vector<16x32xf32>
    %254 = arith.addf %252, %253 : vector<16x32xf32>
    %255 = arith.truncf %254 : vector<16x32xf32> to vector<16x32xbf16>
    %c1_101 = arith.constant 1 : index
    %c0_102 = arith.constant 0 : index
    %c0_103 = arith.constant 0 : index
    %c0_104 = arith.constant 0 : index
    %256 = vector.load %arg4[%c1_101, %c0_102, %c0_103, %c0_104] : memref<2x4x32x8xbf16, #tpu.memory_space<vmem>>, vector<1x4x32x8xbf16>
    %257 = vector.shape_cast %256 : vector<1x4x32x8xbf16> to vector<4x32x8xbf16>
    %c1_105 = arith.constant 1 : index
    %c0_106 = arith.constant 0 : index
    %c0_107 = arith.constant 0 : index
    %c0_108 = arith.constant 0 : index
    %258 = vector.load %arg5[%c1_105, %c0_106, %c0_107, %c0_108] : memref<2x4x32x8xbf16, #tpu.memory_space<vmem>>, vector<1x4x32x8xbf16>
    %259 = vector.shape_cast %258 : vector<1x4x32x8xbf16> to vector<4x32x8xbf16>
    %c1_109 = arith.constant 1 : index
    %c0_110 = arith.constant 0 : index
    %c0_111 = arith.constant 0 : index
    %c0_112 = arith.constant 0 : index
    %260 = vector.load %arg6[%c1_109, %c0_110, %c0_111, %c0_112] : memref<2x4x32x8xbf16, #tpu.memory_space<vmem>>, vector<1x4x32x8xbf16>
    %261 = vector.shape_cast %260 : vector<1x4x32x8xbf16> to vector<4x32x8xbf16>
    %c1_113 = arith.constant 1 : index
    %c0_114 = arith.constant 0 : index
    %c0_115 = arith.constant 0 : index
    %c0_116 = arith.constant 0 : index
    %262 = vector.load %arg7[%c1_113, %c0_114, %c0_115, %c0_116] : memref<2x4x8x32xbf16, #tpu.memory_space<vmem>>, vector<1x4x8x32xbf16>
    %263 = vector.shape_cast %262 : vector<1x4x8x32xbf16> to vector<4x8x32xbf16>
    %cst_117 = arith.constant 0.000000e+00 : f32
    %264 = vector.broadcast %cst_117 : f32 to vector<16x32xf32>
    %265 = vector.extract_strided_slice %257 {offsets = [0, 0, 0], sizes = [1, 32, 8], strides = [1, 1, 1]} : vector<4x32x8xbf16> to vector<1x32x8xbf16>
    %266 = vector.shape_cast %265 : vector<1x32x8xbf16> to vector<32x8xbf16>
    %cst_118 = arith.constant dense<0.000000e+00> : vector<16x8xf32>
    %267 = tpu.matmul %255, %266, %cst_118 {dimension_numbers = #tpu.dot_dimension_numbers<[1], [0], [0], [1], [0, 0, 1, 1], [], []>} : vector<16x32xbf16>, vector<32x8xbf16>, vector<16x8xf32> -> vector<16x8xf32>
    %268 = vector.extract_strided_slice %259 {offsets = [0, 0, 0], sizes = [1, 32, 8], strides = [1, 1, 1]} : vector<4x32x8xbf16> to vector<1x32x8xbf16>
    %269 = vector.shape_cast %268 : vector<1x32x8xbf16> to vector<32x8xbf16>
    %cst_119 = arith.constant dense<0.000000e+00> : vector<16x8xf32>
    %270 = tpu.matmul %255, %269, %cst_119 {dimension_numbers = #tpu.dot_dimension_numbers<[1], [0], [0], [1], [0, 0, 1, 1], [], []>} : vector<16x32xbf16>, vector<32x8xbf16>, vector<16x8xf32> -> vector<16x8xf32>
    %271 = vector.extract_strided_slice %261 {offsets = [0, 0, 0], sizes = [1, 32, 8], strides = [1, 1, 1]} : vector<4x32x8xbf16> to vector<1x32x8xbf16>
    %272 = vector.shape_cast %271 : vector<1x32x8xbf16> to vector<32x8xbf16>
    %cst_120 = arith.constant dense<0.000000e+00> : vector<16x8xf32>
    %273 = tpu.matmul %255, %272, %cst_120 {dimension_numbers = #tpu.dot_dimension_numbers<[1], [0], [0], [1], [0, 0, 1, 1], [], []>} : vector<16x32xbf16>, vector<32x8xbf16>, vector<16x8xf32> -> vector<16x8xf32>
    %274 = vector.shape_cast %267 : vector<16x8xf32> to vector<2x8x8xf32>
    %275 = arith.truncf %274 : vector<2x8x8xf32> to vector<2x8x8xbf16>
    %276 = vector.shape_cast %270 : vector<16x8xf32> to vector<2x8x8xf32>
    %277 = arith.truncf %276 : vector<2x8x8xf32> to vector<2x8x8xbf16>
    %278 = vector.shape_cast %273 : vector<16x8xf32> to vector<2x8x8xf32>
    %279 = arith.truncf %278 : vector<2x8x8xf32> to vector<2x8x8xbf16>
    "tpu.trace_start"() <{level = 10 : i32, message = "bnd,bmd->bnm"}> : () -> ()
    %cst_121 = arith.constant dense<0.000000e+00> : vector<2x8x8xf32>
    %280 = tpu.matmul %275, %277, %cst_121 {dimension_numbers = #tpu.dot_dimension_numbers<[2], [2], [1], [1], [0, 0, 0, 1, 1, 1], [0], [0]>} : vector<2x8x8xbf16>, vector<2x8x8xbf16>, vector<2x8x8xf32> -> vector<2x8x8xf32>
    "tpu.trace_stop"() : () -> ()
    %cst_122 = arith.constant dense<0xFF800000> : vector<2x8xf32>
    %281 = vector.multi_reduction <maximumf>, %280, %cst_122 [2] : vector<2x8x8xf32> to vector<2x8xf32>
    %282 = vector.shape_cast %281 : vector<2x8xf32> to vector<2x8x1xf32>
    %283 = vector.broadcast %282 : vector<2x8x1xf32> to vector<2x8x8xf32>
    %284 = arith.subf %280, %283 : vector<2x8x8xf32>
    %285 = math.exp %284 : vector<2x8x8xf32>
    %cst_123 = arith.constant dense<0.000000e+00> : vector<2x8xf32>
    %286 = vector.multi_reduction <add>, %285, %cst_123 [2] : vector<2x8x8xf32> to vector<2x8xf32>
    %287 = vector.shape_cast %286 : vector<2x8xf32> to vector<2x8x1xf32>
    %288 = tpu.reciprocal %287 {approx = true} : vector<2x8x1xf32> -> vector<2x8x1xf32>
    %289 = vector.broadcast %288 : vector<2x8x1xf32> to vector<2x8x8xf32>
    %290 = arith.mulf %285, %289 : vector<2x8x8xf32>
    %291 = arith.truncf %290 : vector<2x8x8xf32> to vector<2x8x8xbf16>
    "tpu.trace_start"() <{level = 10 : i32, message = "bnm,bmd->bnd"}> : () -> ()
    %cst_124 = arith.constant dense<0.000000e+00> : vector<2x8x8xf32>
    %292 = tpu.matmul %291, %279, %cst_124 {dimension_numbers = #tpu.dot_dimension_numbers<[2], [1], [1], [2], [0, 0, 0, 1, 1, 2], [0], [0]>} : vector<2x8x8xbf16>, vector<2x8x8xbf16>, vector<2x8x8xf32> -> vector<2x8x8xf32>
    "tpu.trace_stop"() : () -> ()
    %293 = vector.shape_cast %292 : vector<2x8x8xf32> to vector<16x8xf32>
    %294 = arith.truncf %293 : vector<16x8xf32> to vector<16x8xbf16>
    %295 = vector.extract_strided_slice %263 {offsets = [0, 0, 0], sizes = [1, 8, 32], strides = [1, 1, 1]} : vector<4x8x32xbf16> to vector<1x8x32xbf16>
    %296 = vector.shape_cast %295 : vector<1x8x32xbf16> to vector<8x32xbf16>
    %cst_125 = arith.constant dense<0.000000e+00> : vector<16x32xf32>
    %297 = tpu.matmul %294, %296, %cst_125 {dimension_numbers = #tpu.dot_dimension_numbers<[1], [0], [0], [1], [0, 0, 1, 1], [], []>} : vector<16x8xbf16>, vector<8x32xbf16>, vector<16x32xf32> -> vector<16x32xf32>
    %298 = arith.addf %264, %297 : vector<16x32xf32>
    %299 = vector.extract_strided_slice %257 {offsets = [1, 0, 0], sizes = [1, 32, 8], strides = [1, 1, 1]} : vector<4x32x8xbf16> to vector<1x32x8xbf16>
    %300 = vector.shape_cast %299 : vector<1x32x8xbf16> to vector<32x8xbf16>
    %cst_126 = arith.constant dense<0.000000e+00> : vector<16x8xf32>
    %301 = tpu.matmul %255, %300, %cst_126 {dimension_numbers = #tpu.dot_dimension_numbers<[1], [0], [0], [1], [0, 0, 1, 1], [], []>} : vector<16x32xbf16>, vector<32x8xbf16>, vector<16x8xf32> -> vector<16x8xf32>
    %302 = vector.extract_strided_slice %259 {offsets = [1, 0, 0], sizes = [1, 32, 8], strides = [1, 1, 1]} : vector<4x32x8xbf16> to vector<1x32x8xbf16>
    %303 = vector.shape_cast %302 : vector<1x32x8xbf16> to vector<32x8xbf16>
    %cst_127 = arith.constant dense<0.000000e+00> : vector<16x8xf32>
    %304 = tpu.matmul %255, %303, %cst_127 {dimension_numbers = #tpu.dot_dimension_numbers<[1], [0], [0], [1], [0, 0, 1, 1], [], []>} : vector<16x32xbf16>, vector<32x8xbf16>, vector<16x8xf32> -> vector<16x8xf32>
    %305 = vector.extract_strided_slice %261 {offsets = [1, 0, 0], sizes = [1, 32, 8], strides = [1, 1, 1]} : vector<4x32x8xbf16> to vector<1x32x8xbf16>
    %306 = vector.shape_cast %305 : vector<1x32x8xbf16> to vector<32x8xbf16>
    %cst_128 = arith.constant dense<0.000000e+00> : vector<16x8xf32>
    %307 = tpu.matmul %255, %306, %cst_128 {dimension_numbers = #tpu.dot_dimension_numbers<[1], [0], [0], [1], [0, 0, 1, 1], [], []>} : vector<16x32xbf16>, vector<32x8xbf16>, vector<16x8xf32> -> vector<16x8xf32>
    %308 = vector.shape_cast %301 : vector<16x8xf32> to vector<2x8x8xf32>
    %309 = arith.truncf %308 : vector<2x8x8xf32> to vector<2x8x8xbf16>
    %310 = vector.shape_cast %304 : vector<16x8xf32> to vector<2x8x8xf32>
    %311 = arith.truncf %310 : vector<2x8x8xf32> to vector<2x8x8xbf16>
    %312 = vector.shape_cast %307 : vector<16x8xf32> to vector<2x8x8xf32>
    %313 = arith.truncf %312 : vector<2x8x8xf32> to vector<2x8x8xbf16>
    "tpu.trace_start"() <{level = 10 : i32, message = "bnd,bmd->bnm"}> : () -> ()
    %cst_129 = arith.constant dense<0.000000e+00> : vector<2x8x8xf32>
    %314 = tpu.matmul %309, %311, %cst_129 {dimension_numbers = #tpu.dot_dimension_numbers<[2], [2], [1], [1], [0, 0, 0, 1, 1, 1], [0], [0]>} : vector<2x8x8xbf16>, vector<2x8x8xbf16>, vector<2x8x8xf32> -> vector<2x8x8xf32>
    "tpu.trace_stop"() : () -> ()
    %cst_130 = arith.constant dense<0xFF800000> : vector<2x8xf32>
    %315 = vector.multi_reduction <maximumf>, %314, %cst_130 [2] : vector<2x8x8xf32> to vector<2x8xf32>
    %316 = vector.shape_cast %315 : vector<2x8xf32> to vector<2x8x1xf32>
    %317 = vector.broadcast %316 : vector<2x8x1xf32> to vector<2x8x8xf32>
    %318 = arith.subf %314, %317 : vector<2x8x8xf32>
    %319 = math.exp %318 : vector<2x8x8xf32>
    %cst_131 = arith.constant dense<0.000000e+00> : vector<2x8xf32>
    %320 = vector.multi_reduction <add>, %319, %cst_131 [2] : vector<2x8x8xf32> to vector<2x8xf32>
    %321 = vector.shape_cast %320 : vector<2x8xf32> to vector<2x8x1xf32>
    %322 = tpu.reciprocal %321 {approx = true} : vector<2x8x1xf32> -> vector<2x8x1xf32>
    %323 = vector.broadcast %322 : vector<2x8x1xf32> to vector<2x8x8xf32>
    %324 = arith.mulf %319, %323 : vector<2x8x8xf32>
    %325 = arith.truncf %324 : vector<2x8x8xf32> to vector<2x8x8xbf16>
    "tpu.trace_start"() <{level = 10 : i32, message = "bnm,bmd->bnd"}> : () -> ()
    %cst_132 = arith.constant dense<0.000000e+00> : vector<2x8x8xf32>
    %326 = tpu.matmul %325, %313, %cst_132 {dimension_numbers = #tpu.dot_dimension_numbers<[2], [1], [1], [2], [0, 0, 0, 1, 1, 2], [0], [0]>} : vector<2x8x8xbf16>, vector<2x8x8xbf16>, vector<2x8x8xf32> -> vector<2x8x8xf32>
    "tpu.trace_stop"() : () -> ()
    %327 = vector.shape_cast %326 : vector<2x8x8xf32> to vector<16x8xf32>
    %328 = arith.truncf %327 : vector<16x8xf32> to vector<16x8xbf16>
    %329 = vector.extract_strided_slice %263 {offsets = [1, 0, 0], sizes = [1, 8, 32], strides = [1, 1, 1]} : vector<4x8x32xbf16> to vector<1x8x32xbf16>
    %330 = vector.shape_cast %329 : vector<1x8x32xbf16> to vector<8x32xbf16>
    %cst_133 = arith.constant dense<0.000000e+00> : vector<16x32xf32>
    %331 = tpu.matmul %328, %330, %cst_133 {dimension_numbers = #tpu.dot_dimension_numbers<[1], [0], [0], [1], [0, 0, 1, 1], [], []>} : vector<16x8xbf16>, vector<8x32xbf16>, vector<16x32xf32> -> vector<16x32xf32>
    %332 = arith.addf %298, %331 : vector<16x32xf32>
    %333 = vector.extract_strided_slice %257 {offsets = [2, 0, 0], sizes = [1, 32, 8], strides = [1, 1, 1]} : vector<4x32x8xbf16> to vector<1x32x8xbf16>
    %334 = vector.shape_cast %333 : vector<1x32x8xbf16> to vector<32x8xbf16>
    %cst_134 = arith.constant dense<0.000000e+00> : vector<16x8xf32>
    %335 = tpu.matmul %255, %334, %cst_134 {dimension_numbers = #tpu.dot_dimension_numbers<[1], [0], [0], [1], [0, 0, 1, 1], [], []>} : vector<16x32xbf16>, vector<32x8xbf16>, vector<16x8xf32> -> vector<16x8xf32>
    %336 = vector.extract_strided_slice %259 {offsets = [2, 0, 0], sizes = [1, 32, 8], strides = [1, 1, 1]} : vector<4x32x8xbf16> to vector<1x32x8xbf16>
    %337 = vector.shape_cast %336 : vector<1x32x8xbf16> to vector<32x8xbf16>
    %cst_135 = arith.constant dense<0.000000e+00> : vector<16x8xf32>
    %338 = tpu.matmul %255, %337, %cst_135 {dimension_numbers = #tpu.dot_dimension_numbers<[1], [0], [0], [1], [0, 0, 1, 1], [], []>} : vector<16x32xbf16>, vector<32x8xbf16>, vector<16x8xf32> -> vector<16x8xf32>
    %339 = vector.extract_strided_slice %261 {offsets = [2, 0, 0], sizes = [1, 32, 8], strides = [1, 1, 1]} : vector<4x32x8xbf16> to vector<1x32x8xbf16>
    %340 = vector.shape_cast %339 : vector<1x32x8xbf16> to vector<32x8xbf16>
    %cst_136 = arith.constant dense<0.000000e+00> : vector<16x8xf32>
    %341 = tpu.matmul %255, %340, %cst_136 {dimension_numbers = #tpu.dot_dimension_numbers<[1], [0], [0], [1], [0, 0, 1, 1], [], []>} : vector<16x32xbf16>, vector<32x8xbf16>, vector<16x8xf32> -> vector<16x8xf32>
    %342 = vector.shape_cast %335 : vector<16x8xf32> to vector<2x8x8xf32>
    %343 = arith.truncf %342 : vector<2x8x8xf32> to vector<2x8x8xbf16>
    %344 = vector.shape_cast %338 : vector<16x8xf32> to vector<2x8x8xf32>
    %345 = arith.truncf %344 : vector<2x8x8xf32> to vector<2x8x8xbf16>
    %346 = vector.shape_cast %341 : vector<16x8xf32> to vector<2x8x8xf32>
    %347 = arith.truncf %346 : vector<2x8x8xf32> to vector<2x8x8xbf16>
    "tpu.trace_start"() <{level = 10 : i32, message = "bnd,bmd->bnm"}> : () -> ()
    %cst_137 = arith.constant dense<0.000000e+00> : vector<2x8x8xf32>
    %348 = tpu.matmul %343, %345, %cst_137 {dimension_numbers = #tpu.dot_dimension_numbers<[2], [2], [1], [1], [0, 0, 0, 1, 1, 1], [0], [0]>} : vector<2x8x8xbf16>, vector<2x8x8xbf16>, vector<2x8x8xf32> -> vector<2x8x8xf32>
    "tpu.trace_stop"() : () -> ()
    %cst_138 = arith.constant dense<0xFF800000> : vector<2x8xf32>
    %349 = vector.multi_reduction <maximumf>, %348, %cst_138 [2] : vector<2x8x8xf32> to vector<2x8xf32>
    %350 = vector.shape_cast %349 : vector<2x8xf32> to vector<2x8x1xf32>
    %351 = vector.broadcast %350 : vector<2x8x1xf32> to vector<2x8x8xf32>
    %352 = arith.subf %348, %351 : vector<2x8x8xf32>
    %353 = math.exp %352 : vector<2x8x8xf32>
    %cst_139 = arith.constant dense<0.000000e+00> : vector<2x8xf32>
    %354 = vector.multi_reduction <add>, %353, %cst_139 [2] : vector<2x8x8xf32> to vector<2x8xf32>
    %355 = vector.shape_cast %354 : vector<2x8xf32> to vector<2x8x1xf32>
    %356 = tpu.reciprocal %355 {approx = true} : vector<2x8x1xf32> -> vector<2x8x1xf32>
    %357 = vector.broadcast %356 : vector<2x8x1xf32> to vector<2x8x8xf32>
    %358 = arith.mulf %353, %357 : vector<2x8x8xf32>
    %359 = arith.truncf %358 : vector<2x8x8xf32> to vector<2x8x8xbf16>
    "tpu.trace_start"() <{level = 10 : i32, message = "bnm,bmd->bnd"}> : () -> ()
    %cst_140 = arith.constant dense<0.000000e+00> : vector<2x8x8xf32>
    %360 = tpu.matmul %359, %347, %cst_140 {dimension_numbers = #tpu.dot_dimension_numbers<[2], [1], [1], [2], [0, 0, 0, 1, 1, 2], [0], [0]>} : vector<2x8x8xbf16>, vector<2x8x8xbf16>, vector<2x8x8xf32> -> vector<2x8x8xf32>
    "tpu.trace_stop"() : () -> ()
    %361 = vector.shape_cast %360 : vector<2x8x8xf32> to vector<16x8xf32>
    %362 = arith.truncf %361 : vector<16x8xf32> to vector<16x8xbf16>
    %363 = vector.extract_strided_slice %263 {offsets = [2, 0, 0], sizes = [1, 8, 32], strides = [1, 1, 1]} : vector<4x8x32xbf16> to vector<1x8x32xbf16>
    %364 = vector.shape_cast %363 : vector<1x8x32xbf16> to vector<8x32xbf16>
    %cst_141 = arith.constant dense<0.000000e+00> : vector<16x32xf32>
    %365 = tpu.matmul %362, %364, %cst_141 {dimension_numbers = #tpu.dot_dimension_numbers<[1], [0], [0], [1], [0, 0, 1, 1], [], []>} : vector<16x8xbf16>, vector<8x32xbf16>, vector<16x32xf32> -> vector<16x32xf32>
    %366 = arith.addf %332, %365 : vector<16x32xf32>
    %367 = vector.extract_strided_slice %257 {offsets = [3, 0, 0], sizes = [1, 32, 8], strides = [1, 1, 1]} : vector<4x32x8xbf16> to vector<1x32x8xbf16>
    %368 = vector.shape_cast %367 : vector<1x32x8xbf16> to vector<32x8xbf16>
    %cst_142 = arith.constant dense<0.000000e+00> : vector<16x8xf32>
    %369 = tpu.matmul %255, %368, %cst_142 {dimension_numbers = #tpu.dot_dimension_numbers<[1], [0], [0], [1], [0, 0, 1, 1], [], []>} : vector<16x32xbf16>, vector<32x8xbf16>, vector<16x8xf32> -> vector<16x8xf32>
    %370 = vector.extract_strided_slice %259 {offsets = [3, 0, 0], sizes = [1, 32, 8], strides = [1, 1, 1]} : vector<4x32x8xbf16> to vector<1x32x8xbf16>
    %371 = vector.shape_cast %370 : vector<1x32x8xbf16> to vector<32x8xbf16>
    %cst_143 = arith.constant dense<0.000000e+00> : vector<16x8xf32>
    %372 = tpu.matmul %255, %371, %cst_143 {dimension_numbers = #tpu.dot_dimension_numbers<[1], [0], [0], [1], [0, 0, 1, 1], [], []>} : vector<16x32xbf16>, vector<32x8xbf16>, vector<16x8xf32> -> vector<16x8xf32>
    %373 = vector.extract_strided_slice %261 {offsets = [3, 0, 0], sizes = [1, 32, 8], strides = [1, 1, 1]} : vector<4x32x8xbf16> to vector<1x32x8xbf16>
    %374 = vector.shape_cast %373 : vector<1x32x8xbf16> to vector<32x8xbf16>
    %cst_144 = arith.constant dense<0.000000e+00> : vector<16x8xf32>
    %375 = tpu.matmul %255, %374, %cst_144 {dimension_numbers = #tpu.dot_dimension_numbers<[1], [0], [0], [1], [0, 0, 1, 1], [], []>} : vector<16x32xbf16>, vector<32x8xbf16>, vector<16x8xf32> -> vector<16x8xf32>
    %376 = vector.shape_cast %369 : vector<16x8xf32> to vector<2x8x8xf32>
    %377 = arith.truncf %376 : vector<2x8x8xf32> to vector<2x8x8xbf16>
    %378 = vector.shape_cast %372 : vector<16x8xf32> to vector<2x8x8xf32>
    %379 = arith.truncf %378 : vector<2x8x8xf32> to vector<2x8x8xbf16>
    %380 = vector.shape_cast %375 : vector<16x8xf32> to vector<2x8x8xf32>
    %381 = arith.truncf %380 : vector<2x8x8xf32> to vector<2x8x8xbf16>
    "tpu.trace_start"() <{level = 10 : i32, message = "bnd,bmd->bnm"}> : () -> ()
    %cst_145 = arith.constant dense<0.000000e+00> : vector<2x8x8xf32>
    %382 = tpu.matmul %377, %379, %cst_145 {dimension_numbers = #tpu.dot_dimension_numbers<[2], [2], [1], [1], [0, 0, 0, 1, 1, 1], [0], [0]>} : vector<2x8x8xbf16>, vector<2x8x8xbf16>, vector<2x8x8xf32> -> vector<2x8x8xf32>
    "tpu.trace_stop"() : () -> ()
    %cst_146 = arith.constant dense<0xFF800000> : vector<2x8xf32>
    %383 = vector.multi_reduction <maximumf>, %382, %cst_146 [2] : vector<2x8x8xf32> to vector<2x8xf32>
    %384 = vector.shape_cast %383 : vector<2x8xf32> to vector<2x8x1xf32>
    %385 = vector.broadcast %384 : vector<2x8x1xf32> to vector<2x8x8xf32>
    %386 = arith.subf %382, %385 : vector<2x8x8xf32>
    %387 = math.exp %386 : vector<2x8x8xf32>
    %cst_147 = arith.constant dense<0.000000e+00> : vector<2x8xf32>
    %388 = vector.multi_reduction <add>, %387, %cst_147 [2] : vector<2x8x8xf32> to vector<2x8xf32>
    %389 = vector.shape_cast %388 : vector<2x8xf32> to vector<2x8x1xf32>
    %390 = tpu.reciprocal %389 {approx = true} : vector<2x8x1xf32> -> vector<2x8x1xf32>
    %391 = vector.broadcast %390 : vector<2x8x1xf32> to vector<2x8x8xf32>
    %392 = arith.mulf %387, %391 : vector<2x8x8xf32>
    %393 = arith.truncf %392 : vector<2x8x8xf32> to vector<2x8x8xbf16>
    "tpu.trace_start"() <{level = 10 : i32, message = "bnm,bmd->bnd"}> : () -> ()
    %cst_148 = arith.constant dense<0.000000e+00> : vector<2x8x8xf32>
    %394 = tpu.matmul %393, %381, %cst_148 {dimension_numbers = #tpu.dot_dimension_numbers<[2], [1], [1], [2], [0, 0, 0, 1, 1, 2], [0], [0]>} : vector<2x8x8xbf16>, vector<2x8x8xbf16>, vector<2x8x8xf32> -> vector<2x8x8xf32>
    "tpu.trace_stop"() : () -> ()
    %395 = vector.shape_cast %394 : vector<2x8x8xf32> to vector<16x8xf32>
    %396 = arith.truncf %395 : vector<16x8xf32> to vector<16x8xbf16>
    %397 = vector.extract_strided_slice %263 {offsets = [3, 0, 0], sizes = [1, 8, 32], strides = [1, 1, 1]} : vector<4x8x32xbf16> to vector<1x8x32xbf16>
    %398 = vector.shape_cast %397 : vector<1x8x32xbf16> to vector<8x32xbf16>
    %cst_149 = arith.constant dense<0.000000e+00> : vector<16x32xf32>
    %399 = tpu.matmul %396, %398, %cst_149 {dimension_numbers = #tpu.dot_dimension_numbers<[1], [0], [0], [1], [0, 0, 1, 1], [], []>} : vector<16x8xbf16>, vector<8x32xbf16>, vector<16x32xf32> -> vector<16x32xf32>
    %400 = arith.addf %366, %399 : vector<16x32xf32>
    %c1_150 = arith.constant 1 : index
    %c0_151 = arith.constant 0 : index
    %c0_152 = arith.constant 0 : index
    %401 = vector.load %arg8[%c1_150, %c0_151, %c0_152] : memref<2x1x32xf32, #tpu.memory_space<vmem>>, vector<1x1x32xf32>
    %402 = vector.shape_cast %401 : vector<1x1x32xf32> to vector<1x32xf32>
    %403 = vector.broadcast %402 : vector<1x32xf32> to vector<16x32xf32>
    %404 = arith.addf %400, %403 : vector<16x32xf32>
    %405 = arith.addf %404, %228 : vector<16x32xf32>
    %c1_153 = arith.constant 1 : index
    %c0_154 = arith.constant 0 : index
    %c0_155 = arith.constant 0 : index
    %406 = vector.load %arg9[%c1_153, %c0_154, %c0_155] : memref<2x1x32xf32, #tpu.memory_space<vmem>>, vector<1x1x32xf32>
    %407 = vector.shape_cast %406 : vector<1x1x32xf32> to vector<1x32xf32>
    %c1_156 = arith.constant 1 : index
    %c0_157 = arith.constant 0 : index
    %c0_158 = arith.constant 0 : index
    %408 = vector.load %arg10[%c1_156, %c0_157, %c0_158] : memref<2x1x32xf32, #tpu.memory_space<vmem>>, vector<1x1x32xf32>
    %409 = vector.shape_cast %408 : vector<1x1x32xf32> to vector<1x32xf32>
    %cst_159 = arith.constant dense<0.000000e+00> : vector<16xf32>
    %410 = vector.multi_reduction <add>, %405, %cst_159 [1] : vector<16x32xf32> to vector<16xf32>
    %411 = vector.shape_cast %410 : vector<16xf32> to vector<16x1xf32>
    %cst_160 = arith.constant 3.200000e+01 : f32
    %412 = vector.broadcast %cst_160 : f32 to vector<16x1xf32>
    %413 = arith.divf %411, %412 : vector<16x1xf32>
    %414 = vector.broadcast %413 : vector<16x1xf32> to vector<16x32xf32>
    %415 = arith.subf %405, %414 : vector<16x32xf32>
    %416 = arith.mulf %415, %415 : vector<16x32xf32>
    %cst_161 = arith.constant dense<0.000000e+00> : vector<16xf32>
    %417 = vector.multi_reduction <add>, %416, %cst_161 [1] : vector<16x32xf32> to vector<16xf32>
    %418 = vector.shape_cast %417 : vector<16xf32> to vector<16x1xf32>
    %cst_162 = arith.constant 3.200000e+01 : f32
    %419 = vector.broadcast %cst_162 : f32 to vector<16x1xf32>
    %420 = arith.divf %418, %419 : vector<16x1xf32>
    %421 = vector.broadcast %413 : vector<16x1xf32> to vector<16x32xf32>
    %422 = arith.subf %405, %421 : vector<16x32xf32>
    %cst_163 = arith.constant 9.99999974E-6 : f32
    %423 = vector.broadcast %cst_163 : f32 to vector<16x1xf32>
    %424 = arith.addf %420, %423 : vector<16x1xf32>
    %425 = math.rsqrt %424 : vector<16x1xf32>
    %426 = vector.broadcast %425 : vector<16x1xf32> to vector<16x32xf32>
    %427 = arith.mulf %422, %426 : vector<16x32xf32>
    %428 = vector.broadcast %407 : vector<1x32xf32> to vector<16x32xf32>
    %429 = arith.mulf %427, %428 : vector<16x32xf32>
    %430 = vector.broadcast %409 : vector<1x32xf32> to vector<16x32xf32>
    %431 = arith.addf %429, %430 : vector<16x32xf32>
    %432 = arith.truncf %431 : vector<16x32xf32> to vector<16x32xbf16>
    %c1_164 = arith.constant 1 : index
    %c0_165 = arith.constant 0 : index
    %c0_166 = arith.constant 0 : index
    %433 = vector.load %arg11[%c1_164, %c0_165, %c0_166] : memref<2x32x128xbf16, #tpu.memory_space<vmem>>, vector<1x32x128xbf16>
    %434 = vector.shape_cast %433 : vector<1x32x128xbf16> to vector<32x128xbf16>
    %cst_167 = arith.constant dense<0.000000e+00> : vector<16x128xf32>
    %435 = tpu.matmul %432, %434, %cst_167 {dimension_numbers = #tpu.dot_dimension_numbers<[1], [0], [0], [1], [0, 0, 1, 1], [], []>} : vector<16x32xbf16>, vector<32x128xbf16>, vector<16x128xf32> -> vector<16x128xf32>
    %c1_168 = arith.constant 1 : index
    %c0_169 = arith.constant 0 : index
    %c0_170 = arith.constant 0 : index
    %436 = vector.load %arg12[%c1_168, %c0_169, %c0_170] : memref<2x1x128xf32, #tpu.memory_space<vmem>>, vector<1x1x128xf32>
    %437 = vector.shape_cast %436 : vector<1x1x128xf32> to vector<1x128xf32>
    %438 = vector.broadcast %437 : vector<1x128xf32> to vector<16x128xf32>
    %439 = arith.addf %435, %438 : vector<16x128xf32>
    %cst_171 = arith.constant 5.000000e-01 : f32
    %440 = vector.broadcast %cst_171 : f32 to vector<16x128xf32>
    %441 = arith.mulf %440, %439 : vector<16x128xf32>
    %cst_172 = arith.constant 0.707106769 : f32
    %442 = vector.broadcast %cst_172 : f32 to vector<16x128xf32>
    %443 = arith.mulf %439, %442 : vector<16x128xf32>
    %444 = math.erf %443 : vector<16x128xf32>
    %cst_173 = arith.constant 1.000000e+00 : f32
    %445 = vector.broadcast %cst_173 : f32 to vector<16x128xf32>
    %446 = arith.addf %445, %444 : vector<16x128xf32>
    %447 = arith.mulf %441, %446 : vector<16x128xf32>
    %448 = arith.truncf %447 : vector<16x128xf32> to vector<16x128xbf16>
    %c1_174 = arith.constant 1 : index
    %c0_175 = arith.constant 0 : index
    %c0_176 = arith.constant 0 : index
    %449 = vector.load %arg13[%c1_174, %c0_175, %c0_176] : memref<2x128x32xbf16, #tpu.memory_space<vmem>>, vector<1x128x32xbf16>
    %450 = vector.shape_cast %449 : vector<1x128x32xbf16> to vector<128x32xbf16>
    %cst_177 = arith.constant dense<0.000000e+00> : vector<16x32xf32>
    %451 = tpu.matmul %448, %450, %cst_177 {dimension_numbers = #tpu.dot_dimension_numbers<[1], [0], [0], [1], [0, 0, 1, 1], [], []>} : vector<16x128xbf16>, vector<128x32xbf16>, vector<16x32xf32> -> vector<16x32xf32>
    %c1_178 = arith.constant 1 : index
    %c0_179 = arith.constant 0 : index
    %c0_180 = arith.constant 0 : index
    %452 = vector.load %arg14[%c1_178, %c0_179, %c0_180] : memref<2x1x32xf32, #tpu.memory_space<vmem>>, vector<1x1x32xf32>
    %453 = vector.shape_cast %452 : vector<1x1x32xf32> to vector<1x32xf32>
    %454 = vector.broadcast %453 : vector<1x32xf32> to vector<16x32xf32>
    %455 = arith.addf %451, %454 : vector<16x32xf32>
    %456 = arith.addf %455, %405 : vector<16x32xf32>
    %c0_181 = arith.constant 0 : index
    %c0_182 = arith.constant 0 : index
    %457 = vector.load %arg15[%c0_181, %c0_182] : memref<16x32xf32, #tpu.memory_space<vmem>>, vector<16x32xf32>
    tpu.vector_store %arg15[%c0_181, %c0_182], %456 {strides = array<i32>} : memref<16x32xf32, #tpu.memory_space<vmem>>, vector<16x32xf32>,
    return
  }
  func.func @transform_0(%arg0: i32) -> (i32, i32) {
    %c0_i32 = arith.constant 0 : i32
    %c0_i32_0 = arith.constant 0 : i32
    return %arg0, %c0_i32 : i32, i32
  }
  func.func @transform_1(%arg0: i32) -> (i32, i32, i32) {
    %c0_i32 = arith.constant 0 : i32
    %c0_i32_0 = arith.constant 0 : i32
    %c0_i32_1 = arith.constant 0 : i32
    %c0_i32_2 = arith.constant 0 : i32
    return %c0_i32, %c0_i32_0, %c0_i32_1 : i32, i32, i32
  }
  func.func @transform_2(%arg0: i32) -> (i32, i32, i32) {
    %c0_i32 = arith.constant 0 : i32
    %c0_i32_0 = arith.constant 0 : i32
    %c0_i32_1 = arith.constant 0 : i32
    %c0_i32_2 = arith.constant 0 : i32
    return %c0_i32, %c0_i32_0, %c0_i32_1 : i32, i32, i32
  }
  func.func @transform_3(%arg0: i32) -> (i32, i32, i32, i32) {
    %c0_i32 = arith.constant 0 : i32
    %c0_i32_0 = arith.constant 0 : i32
    %c0_i32_1 = arith.constant 0 : i32
    %c0_i32_2 = arith.constant 0 : i32
    %c0_i32_3 = arith.constant 0 : i32
    return %c0_i32, %c0_i32_0, %c0_i32_1, %c0_i32_2 : i32, i32, i32, i32
  }
  func.func @transform_4(%arg0: i32) -> (i32, i32, i32, i32) {
    %c0_i32 = arith.constant 0 : i32
    %c0_i32_0 = arith.constant 0 : i32
    %c0_i32_1 = arith.constant 0 : i32
    %c0_i32_2 = arith.constant 0 : i32
    %c0_i32_3 = arith.constant 0 : i32
    return %c0_i32, %c0_i32_0, %c0_i32_1, %c0_i32_2 : i32, i32, i32, i32
  }
  func.func @transform_5(%arg0: i32) -> (i32, i32, i32, i32) {
    %c0_i32 = arith.constant 0 : i32
    %c0_i32_0 = arith.constant 0 : i32
    %c0_i32_1 = arith.constant 0 : i32
    %c0_i32_2 = arith.constant 0 : i32
    %c0_i32_3 = arith.constant 0 : i32
    return %c0_i32, %c0_i32_0, %c0_i32_1, %c0_i32_2 : i32, i32, i32, i32
  }
  func.func @transform_6(%arg0: i32) -> (i32, i32, i32, i32) {
    %c0_i32 = arith.constant 0 : i32
    %c0_i32_0 = arith.constant 0 : i32
    %c0_i32_1 = arith.constant 0 : i32
    %c0_i32_2 = arith.constant 0 : i32
    %c0_i32_3 = arith.constant 0 : i32
    return %c0_i32, %c0_i32_0, %c0_i32_1, %c0_i32_2 : i32, i32, i32, i32
  }
  func.func @transform_7(%arg0: i32) -> (i32, i32, i32) {
    %c0_i32 = arith.constant 0 : i32
    %c0_i32_0 = arith.constant 0 : i32
    %c0_i32_1 = arith.constant 0 : i32
    %c0_i32_2 = arith.constant 0 : i32
    return %c0_i32, %c0_i32_0, %c0_i32_1 : i32, i32, i32
  }
  func.func @transform_8(%arg0: i32) -> (i32, i32, i32) {
    %c0_i32 = arith.constant 0 : i32
    %c0_i32_0 = arith.constant 0 : i32
    %c0_i32_1 = arith.constant 0 : i32
    %c0_i32_2 = arith.constant 0 : i32
    return %c0_i32, %c0_i32_0, %c0_i32_1 : i32, i32, i32
  }
  func.func @transform_9(%arg0: i32) -> (i32, i32, i32) {
    %c0_i32 = arith.constant 0 : i32
    %c0_i32_0 = arith.constant 0 : i32
    %c0_i32_1 = arith.constant 0 : i32
    %c0_i32_2 = arith.constant 0 : i32
    return %c0_i32, %c0_i32_0, %c0_i32_1 : i32, i32, i32
  }
  func.func @transform_10(%arg0: i32) -> (i32, i32, i32) {
    %c0_i32 = arith.constant 0 : i32
    %c0_i32_0 = arith.constant 0 : i32
    %c0_i32_1 = arith.constant 0 : i32
    %c0_i32_2 = arith.constant 0 : i32
    return %c0_i32, %c0_i32_0, %c0_i32_1 : i32, i32, i32
  }
  func.func @transform_11(%arg0: i32) -> (i32, i32, i32) {
    %c0_i32 = arith.constant 0 : i32
    %c0_i32_0 = arith.constant 0 : i32
    %c0_i32_1 = arith.constant 0 : i32
    %c0_i32_2 = arith.constant 0 : i32
    return %c0_i32, %c0_i32_0, %c0_i32_1 : i32, i32, i32
  }
  func.func @transform_12(%arg0: i32) -> (i32, i32, i32) {
    %c0_i32 = arith.constant 0 : i32
    %c0_i32_0 = arith.constant 0 : i32
    %c0_i32_1 = arith.constant 0 : i32
    %c0_i32_2 = arith.constant 0 : i32
    return %c0_i32, %c0_i32_0, %c0_i32_1 : i32, i32, i32
  }
  func.func @transform_13(%arg0: i32) -> (i32, i32, i32) {
    %c0_i32 = arith.constant 0 : i32
    %c0_i32_0 = arith.constant 0 : i32
    %c0_i32_1 = arith.constant 0 : i32
    %c0_i32_2 = arith.constant 0 : i32
    return %c0_i32, %c0_i32_0, %c0_i32_1 : i32, i32, i32
  }
  func.func @transform_14(%arg0: i32) -> (i32, i32) {
    %c0_i32 = arith.constant 0 : i32
    %c0_i32_0 = arith.constant 0 : i32
    return %arg0, %c0_i32 : i32, i32
  }
}

</mosaic_0001>

<llo_original>
// kernel: tpu_custom_call.1
$region0: #{tpu_custom_call.1}
  #allocation0 [shape = 'u32[]', space=smem, size = 0x4, offset = 0x4, fixed_abs, tag = 'smem constant byte address 0x4 - core index']
  #allocation1 [shape = 'u32[144,128]{1,0:T(1,128)}', space=vmem, size = 0x12000, scoped, tag = 'internal scratch']
  %s0 = inlined_call_operand.vmem [shape: f32[16,32], index: 0, kind: input, shape index: {}]
  %s1 = inlined_call_operand.vmem [shape: f32[2,1,32], index: 1, kind: input, shape index: {}]
  %s2 = inlined_call_operand.vmem [shape: f32[2,1,32], index: 2, kind: input, shape index: {}]
  %s3 = inlined_call_operand.vmem [shape: bf16[2,4,32,8], index: 3, kind: input, shape index: {}]
  %s4 = inlined_call_operand.vmem [shape: bf16[2,4,32,8], index: 4, kind: input, shape index: {}]
  %s5 = inlined_call_operand.vmem [shape: bf16[2,4,32,8], index: 5, kind: input, shape index: {}]
  %s6 = inlined_call_operand.vmem [shape: bf16[2,4,8,32], index: 6, kind: input, shape index: {}]
  %s7 = inlined_call_operand.vmem [shape: f32[2,1,32], index: 7, kind: input, shape index: {}]
  %s8 = inlined_call_operand.vmem [shape: f32[2,1,32], index: 8, kind: input, shape index: {}]
  %s9 = inlined_call_operand.vmem [shape: f32[2,1,32], index: 9, kind: input, shape index: {}]
  %s10 = inlined_call_operand.vmem [shape: bf16[2,32,128], index: 10, kind: input, shape index: {}]
  %s11 = inlined_call_operand.vmem [shape: f32[2,1,128], index: 11, kind: input, shape index: {}]
  %s12 = inlined_call_operand.vmem [shape: bf16[2,128,32], index: 12, kind: input, shape index: {}]
  %s13 = inlined_call_operand.vmem [shape: f32[2,1,32], index: 13, kind: input, shape index: {}]
  %s14 = inlined_call_operand.hbm [shape: f32[16,32], index: 14, kind: output, shape index: {}]
  %s15 = sld [smem:[#allocation0]]
  $region66: #{tpu_custom_call.1} parent=0
    _
  %s17 = ssub.s32 1, %s15
  %s18 = scalar_select 0, %s17, %s15
  $region1: #{tpu_custom_call.1} parent=0
    #allocation2 [shape = 'u8[8192]{0}', space=vmem, size = 0x2000, scoped, tag = 'output window, operand 0, single buffered']
    #allocation3 [shape = 's32[1]{0}', space=sflag, size = 0x4, scoped, tag = 'scoped memory for tpu_custom_call.1']
    %19 = vsyncpa [#allocation3], 0
    // Predicated region
    $region2: #{tpu_custom_call.1} parent=1 // pred_check
      _
    $region3: #{tpu_custom_call.1} parent=1 // pred_check_branch
      %21 = sbr.rel (0) target = $region5
    $region4: #{tpu_custom_call.1} parent=1 // pred_region
      _
    $region5: #{tpu_custom_call.1} parent=1 // pred_fallthru
      _
    // Predicated region
    $region6: #{tpu_custom_call.1} parent=1 // pred_check
      _
    $region7: #{tpu_custom_call.1} parent=1 // pred_check_branch
      %23 = sbr.rel (0) target = $region9
    $region8: #{tpu_custom_call.1} parent=1 // pred_region
      _
    $region9: #{tpu_custom_call.1} parent=1 // pred_fallthru
      _
    // Predicated region
    $region10: #{tpu_custom_call.1} parent=1 // pred_check
      _
    $region11: #{tpu_custom_call.1} parent=1 // pred_check_branch
      %25 = sbr.rel (0) target = $region13
    $region12: #{tpu_custom_call.1} parent=1 // pred_region
      _
    $region13: #{tpu_custom_call.1} parent=1 // pred_fallthru
      _
    // Predicated region
    $region14: #{tpu_custom_call.1} parent=1 // pred_check
      _
    $region15: #{tpu_custom_call.1} parent=1 // pred_check_branch
      %27 = sbr.rel (0) target = $region17
    $region16: #{tpu_custom_call.1} parent=1 // pred_region
      _
    $region17: #{tpu_custom_call.1} parent=1 // pred_fallthru
      _
    // Predicated region
    $region18: #{tpu_custom_call.1} parent=1 // pred_check
      _
    $region19: #{tpu_custom_call.1} parent=1 // pred_check_branch
      %29 = sbr.rel (0) target = $region21
    $region20: #{tpu_custom_call.1} parent=1 // pred_region
      _
    $region21: #{tpu_custom_call.1} parent=1 // pred_fallthru
      _
    // Predicated region
    $region22: #{tpu_custom_call.1} parent=1 // pred_check
      _
    $region23: #{tpu_custom_call.1} parent=1 // pred_check_branch
      %31 = sbr.rel (0) target = $region25
    $region24: #{tpu_custom_call.1} parent=1 // pred_region
      _
    $region25: #{tpu_custom_call.1} parent=1 // pred_fallthru
      _
    // Predicated region
    $region26: #{tpu_custom_call.1} parent=1 // pred_check
      _
    $region27: #{tpu_custom_call.1} parent=1 // pred_check_branch
      %33 = sbr.rel (0) target = $region29
    $region28: #{tpu_custom_call.1} parent=1 // pred_region
      _
    $region29: #{tpu_custom_call.1} parent=1 // pred_fallthru
      _
    // Predicated region
    $region30: #{tpu_custom_call.1} parent=1 // pred_check
      _
    $region31: #{tpu_custom_call.1} parent=1 // pred_check_branch
      %35 = sbr.rel (0) target = $region33
    $region32: #{tpu_custom_call.1} parent=1 // pred_region
      _
    $region33: #{tpu_custom_call.1} parent=1 // pred_fallthru
      _
    // Predicated region
    $region34: #{tpu_custom_call.1} parent=1 // pred_check
      _
    $region35: #{tpu_custom_call.1} parent=1 // pred_check_branch
      %37 = sbr.rel (0) target = $region37
    $region36: #{tpu_custom_call.1} parent=1 // pred_region
      _
    $region37: #{tpu_custom_call.1} parent=1 // pred_fallthru
      _
    // Predicated region
    $region38: #{tpu_custom_call.1} parent=1 // pred_check
      _
    $region39: #{tpu_custom_call.1} parent=1 // pred_check_branch
      %39 = sbr.rel (0) target = $region41
    $region40: #{tpu_custom_call.1} parent=1 // pred_region
      _
    $region41: #{tpu_custom_call.1} parent=1 // pred_fallthru
      _
    // Predicated region
    $region42: #{tpu_custom_call.1} parent=1 // pred_check
      _
    $region43: #{tpu_custom_call.1} parent=1 // pred_check_branch
      %41 = sbr.rel (0) target = $region45
    $region44: #{tpu_custom_call.1} parent=1 // pred_region
      _
    $region45: #{tpu_custom_call.1} parent=1 // pred_fallthru
      _
    // Predicated region
    $region46: #{tpu_custom_call.1} parent=1 // pred_check
      _
    $region47: #{tpu_custom_call.1} parent=1 // pred_check_branch
      %43 = sbr.rel (0) target = $region49
    $region48: #{tpu_custom_call.1} parent=1 // pred_region
      _
    $region49: #{tpu_custom_call.1} parent=1 // pred_fallthru
      _
    // Predicated region
    $region50: #{tpu_custom_call.1} parent=1 // pred_check
      _
    $region51: #{tpu_custom_call.1} parent=1 // pred_check_branch
      %45 = sbr.rel (0) target = $region53
    $region52: #{tpu_custom_call.1} parent=1 // pred_region
      _
    $region53: #{tpu_custom_call.1} parent=1 // pred_fallthru
      _
    // Predicated region
    $region54: #{tpu_custom_call.1} parent=1 // pred_check
      _
    $region55: #{tpu_custom_call.1} parent=1 // pred_check_branch
      %47 = sbr.rel (0) target = $region57
    $region56: #{tpu_custom_call.1} parent=1 // pred_region
      _
    $region57: #{tpu_custom_call.1} parent=1 // pred_fallthru
      _
    %v49 = vld [vmem:[%s0] sm:$0xff]
    %v50 = vld [vmem:[%s0 + $0x8] sm:$0xff]
    %v51 = vld [vmem:[%s1] sm:$0x1]
    %v52 = vld [vmem:[%s2] sm:$0x1]
    %vm53 = vcmask 261120
    %v54 = vsel %vm53, %v49, 0.0
    %55 = vadd.xlane.f32.xlu0 %v54
    %v56 = vpop.xlane.xlu0 %55
    %v57 = vsel %vm53, %v50, 0.0
    %58 = vadd.xlane.f32.xlu0 %v57
    %v59 = vpop.xlane.xlu0 %58
    %v60 = vrcp.pop 32.0
    %v61 = vmul.f32 %v56, %v60
    %v62 = vmul.f32 %v59, %v60
    %v63 = vsub.f32 %v49, %v61
    %v64 = vsub.f32 %v50, %v62
    %v65 = vmul.f32 %v63, %v63
    %v66 = vmul.f32 %v64, %v64
    %v67 = vsel %vm53, %v65, 0.0
    %68 = vadd.xlane.f32.xlu0 %v67
    %v69 = vpop.xlane.xlu0 %68
    %v70 = vsel %vm53, %v66, 0.0
    %71 = vadd.xlane.f32.xlu0 %v70
    %v72 = vpop.xlane.xlu0 %71
    %v73 = vmul.f32 %v69, %v60
    %v74 = vmul.f32 %v72, %v60
    %v75 = vadd.f32 %v73, 1e-05
    %v76 = vadd.f32 %v74, 1e-05
    %v77 = vrsqrt.pop %v75
    %v78 = vrsqrt.pop %v76
    %v79 = vmul.f32 %v63, %v77
    %v80 = vmul.f32 %v64, %v78
    %v82 = vlaneseq
    %v83 = vshrl.u32 %v82, 7
    %v84 = vsub.s32 0, %v83
    %v85 = vrot.slane %v51, %v84
    %v87 = vmul.f32 %v79, %v85
    %v88 = vmul.f32 %v80, %v85
    %v90 = vlaneseq
    %v91 = vshrl.u32 %v90, 7
    %v92 = vsub.s32 0, %v91
    %v93 = vrot.slane %v52, %v92
    %v95 = vadd.f32 %v87, %v93
    %v96 = vadd.f32 %v88, %v93
    %v97 = vpack.c.bf16 %v96, %v95
    %v98 = vld [vmem:[%s3] sm:$0xf]
    %v99 = vld [vmem:[%s3 + $0x4] sm:$0xf]
    %v100 = vld [vmem:[%s3 + $0x8] sm:$0xf]
    %v101 = vld [vmem:[%s3 + $0xc] sm:$0xf]
    %v102 = vld [vmem:[%s3 + $0x10] sm:$0xf]
    %v103 = vld [vmem:[%s3 + $0x14] sm:$0xf]
    %v104 = vld [vmem:[%s3 + $0x18] sm:$0xf]
    %v105 = vld [vmem:[%s3 + $0x1c] sm:$0xf]
    %v106 = vld [vmem:[%s3 + $0x20] sm:$0xf]
    %v107 = vld [vmem:[%s3 + $0x24] sm:$0xf]
    %v108 = vld [vmem:[%s3 + $0x28] sm:$0xf]
    %v109 = vld [vmem:[%s3 + $0x2c] sm:$0xf]
    %v110 = vld [vmem:[%s3 + $0x30] sm:$0xf]
    %v111 = vld [vmem:[%s3 + $0x34] sm:$0xf]
    %v112 = vld [vmem:[%s3 + $0x38] sm:$0xf]
    %v113 = vld [vmem:[%s3 + $0x3c] sm:$0xf]
    %v114 = vld [vmem:[%s4] sm:$0xf]
    %v115 = vld [vmem:[%s4 + $0x4] sm:$0xf]
    %v116 = vld [vmem:[%s4 + $0x8] sm:$0xf]
    %v117 = vld [vmem:[%s4 + $0xc] sm:$0xf]
    %v118 = vld [vmem:[%s4 + $0x10] sm:$0xf]
    %v119 = vld [vmem:[%s4 + $0x14] sm:$0xf]
    %v120 = vld [vmem:[%s4 + $0x18] sm:$0xf]
    %v121 = vld [vmem:[%s4 + $0x1c] sm:$0xf]
    %v122 = vld [vmem:[%s4 + $0x20] sm:$0xf]
    %v123 = vld [vmem:[%s4 + $0x24] sm:$0xf]
    %v124 = vld [vmem:[%s4 + $0x28] sm:$0xf]
    %v125 = vld [vmem:[%s4 + $0x2c] sm:$0xf]
    %v126 = vld [vmem:[%s4 + $0x30] sm:$0xf]
    %v127 = vld [vmem:[%s4 + $0x34] sm:$0xf]
    %v128 = vld [vmem:[%s4 + $0x38] sm:$0xf]
    %v129 = vld [vmem:[%s4 + $0x3c] sm:$0xf]
    %v130 = vld [vmem:[%s5] sm:$0xf]
    %v131 = vld [vmem:[%s5 + $0x4] sm:$0xf]
    %v132 = vld [vmem:[%s5 + $0x8] sm:$0xf]
    %v133 = vld [vmem:[%s5 + $0xc] sm:$0xf]
    %v134 = vld [vmem:[%s5 + $0x10] sm:$0xf]
    %v135 = vld [vmem:[%s5 + $0x14] sm:$0xf]
    %v136 = vld [vmem:[%s5 + $0x18] sm:$0xf]
    %v137 = vld [vmem:[%s5 + $0x1c] sm:$0xf]
    %v138 = vld [vmem:[%s5 + $0x20] sm:$0xf]
    %v139 = vld [vmem:[%s5 + $0x24] sm:$0xf]
    %v140 = vld [vmem:[%s5 + $0x28] sm:$0xf]
    %v141 = vld [vmem:[%s5 + $0x2c] sm:$0xf]
    %v142 = vld [vmem:[%s5 + $0x30] sm:$0xf]
    %v143 = vld [vmem:[%s5 + $0x34] sm:$0xf]
    %v144 = vld [vmem:[%s5 + $0x38] sm:$0xf]
    %v145 = vld [vmem:[%s5 + $0x3c] sm:$0xf]
    %v146 = vld [vmem:[%s6] sm:$0xf]
    %v147 = vld [vmem:[%s6 + $0x4] sm:$0xf]
    %v148 = vld [vmem:[%s6 + $0x8] sm:$0xf]
    %v149 = vld [vmem:[%s6 + $0xc] sm:$0xf]
    %v154 = vunpack.c.l.b16 %v98
    %v155 = vunpack.c.l.b16 %v99
    %v156 = vunpack.c.l.b16 %v100
    %v157 = vunpack.c.l.b16 %v101
    %v158 = vpack.c.b16 %v155, %v154
    %v159 = vpack.c.b16 %v157, %v156
    %v163 = vsel %vm53, %v97, 0
    %165 = vmatprep.subr.bf16.mxu0 0
    %166 = vmatpush1.bf16.msra.mxu0 %v158
    %167 = vmatprep.subr.bf16.mxu0 0
    %168 = vmatpush1.bf16.msra.mxu0 %v159
    %169 = vmatprep.subr.bf16.mxu0 0
    %170 = vmatpush1.bf16.msra.mxu0 0
    %171 = vmatprep.subr.bf16.mxu0 0
    %172 = vmatpush1.bf16.msra.mxu0 0
    %173 = vmatprep.subr.bf16.mxu0 0
    %174 = vmatpush1.bf16.msra.mxu0 0
    %175 = vmatprep.subr.bf16.mxu0 0
    %176 = vmatpush1.bf16.msra.mxu0 0
    %177 = vmatprep.subr.bf16.mxu0 0
    %178 = vmatpush1.bf16.msra.mxu0 0
    %179 = vmatprep.subr.bf16.mxu0 0
    %180 = vmatpush1.bf16.msra.mxu0 0
    %181 = vmatprep.subr.bf16.mxu0 0
    %182 = vmatpush1.bf16.msra.mxu0 0
    %183 = vmatprep.subr.bf16.mxu0 0
    %184 = vmatpush1.bf16.msra.mxu0 0
    %185 = vmatprep.subr.bf16.mxu0 0
    %186 = vmatpush1.bf16.msra.mxu0 0
    %187 = vmatprep.subr.bf16.mxu0 0
    %188 = vmatpush1.bf16.msra.mxu0 0
    %189 = vmatprep.subr.bf16.mxu0 0
    %190 = vmatpush1.bf16.msra.mxu0 0
    %191 = vmatprep.subr.bf16.mxu0 0
    %192 = vmatpush1.bf16.msra.mxu0 0
    %193 = vmatprep.subr.bf16.mxu0 0
    %194 = vmatpush1.bf16.msra.mxu0 0
    %195 = vmatprep.subr.bf16.mxu0 0
    %196 = vmatpush1.bf16.msra.mxu0 0
    %197 = vmatprep.mubr.bf16.mxu0 0
    %198 = vmatmul.mubr.bf16.gmra.mrb[0].mxu0 %v163
    %v199 = vpop.f32.mrb[0].mxu0
    %v200 = vadd.f32 0.0, %v199
    %v201 = vpop.f32.mrb[0].mxu0
    %v202 = vpop.f32.mrb[0].mxu0
    %v203 = vadd.f32 0.0, %v202
    %v204 = vpop.f32.mrb[0].mxu0
    %205 = vdwg.mxu0
    %v210 = vunpack.c.l.b16 %v114
    %v211 = vunpack.c.l.b16 %v115
    %v212 = vunpack.c.l.b16 %v116
    %v213 = vunpack.c.l.b16 %v117
    %v214 = vpack.c.b16 %v211, %v210
    %v215 = vpack.c.b16 %v213, %v212
    %218 = vmatprep.subr.bf16.mxu0 0
    %219 = vmatpush1.bf16.msra.mxu0 %v214
    %220 = vmatprep.subr.bf16.mxu0 0
    %221 = vmatpush1.bf16.msra.mxu0 %v215
    %222 = vmatprep.subr.bf16.mxu0 0
    %223 = vmatpush1.bf16.msra.mxu0 0
    %224 = vmatprep.subr.bf16.mxu0 0
    %225 = vmatpush1.bf16.msra.mxu0 0
    %226 = vmatprep.subr.bf16.mxu0 0
    %227 = vmatpush1.bf16.msra.mxu0 0
    %228 = vmatprep.subr.bf16.mxu0 0
    %229 = vmatpush1.bf16.msra.mxu0 0
    %230 = vmatprep.subr.bf16.mxu0 0
    %231 = vmatpush1.bf16.msra.mxu0 0
    %232 = vmatprep.subr.bf16.mxu0 0
    %233 = vmatpush1.bf16.msra.mxu0 0
    %234 = vmatprep.subr.bf16.mxu0 0
    %235 = vmatpush1.bf16.msra.mxu0 0
    %236 = vmatprep.subr.bf16.mxu0 0
    %237 = vmatpush1.bf16.msra.mxu0 0
    %238 = vmatprep.subr.bf16.mxu0 0
    %239 = vmatpush1.bf16.msra.mxu0 0
    %240 = vmatprep.subr.bf16.mxu0 0
    %241 = vmatpush1.bf16.msra.mxu0 0
    %242 = vmatprep.subr.bf16.mxu0 0
    %243 = vmatpush1.bf16.msra.mxu0 0
    %244 = vmatprep.subr.bf16.mxu0 0
    %245 = vmatpush1.bf16.msra.mxu0 0
    %246 = vmatprep.subr.bf16.mxu0 0
    %247 = vmatpush1.bf16.msra.mxu0 0
    %248 = vmatprep.subr.bf16.mxu0 0
    %249 = vmatpush1.bf16.msra.mxu0 0
    %250 = vmatprep.mubr.bf16.mxu0 0
    %251 = vmatmul.mubr.bf16.gmra.mrb[0].mxu0 %v163
    %v252 = vpop.f32.mrb[0].mxu0
    %v253 = vadd.f32 0.0, %v252
    %v254 = vpop.f32.mrb[0].mxu0
    %v255 = vpop.f32.mrb[0].mxu0
    %v256 = vadd.f32 0.0, %v255
    %v257 = vpop.f32.mrb[0].mxu0
    %258 = vdwg.mxu0
    %v263 = vunpack.c.l.b16 %v130
    %v264 = vunpack.c.l.b16 %v131
    %v265 = vunpack.c.l.b16 %v132
    %v266 = vunpack.c.l.b16 %v133
    %v267 = vpack.c.b16 %v264, %v263
    %v268 = vpack.c.b16 %v266, %v265
    %271 = vmatprep.subr.bf16.mxu0 0
    %272 = vmatpush1.bf16.msra.mxu0 %v267
    %273 = vmatprep.subr.bf16.mxu0 0
    %274 = vmatpush1.bf16.msra.mxu0 %v268
    %275 = vmatprep.subr.bf16.mxu0 0
    %276 = vmatpush1.bf16.msra.mxu0 0
    %277 = vmatprep.subr.bf16.mxu0 0
    %278 = vmatpush1.bf16.msra.mxu0 0
    %279 = vmatprep.subr.bf16.mxu0 0
    %280 = vmatpush1.bf16.msra.mxu0 0
    %281 = vmatprep.subr.bf16.mxu0 0
    %282 = vmatpush1.bf16.msra.mxu0 0
    %283 = vmatprep.subr.bf16.mxu0 0
    %284 = vmatpush1.bf16.msra.mxu0 0
    %285 = vmatprep.subr.bf16.mxu0 0
    %286 = vmatpush1.bf16.msra.mxu0 0
    %287 = vmatprep.subr.bf16.mxu0 0
    %288 = vmatpush1.bf16.msra.mxu0 0
    %289 = vmatprep.subr.bf16.mxu0 0
    %290 = vmatpush1.bf16.msra.mxu0 0
    %291 = vmatprep.subr.bf16.mxu0 0
    %292 = vmatpush1.bf16.msra.mxu0 0
    %293 = vmatprep.subr.bf16.mxu0 0
    %294 = vmatpush1.bf16.msra.mxu0 0
    %295 = vmatprep.subr.bf16.mxu0 0
    %296 = vmatpush1.bf16.msra.mxu0 0
    %297 = vmatprep.subr.bf16.mxu0 0
    %298 = vmatpush1.bf16.msra.mxu0 0
    %299 = vmatprep.subr.bf16.mxu0 0
    %300 = vmatpush1.bf16.msra.mxu0 0
    %301 = vmatprep.subr.bf16.mxu0 0
    %302 = vmatpush1.bf16.msra.mxu0 0
    %303 = vmatprep.mubr.bf16.mxu0 0
    %304 = vmatmul.mubr.bf16.gmra.mrb[0].mxu0 %v163
    %v305 = vpop.f32.mrb[0].mxu0
    %v306 = vadd.f32 0.0, %v305
    %v307 = vpop.f32.mrb[0].mxu0
    %v308 = vpop.f32.mrb[0].mxu0
    %v309 = vadd.f32 0.0, %v308
    %v310 = vpop.f32.mrb[0].mxu0
    %311 = vdwg.mxu0
    %v312 = vpack.c.bf16 %v200, %v200
    %v313 = vpack.c.bf16 %v203, %v203
    %v314 = vpack.c.bf16 %v253, %v253
    %v315 = vpack.c.bf16 %v256, %v256
    %v316 = vpack.c.bf16 %v306, %v306
    %v317 = vpack.c.bf16 %v309, %v309
    %vm318 = vcmask 64512
    %v320 = vsel %vm318, %v312, 0
    %v323 = vsel %vm318, %v314, 0
    %325 = vmatprep.subr.bf16.mxu0 0
    %326 = vmatpush1.bf16.xpose.msra.mxu0 %v323
    %327 = vmatprep.subr.bf16.mxu0 0
    %328 = vmatpush1.bf16.xpose.msra.mxu0 0
    %329 = vmatprep.subr.bf16.mxu0 0
    %330 = vmatpush1.bf16.xpose.msra.mxu0 0
    %331 = vmatprep.subr.bf16.mxu0 0
    %332 = vmatpush1.bf16.xpose.msra.mxu0 0
    %333 = vmatprep.subr.bf16.mxu0 0
    %334 = vmatpush1.bf16.xpose.msra.mxu0 0
    %335 = vmatprep.subr.bf16.mxu0 0
    %336 = vmatpush1.bf16.xpose.msra.mxu0 0
    %337 = vmatprep.subr.bf16.mxu0 0
    %338 = vmatpush1.bf16.xpose.msra.mxu0 0
    %339 = vmatprep.subr.bf16.mxu0 0
    %340 = vmatpush1.bf16.xpose.msra.mxu0 0
    %341 = vmatprep.subr.bf16.mxu0 0
    %342 = vmatpush1.bf16.xpose.msra.mxu0 0
    %343 = vmatprep.subr.bf16.mxu0 0
    %344 = vmatpush1.bf16.xpose.msra.mxu0 0
    %345 = vmatprep.subr.bf16.mxu0 0
    %346 = vmatpush1.bf16.xpose.msra.mxu0 0
    %347 = vmatprep.subr.bf16.mxu0 0
    %348 = vmatpush1.bf16.xpose.msra.mxu0 0
    %349 = vmatprep.subr.bf16.mxu0 0
    %350 = vmatpush1.bf16.xpose.msra.mxu0 0
    %351 = vmatprep.subr.bf16.mxu0 0
    %352 = vmatpush1.bf16.xpose.msra.mxu0 0
    %353 = vmatprep.subr.bf16.mxu0 0
    %354 = vmatpush1.bf16.xpose.msra.mxu0 0
    %355 = vmatprep.subr.bf16.mxu0 0
    %356 = vmatpush1.bf16.xpose.msra.mxu0 0
    %357 = vmatprep.mubr.bf16.mxu0 0
    %358 = vmatmul.mubr.bf16.gmra.mrb[0].mxu0 %v320
    %v359 = vpop.f32.mrb[0].mxu0
    %v360 = vadd.f32 0.0, %v359
    %v361 = vpop.f32.mrb[0].mxu0
    %v362 = vpop.f32.mrb[0].mxu0
    %v363 = vpop.f32.mrb[0].mxu0
    %364 = vdwg.mxu0
    %v366 = vsel %vm318, %v313, 0
    %v369 = vsel %vm318, %v315, 0
    %371 = vmatprep.subr.bf16.mxu0 0
    %372 = vmatpush1.bf16.xpose.msra.mxu0 %v369
    %373 = vmatprep.subr.bf16.mxu0 0
    %374 = vmatpush1.bf16.xpose.msra.mxu0 0
    %375 = vmatprep.subr.bf16.mxu0 0
    %376 = vmatpush1.bf16.xpose.msra.mxu0 0
    %377 = vmatprep.subr.bf16.mxu0 0
    %378 = vmatpush1.bf16.xpose.msra.mxu0 0
    %379 = vmatprep.subr.bf16.mxu0 0
    %380 = vmatpush1.bf16.xpose.msra.mxu0 0
    %381 = vmatprep.subr.bf16.mxu0 0
    %382 = vmatpush1.bf16.xpose.msra.mxu0 0
    %383 = vmatprep.subr.bf16.mxu0 0
    %384 = vmatpush1.bf16.xpose.msra.mxu0 0
    %385 = vmatprep.subr.bf16.mxu0 0
    %386 = vmatpush1.bf16.xpose.msra.mxu0 0
    %387 = vmatprep.subr.bf16.mxu0 0
    %388 = vmatpush1.bf16.xpose.msra.mxu0 0
    %389 = vmatprep.subr.bf16.mxu0 0
    %390 = vmatpush1.bf16.xpose.msra.mxu0 0
    %391 = vmatprep.subr.bf16.mxu0 0
    %392 = vmatpush1.bf16.xpose.msra.mxu0 0
    %393 = vmatprep.subr.bf16.mxu0 0
    %394 = vmatpush1.bf16.xpose.msra.mxu0 0
    %395 = vmatprep.subr.bf16.mxu0 0
    %396 = vmatpush1.bf16.xpose.msra.mxu0 0
    %397 = vmatprep.subr.bf16.mxu0 0
    %398 = vmatpush1.bf16.xpose.msra.mxu0 0
    %399 = vmatprep.subr.bf16.mxu0 0
    %400 = vmatpush1.bf16.xpose.msra.mxu0 0
    %401 = vmatprep.subr.bf16.mxu0 0
    %402 = vmatpush1.bf16.xpose.msra.mxu0 0
    %403 = vmatprep.mubr.bf16.mxu0 0
    %404 = vmatmul.mubr.bf16.gmra.mrb[0].mxu0 %v366
    %v405 = vpop.f32.mrb[0].mxu0
    %v406 = vadd.f32 0.0, %v405
    %v407 = vpop.f32.mrb[0].mxu0
    %v408 = vpop.f32.mrb[0].mxu0
    %v409 = vpop.f32.mrb[0].mxu0
    %410 = vdwg.mxu0
    %v411 = vsel %vm318, %v360, -inf
    %412 = vmax.xlane.f32.xlu0 %v411
    %v413 = vpop.xlane.xlu0 %412
    %v414 = vsel %vm318, %v406, -inf
    %415 = vmax.xlane.f32.xlu0 %v414
    %v416 = vpop.xlane.xlu0 %415
    %v417 = vsub.f32 %v360, %v413
    %v418 = vsub.f32 %v406, %v416
    %v419 = vmul.f32 %v417, 1.442695
    %v420 = vpow.pop %v419
    %v421 = vmul.f32 %v418, 1.442695
    %v422 = vpow.pop %v421
    %v423 = vsel %vm318, %v420, 0.0
    %424 = vadd.xlane.f32.xlu0 %v423
    %v425 = vpop.xlane.xlu0 %424
    %v426 = vsel %vm318, %v422, 0.0
    %427 = vadd.xlane.f32.xlu0 %v426
    %v428 = vpop.xlane.xlu0 %427
    %v429 = vrcp.pop %v425
    %v430 = vrcp.pop %v428
    %v431 = vmul.f32 %v420, %v429
    %v432 = vmul.f32 %v422, %v430
    %v433 = vpack.c.bf16 %v431, %v431
    %v434 = vpack.c.bf16 %v432, %v432
    %v436 = vsel %vm318, %v433, 0
    %vm438 = vcmask 1043456
    %v440 = vsel %vm438, %v316, 0
    %442 = vmatprep.subr.bf16.mxu0 0
    %443 = vmatpush1.bf16.msra.mxu0 %v440
    %444 = vmatprep.subr.bf16.mxu0 0
    %445 = vmatpush1.bf16.msra.mxu0 0
    %446 = vmatprep.subr.bf16.mxu0 0
    %447 = vmatpush1.bf16.msra.mxu0 0
    %448 = vmatprep.subr.bf16.mxu0 0
    %449 = vmatpush1.bf16.msra.mxu0 0
    %450 = vmatprep.subr.bf16.mxu0 0
    %451 = vmatpush1.bf16.msra.mxu0 0
    %452 = vmatprep.subr.bf16.mxu0 0
    %453 = vmatpush1.bf16.msra.mxu0 0
    %454 = vmatprep.subr.bf16.mxu0 0
    %455 = vmatpush1.bf16.msra.mxu0 0
    %456 = vmatprep.subr.bf16.mxu0 0
    %457 = vmatpush1.bf16.msra.mxu0 0
    %458 = vmatprep.subr.bf16.mxu0 0
    %459 = vmatpush1.bf16.msra.mxu0 0
    %460 = vmatprep.subr.bf16.mxu0 0
    %461 = vmatpush1.bf16.msra.mxu0 0
    %462 = vmatprep.subr.bf16.mxu0 0
    %463 = vmatpush1.bf16.msra.mxu0 0
    %464 = vmatprep.subr.bf16.mxu0 0
    %465 = vmatpush1.bf16.msra.mxu0 0
    %466 = vmatprep.subr.bf16.mxu0 0
    %467 = vmatpush1.bf16.msra.mxu0 0
    %468 = vmatprep.subr.bf16.mxu0 0
    %469 = vmatpush1.bf16.msra.mxu0 0
    %470 = vmatprep.subr.bf16.mxu0 0
    %471 = vmatpush1.bf16.msra.mxu0 0
    %472 = vmatprep.subr.bf16.mxu0 0
    %473 = vmatpush1.bf16.msra.mxu0 0
    %474 = vmatprep.mubr.bf16.mxu0 0
    %475 = vmatmul.mubr.bf16.gmra.mrb[0].mxu0 %v436
    %v476 = vpop.f32.mrb[0].mxu0
    %v477 = vadd.f32 0.0, %v476
    %v478 = vpop.f32.mrb[0].mxu0
    %v479 = vpop.f32.mrb[0].mxu0
    %v480 = vpop.f32.mrb[0].mxu0
    %481 = vdwg.mxu0
    %v483 = vsel %vm318, %v434, 0
    %v486 = vsel %vm438, %v317, 0
    %488 = vmatprep.subr.bf16.mxu0 0
    %489 = vmatpush1.bf16.msra.mxu0 %v486
    %490 = vmatprep.subr.bf16.mxu0 0
    %491 = vmatpush1.bf16.msra.mxu0 0
    %492 = vmatprep.subr.bf16.mxu0 0
    %493 = vmatpush1.bf16.msra.mxu0 0
    %494 = vmatprep.subr.bf16.mxu0 0
    %495 = vmatpush1.bf16.msra.mxu0 0
    %496 = vmatprep.subr.bf16.mxu0 0
    %497 = vmatpush1.bf16.msra.mxu0 0
    %498 = vmatprep.subr.bf16.mxu0 0
    %499 = vmatpush1.bf16.msra.mxu0 0
    %500 = vmatprep.subr.bf16.mxu0 0
    %501 = vmatpush1.bf16.msra.mxu0 0
    %502 = vmatprep.subr.bf16.mxu0 0
    %503 = vmatpush1.bf16.msra.mxu0 0
    %504 = vmatprep.subr.bf16.mxu0 0
    %505 = vmatpush1.bf16.msra.mxu0 0
    %506 = vmatprep.subr.bf16.mxu0 0
    %507 = vmatpush1.bf16.msra.mxu0 0
    %508 = vmatprep.subr.bf16.mxu0 0
    %509 = vmatpush1.bf16.msra.mxu0 0
    %510 = vmatprep.subr.bf16.mxu0 0
    %511 = vmatpush1.bf16.msra.mxu0 0
    %512 = vmatprep.subr.bf16.mxu0 0
    %513 = vmatpush1.bf16.msra.mxu0 0
    %514 = vmatprep.subr.bf16.mxu0 0
    %515 = vmatpush1.bf16.msra.mxu0 0
    %516 = vmatprep.subr.bf16.mxu0 0
    %517 = vmatpush1.bf16.msra.mxu0 0
    %518 = vmatprep.subr.bf16.mxu0 0
    %519 = vmatpush1.bf16.msra.mxu0 0
    %520 = vmatprep.mubr.bf16.mxu0 0
    %521 = vmatmul.mubr.bf16.gmra.mrb[0].mxu0 %v483
    %v522 = vpop.f32.mrb[0].mxu0
    %v523 = vadd.f32 0.0, %v522
    %v524 = vpop.f32.mrb[0].mxu0
    %v525 = vpop.f32.mrb[0].mxu0
    %v526 = vpop.f32.mrb[0].mxu0
    %527 = vdwg.mxu0
    %v528 = vpack.c.bf16 %v523, %v477
    %v533 = vunpack.c.l.b16 %v102
    %v534 = vunpack.c.l.b16 %v103
    %v535 = vunpack.c.l.b16 %v104
    %v536 = vunpack.c.l.b16 %v105
    %v537 = vpack.c.b16 %v534, %v533
    %v538 = vpack.c.b16 %v536, %v535
    %541 = vmatprep.subr.bf16.mxu0 0
    %542 = vmatpush1.bf16.msra.mxu0 %v537
    %543 = vmatprep.subr.bf16.mxu0 0
    %544 = vmatpush1.bf16.msra.mxu0 %v538
    %545 = vmatprep.subr.bf16.mxu0 0
    %546 = vmatpush1.bf16.msra.mxu0 0
    %547 = vmatprep.subr.bf16.mxu0 0
    %548 = vmatpush1.bf16.msra.mxu0 0
    %549 = vmatprep.subr.bf16.mxu0 0
    %550 = vmatpush1.bf16.msra.mxu0 0
    %551 = vmatprep.subr.bf16.mxu0 0
    %552 = vmatpush1.bf16.msra.mxu0 0
    %553 = vmatprep.subr.bf16.mxu0 0
    %554 = vmatpush1.bf16.msra.mxu0 0
    %555 = vmatprep.subr.bf16.mxu0 0
    %556 = vmatpush1.bf16.msra.mxu0 0
    %557 = vmatprep.subr.bf16.mxu0 0
    %558 = vmatpush1.bf16.msra.mxu0 0
    %559 = vmatprep.subr.bf16.mxu0 0
    %560 = vmatpush1.bf16.msra.mxu0 0
    %561 = vmatprep.subr.bf16.mxu0 0
    %562 = vmatpush1.bf16.msra.mxu0 0
    %563 = vmatprep.subr.bf16.mxu0 0
    %564 = vmatpush1.bf16.msra.mxu0 0
    %565 = vmatprep.subr.bf16.mxu0 0
    %566 = vmatpush1.bf16.msra.mxu0 0
    %567 = vmatprep.subr.bf16.mxu0 0
    %568 = vmatpush1.bf16.msra.mxu0 0
    %569 = vmatprep.subr.bf16.mxu0 0
    %570 = vmatpush1.bf16.msra.mxu0 0
    %571 = vmatprep.subr.bf16.mxu0 0
    %572 = vmatpush1.bf16.msra.mxu0 0
    %573 = vmatprep.mubr.bf16.mxu0 0
    %574 = vmatmul.mubr.bf16.gmra.mrb[0].mxu0 %v163
    %v575 = vpop.f32.mrb[0].mxu0
    %v576 = vadd.f32 0.0, %v575
    %v577 = vpop.f32.mrb[0].mxu0
    %v578 = vpop.f32.mrb[0].mxu0
    %v579 = vadd.f32 0.0, %v578
    %v580 = vpop.f32.mrb[0].mxu0
    %581 = vdwg.mxu0
    %v586 = vunpack.c.l.b16 %v118
    %v587 = vunpack.c.l.b16 %v119
    %v588 = vunpack.c.l.b16 %v120
    %v589 = vunpack.c.l.b16 %v121
    %v590 = vpack.c.b16 %v587, %v586
    %v591 = vpack.c.b16 %v589, %v588
    %594 = vmatprep.subr.bf16.mxu0 0
    %595 = vmatpush1.bf16.msra.mxu0 %v590
    %596 = vmatprep.subr.bf16.mxu0 0
    %597 = vmatpush1.bf16.msra.mxu0 %v591
    %598 = vmatprep.subr.bf16.mxu0 0
    %599 = vmatpush1.bf16.msra.mxu0 0
    %600 = vmatprep.subr.bf16.mxu0 0
    %601 = vmatpush1.bf16.msra.mxu0 0
    %602 = vmatprep.subr.bf16.mxu0 0
    %603 = vmatpush1.bf16.msra.mxu0 0
    %604 = vmatprep.subr.bf16.mxu0 0
    %605 = vmatpush1.bf16.msra.mxu0 0
    %606 = vmatprep.subr.bf16.mxu0 0
    %607 = vmatpush1.bf16.msra.mxu0 0
    %608 = vmatprep.subr.bf16.mxu0 0
    %609 = vmatpush1.bf16.msra.mxu0 0
    %610 = vmatprep.subr.bf16.mxu0 0
    %611 = vmatpush1.bf16.msra.mxu0 0
    %612 = vmatprep.subr.bf16.mxu0 0
    %613 = vmatpush1.bf16.msra.mxu0 0
    %614 = vmatprep.subr.bf16.mxu0 0
    %615 = vmatpush1.bf16.msra.mxu0 0
    %616 = vmatprep.subr.bf16.mxu0 0
    %617 = vmatpush1.bf16.msra.mxu0 0
    %618 = vmatprep.subr.bf16.mxu0 0
    %619 = vmatpush1.bf16.msra.mxu0 0
    %620 = vmatprep.subr.bf16.mxu0 0
    %621 = vmatpush1.bf16.msra.mxu0 0
    %622 = vmatprep.subr.bf16.mxu0 0
    %623 = vmatpush1.bf16.msra.mxu0 0
    %624 = vmatprep.subr.bf16.mxu0 0
    %625 = vmatpush1.bf16.msra.mxu0 0
    %626 = vmatprep.mubr.bf16.mxu0 0
    %627 = vmatmul.mubr.bf16.gmra.mrb[0].mxu0 %v163
    %v628 = vpop.f32.mrb[0].mxu0
    %v629 = vadd.f32 0.0, %v628
    %v630 = vpop.f32.mrb[0].mxu0
    %v631 = vpop.f32.mrb[0].mxu0
    %v632 = vadd.f32 0.0, %v631
    %v633 = vpop.f32.mrb[0].mxu0
    %634 = vdwg.mxu0
    %v639 = vunpack.c.l.b16 %v134
    %v640 = vunpack.c.l.b16 %v135
    %v641 = vunpack.c.l.b16 %v136
    %v642 = vunpack.c.l.b16 %v137
    %v643 = vpack.c.b16 %v640, %v639
    %v644 = vpack.c.b16 %v642, %v641
    %647 = vmatprep.subr.bf16.mxu0 0
    %648 = vmatpush1.bf16.msra.mxu0 %v643
    %649 = vmatprep.subr.bf16.mxu0 0
    %650 = vmatpush1.bf16.msra.mxu0 %v644
    %651 = vmatprep.subr.bf16.mxu0 0
    %652 = vmatpush1.bf16.msra.mxu0 0
    %653 = vmatprep.subr.bf16.mxu0 0
    %654 = vmatpush1.bf16.msra.mxu0 0
    %655 = vmatprep.subr.bf16.mxu0 0
    %656 = vmatpush1.bf16.msra.mxu0 0
    %657 = vmatprep.subr.bf16.mxu0 0
    %658 = vmatpush1.bf16.msra.mxu0 0
    %659 = vmatprep.subr.bf16.mxu0 0
    %660 = vmatpush1.bf16.msra.mxu0 0
    %661 = vmatprep.subr.bf16.mxu0 0
    %662 = vmatpush1.bf16.msra.mxu0 0
    %663 = vmatprep.subr.bf16.mxu0 0
    %664 = vmatpush1.bf16.msra.mxu0 0
    %665 = vmatprep.subr.bf16.mxu0 0
    %666 = vmatpush1.bf16.msra.mxu0 0
    %667 = vmatprep.subr.bf16.mxu0 0
    %668 = vmatpush1.bf16.msra.mxu0 0
    %669 = vmatprep.subr.bf16.mxu0 0
    %670 = vmatpush1.bf16.msra.mxu0 0
    %671 = vmatprep.subr.bf16.mxu0 0
    %672 = vmatpush1.bf16.msra.mxu0 0
    %673 = vmatprep.subr.bf16.mxu0 0
    %674 = vmatpush1.bf16.msra.mxu0 0
    %675 = vmatprep.subr.bf16.mxu0 0
    %676 = vmatpush1.bf16.msra.mxu0 0
    %677 = vmatprep.subr.bf16.mxu0 0
    %678 = vmatpush1.bf16.msra.mxu0 0
    %679 = vmatprep.mubr.bf16.mxu0 0
    %680 = vmatmul.mubr.bf16.gmra.mrb[0].mxu0 %v163
    %v681 = vpop.f32.mrb[0].mxu0
    %v682 = vadd.f32 0.0, %v681
    %v683 = vpop.f32.mrb[0].mxu0
    %v684 = vpop.f32.mrb[0].mxu0
    %v685 = vadd.f32 0.0, %v684
    %v686 = vpop.f32.mrb[0].mxu0
    %687 = vdwg.mxu0
    %v688 = vpack.c.bf16 %v576, %v576
    %v689 = vpack.c.bf16 %v579, %v579
    %v690 = vpack.c.bf16 %v629, %v629
    %v691 = vpack.c.bf16 %v632, %v632
    %v692 = vpack.c.bf16 %v682, %v682
    %v693 = vpack.c.bf16 %v685, %v685
    %v695 = vsel %vm318, %v688, 0
    %v698 = vsel %vm318, %v690, 0
    %700 = vmatprep.subr.bf16.mxu0 0
    %701 = vmatpush1.bf16.xpose.msra.mxu0 %v698
    %702 = vmatprep.subr.bf16.mxu0 0
    %703 = vmatpush1.bf16.xpose.msra.mxu0 0
    %704 = vmatprep.subr.bf16.mxu0 0
    %705 = vmatpush1.bf16.xpose.msra.mxu0 0
    %706 = vmatprep.subr.bf16.mxu0 0
    %707 = vmatpush1.bf16.xpose.msra.mxu0 0
    %708 = vmatprep.subr.bf16.mxu0 0
    %709 = vmatpush1.bf16.xpose.msra.mxu0 0
    %710 = vmatprep.subr.bf16.mxu0 0
    %711 = vmatpush1.bf16.xpose.msra.mxu0 0
    %712 = vmatprep.subr.bf16.mxu0 0
    %713 = vmatpush1.bf16.xpose.msra.mxu0 0
    %714 = vmatprep.subr.bf16.mxu0 0
    %715 = vmatpush1.bf16.xpose.msra.mxu0 0
    %716 = vmatprep.subr.bf16.mxu0 0
    %717 = vmatpush1.bf16.xpose.msra.mxu0 0
    %718 = vmatprep.subr.bf16.mxu0 0
    %719 = vmatpush1.bf16.xpose.msra.mxu0 0
    %720 = vmatprep.subr.bf16.mxu0 0
    %721 = vmatpush1.bf16.xpose.msra.mxu0 0
    %722 = vmatprep.subr.bf16.mxu0 0
    %723 = vmatpush1.bf16.xpose.msra.mxu0 0
    %724 = vmatprep.subr.bf16.mxu0 0
    %725 = vmatpush1.bf16.xpose.msra.mxu0 0
    %726 = vmatprep.subr.bf16.mxu0 0
    %727 = vmatpush1.bf16.xpose.msra.mxu0 0
    %728 = vmatprep.subr.bf16.mxu0 0
    %729 = vmatpush1.bf16.xpose.msra.mxu0 0
    %730 = vmatprep.subr.bf16.mxu0 0
    %731 = vmatpush1.bf16.xpose.msra.mxu0 0
    %732 = vmatprep.mubr.bf16.mxu0 0
    %733 = vmatmul.mubr.bf16.gmra.mrb[0].mxu0 %v695
    %v734 = vpop.f32.mrb[0].mxu0
    %v735 = vadd.f32 0.0, %v734
    %v736 = vpop.f32.mrb[0].mxu0
    %v737 = vpop.f32.mrb[0].mxu0
    %v738 = vpop.f32.mrb[0].mxu0
    %739 = vdwg.mxu0
    %v741 = vsel %vm318, %v689, 0
    %v744 = vsel %vm318, %v691, 0
    %746 = vmatprep.subr.bf16.mxu0 0
    %747 = vmatpush1.bf16.xpose.msra.mxu0 %v744
    %748 = vmatprep.subr.bf16.mxu0 0
    %749 = vmatpush1.bf16.xpose.msra.mxu0 0
    %750 = vmatprep.subr.bf16.mxu0 0
    %751 = vmatpush1.bf16.xpose.msra.mxu0 0
    %752 = vmatprep.subr.bf16.mxu0 0
    %753 = vmatpush1.bf16.xpose.msra.mxu0 0
    %754 = vmatprep.subr.bf16.mxu0 0
    %755 = vmatpush1.bf16.xpose.msra.mxu0 0
    %756 = vmatprep.subr.bf16.mxu0 0
    %757 = vmatpush1.bf16.xpose.msra.mxu0 0
    %758 = vmatprep.subr.bf16.mxu0 0
    %759 = vmatpush1.bf16.xpose.msra.mxu0 0
    %760 = vmatprep.subr.bf16.mxu0 0
    %761 = vmatpush1.bf16.xpose.msra.mxu0 0
    %762 = vmatprep.subr.bf16.mxu0 0
    %763 = vmatpush1.bf16.xpose.msra.mxu0 0
    %764 = vmatprep.subr.bf16.mxu0 0
    %765 = vmatpush1.bf16.xpose.msra.mxu0 0
    %766 = vmatprep.subr.bf16.mxu0 0
    %767 = vmatpush1.bf16.xpose.msra.mxu0 0
    %768 = vmatprep.subr.bf16.mxu0 0
    %769 = vmatpush1.bf16.xpose.msra.mxu0 0
    %770 = vmatprep.subr.bf16.mxu0 0
    %771 = vmatpush1.bf16.xpose.msra.mxu0 0
    %772 = vmatprep.subr.bf16.mxu0 0
    %773 = vmatpush1.bf16.xpose.msra.mxu0 0
    %774 = vmatprep.subr.bf16.mxu0 0
    %775 = vmatpush1.bf16.xpose.msra.mxu0 0
    %776 = vmatprep.subr.bf16.mxu0 0
    %777 = vmatpush1.bf16.xpose.msra.mxu0 0
    %778 = vmatprep.mubr.bf16.mxu0 0
    %779 = vmatmul.mubr.bf16.gmra.mrb[0].mxu0 %v741
    %v780 = vpop.f32.mrb[0].mxu0
    %v781 = vadd.f32 0.0, %v780
    %v782 = vpop.f32.mrb[0].mxu0
    %v783 = vpop.f32.mrb[0].mxu0
    %v784 = vpop.f32.mrb[0].mxu0
    %785 = vdwg.mxu0
    %v786 = vsel %vm318, %v735, -inf
    %787 = vmax.xlane.f32.xlu0 %v786
    %v788 = vpop.xlane.xlu0 %787
    %v789 = vsel %vm318, %v781, -inf
    %790 = vmax.xlane.f32.xlu0 %v789
    %v791 = vpop.xlane.xlu0 %790
    %v792 = vsub.f32 %v735, %v788
    %v793 = vsub.f32 %v781, %v791
    %v794 = vmul.f32 %v792, 1.442695
    %v795 = vpow.pop %v794
    %v796 = vmul.f32 %v793, 1.442695
    %v797 = vpow.pop %v796
    %v798 = vsel %vm318, %v795, 0.0
    %799 = vadd.xlane.f32.xlu0 %v798
    %v800 = vpop.xlane.xlu0 %799
    %v801 = vsel %vm318, %v797, 0.0
    %802 = vadd.xlane.f32.xlu0 %v801
    %v803 = vpop.xlane.xlu0 %802
    %v804 = vrcp.pop %v800
    %v805 = vrcp.pop %v803
    %v806 = vmul.f32 %v795, %v804
    %v807 = vmul.f32 %v797, %v805
    %v808 = vpack.c.bf16 %v806, %v806
    %v809 = vpack.c.bf16 %v807, %v807
    %v811 = vsel %vm318, %v808, 0
    %v814 = vsel %vm438, %v692, 0
    %816 = vmatprep.subr.bf16.mxu0 0
    %817 = vmatpush1.bf16.msra.mxu0 %v814
    %818 = vmatprep.subr.bf16.mxu0 0
    %819 = vmatpush1.bf16.msra.mxu0 0
    %820 = vmatprep.subr.bf16.mxu0 0
    %821 = vmatpush1.bf16.msra.mxu0 0
    %822 = vmatprep.subr.bf16.mxu0 0
    %823 = vmatpush1.bf16.msra.mxu0 0
    %824 = vmatprep.subr.bf16.mxu0 0
    %825 = vmatpush1.bf16.msra.mxu0 0
    %826 = vmatprep.subr.bf16.mxu0 0
    %827 = vmatpush1.bf16.msra.mxu0 0
    %828 = vmatprep.subr.bf16.mxu0 0
    %829 = vmatpush1.bf16.msra.mxu0 0
    %830 = vmatprep.subr.bf16.mxu0 0
    %831 = vmatpush1.bf16.msra.mxu0 0
    %832 = vmatprep.subr.bf16.mxu0 0
    %833 = vmatpush1.bf16.msra.mxu0 0
    %834 = vmatprep.subr.bf16.mxu0 0
    %835 = vmatpush1.bf16.msra.mxu0 0
    %836 = vmatprep.subr.bf16.mxu0 0
    %837 = vmatpush1.bf16.msra.mxu0 0
    %838 = vmatprep.subr.bf16.mxu0 0
    %839 = vmatpush1.bf16.msra.mxu0 0
    %840 = vmatprep.subr.bf16.mxu0 0
    %841 = vmatpush1.bf16.msra.mxu0 0
    %842 = vmatprep.subr.bf16.mxu0 0
    %843 = vmatpush1.bf16.msra.mxu0 0
    %844 = vmatprep.subr.bf16.mxu0 0
    %845 = vmatpush1.bf16.msra.mxu0 0
    %846 = vmatprep.subr.bf16.mxu0 0
    %847 = vmatpush1.bf16.msra.mxu0 0
    %848 = vmatprep.mubr.bf16.mxu0 0
    %849 = vmatmul.mubr.bf16.gmra.mrb[0].mxu0 %v811
    %v850 = vpop.f32.mrb[0].mxu0
    %v851 = vadd.f32 0.0, %v850
    %v852 = vpop.f32.mrb[0].mxu0
    %v853 = vpop.f32.mrb[0].mxu0
    %v854 = vpop.f32.mrb[0].mxu0
    %855 = vdwg.mxu0
    %v857 = vsel %vm318, %v809, 0
    %v860 = vsel %vm438, %v693, 0
    %862 = vmatprep.subr.bf16.mxu0 0
    %863 = vmatpush1.bf16.msra.mxu0 %v860
    %864 = vmatprep.subr.bf16.mxu0 0
    %865 = vmatpush1.bf16.msra.mxu0 0
    %866 = vmatprep.subr.bf16.mxu0 0
    %867 = vmatpush1.bf16.msra.mxu0 0
    %868 = vmatprep.subr.bf16.mxu0 0
    %869 = vmatpush1.bf16.msra.mxu0 0
    %870 = vmatprep.subr.bf16.mxu0 0
    %871 = vmatpush1.bf16.msra.mxu0 0
    %872 = vmatprep.subr.bf16.mxu0 0
    %873 = vmatpush1.bf16.msra.mxu0 0
    %874 = vmatprep.subr.bf16.mxu0 0
    %875 = vmatpush1.bf16.msra.mxu0 0
    %876 = vmatprep.subr.bf16.mxu0 0
    %877 = vmatpush1.bf16.msra.mxu0 0
    %878 = vmatprep.subr.bf16.mxu0 0
    %879 = vmatpush1.bf16.msra.mxu0 0
    %880 = vmatprep.subr.bf16.mxu0 0
    %881 = vmatpush1.bf16.msra.mxu0 0
    %882 = vmatprep.subr.bf16.mxu0 0
    %883 = vmatpush1.bf16.msra.mxu0 0
    %884 = vmatprep.subr.bf16.mxu0 0
    %885 = vmatpush1.bf16.msra.mxu0 0
    %886 = vmatprep.subr.bf16.mxu0 0
    %887 = vmatpush1.bf16.msra.mxu0 0
    %888 = vmatprep.subr.bf16.mxu0 0
    %889 = vmatpush1.bf16.msra.mxu0 0
    %890 = vmatprep.subr.bf16.mxu0 0
    %891 = vmatpush1.bf16.msra.mxu0 0
    %892 = vmatprep.subr.bf16.mxu0 0
    %893 = vmatpush1.bf16.msra.mxu0 0
    %894 = vmatprep.mubr.bf16.mxu0 0
    %895 = vmatmul.mubr.bf16.gmra.mrb[0].mxu0 %v857
    %v896 = vpop.f32.mrb[0].mxu0
    %v897 = vadd.f32 0.0, %v896
    %v898 = vpop.f32.mrb[0].mxu0
    %v899 = vpop.f32.mrb[0].mxu0
    %v900 = vpop.f32.mrb[0].mxu0
    %901 = vdwg.mxu0
    %v902 = vpack.c.bf16 %v897, %v851
    %v904 = vsel %vm318, %v902, 0
    %v907 = vsel %vm438, %v147, 0
    %909 = vmatprep.subr.bf16.mxu0 0
    %910 = vmatpush1.bf16.msra.mxu0 %v907
    %911 = vmatprep.subr.bf16.mxu0 0
    %912 = vmatpush1.bf16.msra.mxu0 0
    %913 = vmatprep.subr.bf16.mxu0 0
    %914 = vmatpush1.bf16.msra.mxu0 0
    %915 = vmatprep.subr.bf16.mxu0 0
    %916 = vmatpush1.bf16.msra.mxu0 0
    %917 = vmatprep.subr.bf16.mxu0 0
    %918 = vmatpush1.bf16.msra.mxu0 0
    %919 = vmatprep.subr.bf16.mxu0 0
    %920 = vmatpush1.bf16.msra.mxu0 0
    %921 = vmatprep.subr.bf16.mxu0 0
    %922 = vmatpush1.bf16.msra.mxu0 0
    %923 = vmatprep.subr.bf16.mxu0 0
    %924 = vmatpush1.bf16.msra.mxu0 0
    %925 = vmatprep.subr.bf16.mxu0 0
    %926 = vmatpush1.bf16.msra.mxu0 0
    %927 = vmatprep.subr.bf16.mxu0 0
    %928 = vmatpush1.bf16.msra.mxu0 0
    %929 = vmatprep.subr.bf16.mxu0 0
    %930 = vmatpush1.bf16.msra.mxu0 0
    %931 = vmatprep.subr.bf16.mxu0 0
    %932 = vmatpush1.bf16.msra.mxu0 0
    %933 = vmatprep.subr.bf16.mxu0 0
    %934 = vmatpush1.bf16.msra.mxu0 0
    %935 = vmatprep.subr.bf16.mxu0 0
    %936 = vmatpush1.bf16.msra.mxu0 0
    %937 = vmatprep.subr.bf16.mxu0 0
    %938 = vmatpush1.bf16.msra.mxu0 0
    %939 = vmatprep.subr.bf16.mxu0 0
    %940 = vmatpush1.bf16.msra.mxu0 0
    %941 = vmatprep.mubr.bf16.mxu0 0
    %942 = vmatmul.mubr.bf16.gmra.mrb[0].mxu0 %v904
    %v943 = vpop.f32.mrb[0].mxu0
    %v944 = vadd.f32 0.0, %v943
    %v945 = vpop.f32.mrb[0].mxu0
    %v946 = vpop.f32.mrb[0].mxu0
    %v947 = vadd.f32 0.0, %v946
    %v948 = vpop.f32.mrb[0].mxu0
    %949 = vdwg.mxu0
    %v951 = vsel %vm318, %v528, 0
    %v954 = vsel %vm438, %v146, 0
    %956 = vmatprep.subr.bf16.mxu0 0
    %957 = vmatpush1.bf16.msra.mxu0 %v954
    %958 = vmatprep.subr.bf16.mxu0 0
    %959 = vmatpush1.bf16.msra.mxu0 0
    %960 = vmatprep.subr.bf16.mxu0 0
    %961 = vmatpush1.bf16.msra.mxu0 0
    %962 = vmatprep.subr.bf16.mxu0 0
    %963 = vmatpush1.bf16.msra.mxu0 0
    %964 = vmatprep.subr.bf16.mxu0 0
    %965 = vmatpush1.bf16.msra.mxu0 0
    %966 = vmatprep.subr.bf16.mxu0 0
    %967 = vmatpush1.bf16.msra.mxu0 0
    %968 = vmatprep.subr.bf16.mxu0 0
    %969 = vmatpush1.bf16.msra.mxu0 0
    %970 = vmatprep.subr.bf16.mxu0 0
    %971 = vmatpush1.bf16.msra.mxu0 0
    %972 = vmatprep.subr.bf16.mxu0 0
    %973 = vmatpush1.bf16.msra.mxu0 0
    %974 = vmatprep.subr.bf16.mxu0 0
    %975 = vmatpush1.bf16.msra.mxu0 0
    %976 = vmatprep.subr.bf16.mxu0 0
    %977 = vmatpush1.bf16.msra.mxu0 0
    %978 = vmatprep.subr.bf16.mxu0 0
    %979 = vmatpush1.bf16.msra.mxu0 0
    %980 = vmatprep.subr.bf16.mxu0 0
    %981 = vmatpush1.bf16.msra.mxu0 0
    %982 = vmatprep.subr.bf16.mxu0 0
    %983 = vmatpush1.bf16.msra.mxu0 0
    %984 = vmatprep.subr.bf16.mxu0 0
    %985 = vmatpush1.bf16.msra.mxu0 0
    %986 = vmatprep.subr.bf16.mxu0 0
    %987 = vmatpush1.bf16.msra.mxu0 0
    %988 = vmatprep.mubr.bf16.mxu0 0
    %989 = vmatmul.mubr.bf16.gmra.mrb[0].mxu0 %v951
    %v990 = vpop.f32.mrb[0].mxu0
    %v991 = vadd.f32 %v944, %v990
    %v992 = vpop.f32.mrb[0].mxu0
    %v993 = vpop.f32.mrb[0].mxu0
    %v994 = vadd.f32 %v947, %v993
    %v995 = vpop.f32.mrb[0].mxu0
    %996 = vdwg.mxu0
    %v1001 = vunpack.c.l.b16 %v106
    %v1002 = vunpack.c.l.b16 %v107
    %v1003 = vunpack.c.l.b16 %v108
    %v1004 = vunpack.c.l.b16 %v109
    %v1005 = vpack.c.b16 %v1002, %v1001
    %v1006 = vpack.c.b16 %v1004, %v1003
    %1009 = vmatprep.subr.bf16.mxu0 0
    %1010 = vmatpush1.bf16.msra.mxu0 %v1005
    %1011 = vmatprep.subr.bf16.mxu0 0
    %1012 = vmatpush1.bf16.msra.mxu0 %v1006
    %1013 = vmatprep.subr.bf16.mxu0 0
    %1014 = vmatpush1.bf16.msra.mxu0 0
    %1015 = vmatprep.subr.bf16.mxu0 0
    %1016 = vmatpush1.bf16.msra.mxu0 0
    %1017 = vmatprep.subr.bf16.mxu0 0
    %1018 = vmatpush1.bf16.msra.mxu0 0
    %1019 = vmatprep.subr.bf16.mxu0 0
    %1020 = vmatpush1.bf16.msra.mxu0 0
    %1021 = vmatprep.subr.bf16.mxu0 0
    %1022 = vmatpush1.bf16.msra.mxu0 0
    %1023 = vmatprep.subr.bf16.mxu0 0
    %1024 = vmatpush1.bf16.msra.mxu0 0
    %1025 = vmatprep.subr.bf16.mxu0 0
    %1026 = vmatpush1.bf16.msra.mxu0 0
    %1027 = vmatprep.subr.bf16.mxu0 0
    %1028 = vmatpush1.bf16.msra.mxu0 0
    %1029 = vmatprep.subr.bf16.mxu0 0
    %1030 = vmatpush1.bf16.msra.mxu0 0
    %1031 = vmatprep.subr.bf16.mxu0 0
    %1032 = vmatpush1.bf16.msra.mxu0 0
    %1033 = vmatprep.subr.bf16.mxu0 0
    %1034 = vmatpush1.bf16.msra.mxu0 0
    %1035 = vmatprep.subr.bf16.mxu0 0
    %1036 = vmatpush1.bf16.msra.mxu0 0
    %1037 = vmatprep.subr.bf16.mxu0 0
    %1038 = vmatpush1.bf16.msra.mxu0 0
    %1039 = vmatprep.subr.bf16.mxu0 0
    %1040 = vmatpush1.bf16.msra.mxu0 0
    %1041 = vmatprep.mubr.bf16.mxu0 0
    %1042 = vmatmul.mubr.bf16.gmra.mrb[0].mxu0 %v163
    %v1043 = vpop.f32.mrb[0].mxu0
    %v1044 = vadd.f32 0.0, %v1043
    %v1045 = vpop.f32.mrb[0].mxu0
    %v1046 = vpop.f32.mrb[0].mxu0
    %v1047 = vadd.f32 0.0, %v1046
    %v1048 = vpop.f32.mrb[0].mxu0
    %1049 = vdwg.mxu0
    %v1054 = vunpack.c.l.b16 %v122
    %v1055 = vunpack.c.l.b16 %v123
    %v1056 = vunpack.c.l.b16 %v124
    %v1057 = vunpack.c.l.b16 %v125
    %v1058 = vpack.c.b16 %v1055, %v1054
    %v1059 = vpack.c.b16 %v1057, %v1056
    %1062 = vmatprep.subr.bf16.mxu0 0
    %1063 = vmatpush1.bf16.msra.mxu0 %v1058
    %1064 = vmatprep.subr.bf16.mxu0 0
    %1065 = vmatpush1.bf16.msra.mxu0 %v1059
    %1066 = vmatprep.subr.bf16.mxu0 0
    %1067 = vmatpush1.bf16.msra.mxu0 0
    %1068 = vmatprep.subr.bf16.mxu0 0
    %1069 = vmatpush1.bf16.msra.mxu0 0
    %1070 = vmatprep.subr.bf16.mxu0 0
    %1071 = vmatpush1.bf16.msra.mxu0 0
    %1072 = vmatprep.subr.bf16.mxu0 0
    %1073 = vmatpush1.bf16.msra.mxu0 0
    %1074 = vmatprep.subr.bf16.mxu0 0
    %1075 = vmatpush1.bf16.msra.mxu0 0
    %1076 = vmatprep.subr.bf16.mxu0 0
    %1077 = vmatpush1.bf16.msra.mxu0 0
    %1078 = vmatprep.subr.bf16.mxu0 0
    %1079 = vmatpush1.bf16.msra.mxu0 0
    %1080 = vmatprep.subr.bf16.mxu0 0
    %1081 = vmatpush1.bf16.msra.mxu0 0
    %1082 = vmatprep.subr.bf16.mxu0 0
    %1083 = vmatpush1.bf16.msra.mxu0 0
    %1084 = vmatprep.subr.bf16.mxu0 0
    %1085 = vmatpush1.bf16.msra.mxu0 0
    %1086 = vmatprep.subr.bf16.mxu0 0
    %1087 = vmatpush1.bf16.msra.mxu0 0
    %1088 = vmatprep.subr.bf16.mxu0 0
    %1089 = vmatpush1.bf16.msra.mxu0 0
    %1090 = vmatprep.subr.bf16.mxu0 0
    %1091 = vmatpush1.bf16.msra.mxu0 0
    %1092 = vmatprep.subr.bf16.mxu0 0
    %1093 = vmatpush1.bf16.msra.mxu0 0
    %1094 = vmatprep.mubr.bf16.mxu0 0
    %1095 = vmatmul.mubr.bf16.gmra.mrb[0].mxu0 %v163
    %v1096 = vpop.f32.mrb[0].mxu0
    %v1097 = vadd.f32 0.0, %v1096
    %v1098 = vpop.f32.mrb[0].mxu0
    %v1099 = vpop.f32.mrb[0].mxu0
    %v1100 = vadd.f32 0.0, %v1099
    %v1101 = vpop.f32.mrb[0].mxu0
    %1102 = vdwg.mxu0
    %v1107 = vunpack.c.l.b16 %v138
    %v1108 = vunpack.c.l.b16 %v139
    %v1109 = vunpack.c.l.b16 %v140
    %v1110 = vunpack.c.l.b16 %v141
    %v1111 = vpack.c.b16 %v1108, %v1107
    %v1112 = vpack.c.b16 %v1110, %v1109
    %1115 = vmatprep.subr.bf16.mxu0 0
    %1116 = vmatpush1.bf16.msra.mxu0 %v1111
    %1117 = vmatprep.subr.bf16.mxu0 0
    %1118 = vmatpush1.bf16.msra.mxu0 %v1112
    %1119 = vmatprep.subr.bf16.mxu0 0
    %1120 = vmatpush1.bf16.msra.mxu0 0
    %1121 = vmatprep.subr.bf16.mxu0 0
    %1122 = vmatpush1.bf16.msra.mxu0 0
    %1123 = vmatprep.subr.bf16.mxu0 0
    %1124 = vmatpush1.bf16.msra.mxu0 0
    %1125 = vmatprep.subr.bf16.mxu0 0
    %1126 = vmatpush1.bf16.msra.mxu0 0
    %1127 = vmatprep.subr.bf16.mxu0 0
    %1128 = vmatpush1.bf16.msra.mxu0 0
    %1129 = vmatprep.subr.bf16.mxu0 0
    %1130 = vmatpush1.bf16.msra.mxu0 0
    %1131 = vmatprep.subr.bf16.mxu0 0
    %1132 = vmatpush1.bf16.msra.mxu0 0
    %1133 = vmatprep.subr.bf16.mxu0 0
    %1134 = vmatpush1.bf16.msra.mxu0 0
    %1135 = vmatprep.subr.bf16.mxu0 0
    %1136 = vmatpush1.bf16.msra.mxu0 0
    %1137 = vmatprep.subr.bf16.mxu0 0
    %1138 = vmatpush1.bf16.msra.mxu0 0
    %1139 = vmatprep.subr.bf16.mxu0 0
    %1140 = vmatpush1.bf16.msra.mxu0 0
    %1141 = vmatprep.subr.bf16.mxu0 0
    %1142 = vmatpush1.bf16.msra.mxu0 0
    %1143 = vmatprep.subr.bf16.mxu0 0
    %1144 = vmatpush1.bf16.msra.mxu0 0
    %1145 = vmatprep.subr.bf16.mxu0 0
    %1146 = vmatpush1.bf16.msra.mxu0 0
    %1147 = vmatprep.mubr.bf16.mxu0 0
    %1148 = vmatmul.mubr.bf16.gmra.mrb[0].mxu0 %v163
    %v1149 = vpop.f32.mrb[0].mxu0
    %v1150 = vadd.f32 0.0, %v1149
    %v1151 = vpop.f32.mrb[0].mxu0
    %v1152 = vpop.f32.mrb[0].mxu0
    %v1153 = vadd.f32 0.0, %v1152
    %v1154 = vpop.f32.mrb[0].mxu0
    %1155 = vdwg.mxu0
    %v1156 = vpack.c.bf16 %v1044, %v1044
    %v1157 = vpack.c.bf16 %v1047, %v1047
    %v1158 = vpack.c.bf16 %v1097, %v1097
    %v1159 = vpack.c.bf16 %v1100, %v1100
    %v1160 = vpack.c.bf16 %v1150, %v1150
    %v1161 = vpack.c.bf16 %v1153, %v1153
    %v1163 = vsel %vm318, %v1156, 0
    %v1166 = vsel %vm318, %v1158, 0
    %1168 = vmatprep.subr.bf16.mxu0 0
    %1169 = vmatpush1.bf16.xpose.msra.mxu0 %v1166
    %1170 = vmatprep.subr.bf16.mxu0 0
    %1171 = vmatpush1.bf16.xpose.msra.mxu0 0
    %1172 = vmatprep.subr.bf16.mxu0 0
    %1173 = vmatpush1.bf16.xpose.msra.mxu0 0
    %1174 = vmatprep.subr.bf16.mxu0 0
    %1175 = vmatpush1.bf16.xpose.msra.mxu0 0
    %1176 = vmatprep.subr.bf16.mxu0 0
    %1177 = vmatpush1.bf16.xpose.msra.mxu0 0
    %1178 = vmatprep.subr.bf16.mxu0 0
    %1179 = vmatpush1.bf16.xpose.msra.mxu0 0
    %1180 = vmatprep.subr.bf16.mxu0 0
    %1181 = vmatpush1.bf16.xpose.msra.mxu0 0
    %1182 = vmatprep.subr.bf16.mxu0 0
    %1183 = vmatpush1.bf16.xpose.msra.mxu0 0
    %1184 = vmatprep.subr.bf16.mxu0 0
    %1185 = vmatpush1.bf16.xpose.msra.mxu0 0
    %1186 = vmatprep.subr.bf16.mxu0 0
    %1187 = vmatpush1.bf16.xpose.msra.mxu0 0
    %1188 = vmatprep.subr.bf16.mxu0 0
    %1189 = vmatpush1.bf16.xpose.msra.mxu0 0
    %1190 = vmatprep.subr.bf16.mxu0 0
    %1191 = vmatpush1.bf16.xpose.msra.mxu0 0
    %1192 = vmatprep.subr.bf16.mxu0 0
    %1193 = vmatpush1.bf16.xpose.msra.mxu0 0
    %1194 = vmatprep.subr.bf16.mxu0 0
    %1195 = vmatpush1.bf16.xpose.msra.mxu0 0
    %1196 = vmatprep.subr.bf16.mxu0 0
    %1197 = vmatpush1.bf16.xpose.msra.mxu0 0
    %1198 = vmatprep.subr.bf16.mxu0 0
    %1199 = vmatpush1.bf16.xpose.msra.mxu0 0
    %1200 = vmatprep.mubr.bf16.mxu0 0
    %1201 = vmatmul.mubr.bf16.gmra.mrb[0].mxu0 %v1163
    %v1202 = vpop.f32.mrb[0].mxu0
    %v1203 = vadd.f32 0.0, %v1202
    %v1204 = vpop.f32.mrb[0].mxu0
    %v1205 = vpop.f32.mrb[0].mxu0
    %v1206 = vpop.f32.mrb[0].mxu0
    %1207 = vdwg.mxu0
    %v1209 = vsel %vm318, %v1157, 0
    %v1212 = vsel %vm318, %v1159, 0
    %1214 = vmatprep.subr.bf16.mxu0 0
    %1215 = vmatpush1.bf16.xpose.msra.mxu0 %v1212
    %1216 = vmatprep.subr.bf16.mxu0 0
    %1217 = vmatpush1.bf16.xpose.msra.mxu0 0
    %1218 = vmatprep.subr.bf16.mxu0 0
    %1219 = vmatpush1.bf16.xpose.msra.mxu0 0
    %1220 = vmatprep.subr.bf16.mxu0 0
    %1221 = vmatpush1.bf16.xpose.msra.mxu0 0
    %1222 = vmatprep.subr.bf16.mxu0 0
    %1223 = vmatpush1.bf16.xpose.msra.mxu0 0
    %1224 = vmatprep.subr.bf16.mxu0 0
    %1225 = vmatpush1.bf16.xpose.msra.mxu0 0
    %1226 = vmatprep.subr.bf16.mxu0 0
    %1227 = vmatpush1.bf16.xpose.msra.mxu0 0
    %1228 = vmatprep.subr.bf16.mxu0 0
    %1229 = vmatpush1.bf16.xpose.msra.mxu0 0
    %1230 = vmatprep.subr.bf16.mxu0 0
    %1231 = vmatpush1.bf16.xpose.msra.mxu0 0
    %1232 = vmatprep.subr.bf16.mxu0 0
    %1233 = vmatpush1.bf16.xpose.msra.mxu0 0
    %1234 = vmatprep.subr.bf16.mxu0 0
    %1235 = vmatpush1.bf16.xpose.msra.mxu0 0
    %1236 = vmatprep.subr.bf16.mxu0 0
    %1237 = vmatpush1.bf16.xpose.msra.mxu0 0
    %1238 = vmatprep.subr.bf16.mxu0 0
    %1239 = vmatpush1.bf16.xpose.msra.mxu0 0
    %1240 = vmatprep.subr.bf16.mxu0 0
    %1241 = vmatpush1.bf16.xpose.msra.mxu0 0
    %1242 = vmatprep.subr.bf16.mxu0 0
    %1243 = vmatpush1.bf16.xpose.msra.mxu0 0
    %1244 = vmatprep.subr.bf16.mxu0 0
    %1245 = vmatpush1.bf16.xpose.msra.mxu0 0
    %1246 = vmatprep.mubr.bf16.mxu0 0
    %1247 = vmatmul.mubr.bf16.gmra.mrb[0].mxu0 %v1209
    %v1248 = vpop.f32.mrb[0].mxu0
    %v1249 = vadd.f32 0.0, %v1248
    %v1250 = vpop.f32.mrb[0].mxu0
    %v1251 = vpop.f32.mrb[0].mxu0
    %v1252 = vpop.f32.mrb[0].mxu0
    %1253 = vdwg.mxu0
    %v1254 = vsel %vm318, %v1203, -inf
    %1255 = vmax.xlane.f32.xlu0 %v1254
    %v1256 = vpop.xlane.xlu0 %1255
    %v1257 = vsel %vm318, %v1249, -inf
    %1258 = vmax.xlane.f32.xlu0 %v1257
    %v1259 = vpop.xlane.xlu0 %1258
    %v1260 = vsub.f32 %v1203, %v1256
    %v1261 = vsub.f32 %v1249, %v1259
    %v1262 = vmul.f32 %v1260, 1.442695
    %v1263 = vpow.pop %v1262
    %v1264 = vmul.f32 %v1261, 1.442695
    %v1265 = vpow.pop %v1264
    %v1266 = vsel %vm318, %v1263, 0.0
    %1267 = vadd.xlane.f32.xlu0 %v1266
    %v1268 = vpop.xlane.xlu0 %1267
    %v1269 = vsel %vm318, %v1265, 0.0
    %1270 = vadd.xlane.f32.xlu0 %v1269
    %v1271 = vpop.xlane.xlu0 %1270
    %v1272 = vrcp.pop %v1268
    %v1273 = vrcp.pop %v1271
    %v1274 = vmul.f32 %v1263, %v1272
    %v1275 = vmul.f32 %v1265, %v1273
    %v1276 = vpack.c.bf16 %v1274, %v1274
    %v1277 = vpack.c.bf16 %v1275, %v1275
    %v1279 = vsel %vm318, %v1276, 0
    %v1282 = vsel %vm438, %v1160, 0
    %1284 = vmatprep.subr.bf16.mxu0 0
    %1285 = vmatpush1.bf16.msra.mxu0 %v1282
    %1286 = vmatprep.subr.bf16.mxu0 0
    %1287 = vmatpush1.bf16.msra.mxu0 0
    %1288 = vmatprep.subr.bf16.mxu0 0
    %1289 = vmatpush1.bf16.msra.mxu0 0
    %1290 = vmatprep.subr.bf16.mxu0 0
    %1291 = vmatpush1.bf16.msra.mxu0 0
    %1292 = vmatprep.subr.bf16.mxu0 0
    %1293 = vmatpush1.bf16.msra.mxu0 0
    %1294 = vmatprep.subr.bf16.mxu0 0
    %1295 = vmatpush1.bf16.msra.mxu0 0
    %1296 = vmatprep.subr.bf16.mxu0 0
    %1297 = vmatpush1.bf16.msra.mxu0 0
    %1298 = vmatprep.subr.bf16.mxu0 0
    %1299 = vmatpush1.bf16.msra.mxu0 0
    %1300 = vmatprep.subr.bf16.mxu0 0
    %1301 = vmatpush1.bf16.msra.mxu0 0
    %1302 = vmatprep.subr.bf16.mxu0 0
    %1303 = vmatpush1.bf16.msra.mxu0 0
    %1304 = vmatprep.subr.bf16.mxu0 0
    %1305 = vmatpush1.bf16.msra.mxu0 0
    %1306 = vmatprep.subr.bf16.mxu0 0
    %1307 = vmatpush1.bf16.msra.mxu0 0
    %1308 = vmatprep.subr.bf16.mxu0 0
    %1309 = vmatpush1.bf16.msra.mxu0 0
    %1310 = vmatprep.subr.bf16.mxu0 0
    %1311 = vmatpush1.bf16.msra.mxu0 0
    %1312 = vmatprep.subr.bf16.mxu0 0
    %1313 = vmatpush1.bf16.msra.mxu0 0
    %1314 = vmatprep.subr.bf16.mxu0 0
    %1315 = vmatpush1.bf16.msra.mxu0 0
    %1316 = vmatprep.mubr.bf16.mxu0 0
    %1317 = vmatmul.mubr.bf16.gmra.mrb[0].mxu0 %v1279
    %v1318 = vpop.f32.mrb[0].mxu0
    %v1319 = vadd.f32 0.0, %v1318
    %v1320 = vpop.f32.mrb[0].mxu0
    %v1321 = vpop.f32.mrb[0].mxu0
    %v1322 = vpop.f32.mrb[0].mxu0
    %1323 = vdwg.mxu0
    %v1325 = vsel %vm318, %v1277, 0
    %v1328 = vsel %vm438, %v1161, 0
    %1330 = vmatprep.subr.bf16.mxu0 0
    %1331 = vmatpush1.bf16.msra.mxu0 %v1328
    %1332 = vmatprep.subr.bf16.mxu0 0
    %1333 = vmatpush1.bf16.msra.mxu0 0
    %1334 = vmatprep.subr.bf16.mxu0 0
    %1335 = vmatpush1.bf16.msra.mxu0 0
    %1336 = vmatprep.subr.bf16.mxu0 0
    %1337 = vmatpush1.bf16.msra.mxu0 0
    %1338 = vmatprep.subr.bf16.mxu0 0
    %1339 = vmatpush1.bf16.msra.mxu0 0
    %1340 = vmatprep.subr.bf16.mxu0 0
    %1341 = vmatpush1.bf16.msra.mxu0 0
    %1342 = vmatprep.subr.bf16.mxu0 0
    %1343 = vmatpush1.bf16.msra.mxu0 0
    %1344 = vmatprep.subr.bf16.mxu0 0
    %1345 = vmatpush1.bf16.msra.mxu0 0
    %1346 = vmatprep.subr.bf16.mxu0 0
    %1347 = vmatpush1.bf16.msra.mxu0 0
    %1348 = vmatprep.subr.bf16.mxu0 0
    %1349 = vmatpush1.bf16.msra.mxu0 0
    %1350 = vmatprep.subr.bf16.mxu0 0
    %1351 = vmatpush1.bf16.msra.mxu0 0
    %1352 = vmatprep.subr.bf16.mxu0 0
    %1353 = vmatpush1.bf16.msra.mxu0 0
    %1354 = vmatprep.subr.bf16.mxu0 0
    %1355 = vmatpush1.bf16.msra.mxu0 0
    %1356 = vmatprep.subr.bf16.mxu0 0
    %1357 = vmatpush1.bf16.msra.mxu0 0
    %1358 = vmatprep.subr.bf16.mxu0 0
    %1359 = vmatpush1.bf16.msra.mxu0 0
    %1360 = vmatprep.subr.bf16.mxu0 0
    %1361 = vmatpush1.bf16.msra.mxu0 0
    %1362 = vmatprep.mubr.bf16.mxu0 0
    %1363 = vmatmul.mubr.bf16.gmra.mrb[0].mxu0 %v1325
    %v1364 = vpop.f32.mrb[0].mxu0
    %v1365 = vadd.f32 0.0, %v1364
    %v1366 = vpop.f32.mrb[0].mxu0
    %v1367 = vpop.f32.mrb[0].mxu0
    %v1368 = vpop.f32.mrb[0].mxu0
    %1369 = vdwg.mxu0
    %v1370 = vpack.c.bf16 %v1365, %v1319
    %v1372 = vsel %vm318, %v1370, 0
    %v1375 = vsel %vm438, %v148, 0
    %1377 = vmatprep.subr.bf16.mxu0 0
    %1378 = vmatpush1.bf16.msra.mxu0 %v1375
    %1379 = vmatprep.subr.bf16.mxu0 0
    %1380 = vmatpush1.bf16.msra.mxu0 0
    %1381 = vmatprep.subr.bf16.mxu0 0
    %1382 = vmatpush1.bf16.msra.mxu0 0
    %1383 = vmatprep.subr.bf16.mxu0 0
    %1384 = vmatpush1.bf16.msra.mxu0 0
    %1385 = vmatprep.subr.bf16.mxu0 0
    %1386 = vmatpush1.bf16.msra.mxu0 0
    %1387 = vmatprep.subr.bf16.mxu0 0
    %1388 = vmatpush1.bf16.msra.mxu0 0
    %1389 = vmatprep.subr.bf16.mxu0 0
    %1390 = vmatpush1.bf16.msra.mxu0 0
    %1391 = vmatprep.subr.bf16.mxu0 0
    %1392 = vmatpush1.bf16.msra.mxu0 0
    %1393 = vmatprep.subr.bf16.mxu0 0
    %1394 = vmatpush1.bf16.msra.mxu0 0
    %1395 = vmatprep.subr.bf16.mxu0 0
    %1396 = vmatpush1.bf16.msra.mxu0 0
    %1397 = vmatprep.subr.bf16.mxu0 0
    %1398 = vmatpush1.bf16.msra.mxu0 0
    %1399 = vmatprep.subr.bf16.mxu0 0
    %1400 = vmatpush1.bf16.msra.mxu0 0
    %1401 = vmatprep.subr.bf16.mxu0 0
    %1402 = vmatpush1.bf16.msra.mxu0 0
    %1403 = vmatprep.subr.bf16.mxu0 0
    %1404 = vmatpush1.bf16.msra.mxu0 0
    %1405 = vmatprep.subr.bf16.mxu0 0
    %1406 = vmatpush1.bf16.msra.mxu0 0
    %1407 = vmatprep.subr.bf16.mxu0 0
    %1408 = vmatpush1.bf16.msra.mxu0 0
    %1409 = vmatprep.mubr.bf16.mxu0 0
    %1410 = vmatmul.mubr.bf16.gmra.mrb[0].mxu0 %v1372
    %v1411 = vpop.f32.mrb[0].mxu0
    %v1412 = vadd.f32 0.0, %v1411
    %v1413 = vpop.f32.mrb[0].mxu0
    %v1414 = vpop.f32.mrb[0].mxu0
    %v1415 = vadd.f32 0.0, %v1414
    %v1416 = vpop.f32.mrb[0].mxu0
    %1417 = vdwg.mxu0
    %v1418 = vadd.f32 %v991, %v1412
    %v1419 = vadd.f32 %v994, %v1415
    %v1424 = vunpack.c.l.b16 %v110
    %v1425 = vunpack.c.l.b16 %v111
    %v1426 = vunpack.c.l.b16 %v112
    %v1427 = vunpack.c.l.b16 %v113
    %v1428 = vpack.c.b16 %v1425, %v1424
    %v1429 = vpack.c.b16 %v1427, %v1426
    %1432 = vmatprep.subr.bf16.mxu0 0
    %1433 = vmatpush1.bf16.msra.mxu0 %v1428
    %1434 = vmatprep.subr.bf16.mxu0 0
    %1435 = vmatpush1.bf16.msra.mxu0 %v1429
    %1436 = vmatprep.subr.bf16.mxu0 0
    %1437 = vmatpush1.bf16.msra.mxu0 0
    %1438 = vmatprep.subr.bf16.mxu0 0
    %1439 = vmatpush1.bf16.msra.mxu0 0
    %1440 = vmatprep.subr.bf16.mxu0 0
    %1441 = vmatpush1.bf16.msra.mxu0 0
    %1442 = vmatprep.subr.bf16.mxu0 0
    %1443 = vmatpush1.bf16.msra.mxu0 0
    %1444 = vmatprep.subr.bf16.mxu0 0
    %1445 = vmatpush1.bf16.msra.mxu0 0
    %1446 = vmatprep.subr.bf16.mxu0 0
    %1447 = vmatpush1.bf16.msra.mxu0 0
    %1448 = vmatprep.subr.bf16.mxu0 0
    %1449 = vmatpush1.bf16.msra.mxu0 0
    %1450 = vmatprep.subr.bf16.mxu0 0
    %1451 = vmatpush1.bf16.msra.mxu0 0
    %1452 = vmatprep.subr.bf16.mxu0 0
    %1453 = vmatpush1.bf16.msra.mxu0 0
    %1454 = vmatprep.subr.bf16.mxu0 0
    %1455 = vmatpush1.bf16.msra.mxu0 0
    %1456 = vmatprep.subr.bf16.mxu0 0
    %1457 = vmatpush1.bf16.msra.mxu0 0
    %1458 = vmatprep.subr.bf16.mxu0 0
    %1459 = vmatpush1.bf16.msra.mxu0 0
    %1460 = vmatprep.subr.bf16.mxu0 0
    %1461 = vmatpush1.bf16.msra.mxu0 0
    %1462 = vmatprep.subr.bf16.mxu0 0
    %1463 = vmatpush1.bf16.msra.mxu0 0
    %1464 = vmatprep.mubr.bf16.mxu0 0
    %1465 = vmatmul.mubr.bf16.gmra.mrb[0].mxu0 %v163
    %v1466 = vpop.f32.mrb[0].mxu0
    %v1467 = vadd.f32 0.0, %v1466
    %v1468 = vpop.f32.mrb[0].mxu0
    %v1469 = vpop.f32.mrb[0].mxu0
    %v1470 = vadd.f32 0.0, %v1469
    %v1471 = vpop.f32.mrb[0].mxu0
    %1472 = vdwg.mxu0
    %v1477 = vunpack.c.l.b16 %v126
    %v1478 = vunpack.c.l.b16 %v127
    %v1479 = vunpack.c.l.b16 %v128
    %v1480 = vunpack.c.l.b16 %v129
    %v1481 = vpack.c.b16 %v1478, %v1477
    %v1482 = vpack.c.b16 %v1480, %v1479
    %1485 = vmatprep.subr.bf16.mxu0 0
    %1486 = vmatpush1.bf16.msra.mxu0 %v1481
    %1487 = vmatprep.subr.bf16.mxu0 0
    %1488 = vmatpush1.bf16.msra.mxu0 %v1482
    %1489 = vmatprep.subr.bf16.mxu0 0
    %1490 = vmatpush1.bf16.msra.mxu0 0
    %1491 = vmatprep.subr.bf16.mxu0 0
    %1492 = vmatpush1.bf16.msra.mxu0 0
    %1493 = vmatprep.subr.bf16.mxu0 0
    %1494 = vmatpush1.bf16.msra.mxu0 0
    %1495 = vmatprep.subr.bf16.mxu0 0
    %1496 = vmatpush1.bf16.msra.mxu0 0
    %1497 = vmatprep.subr.bf16.mxu0 0
    %1498 = vmatpush1.bf16.msra.mxu0 0
    %1499 = vmatprep.subr.bf16.mxu0 0
    %1500 = vmatpush1.bf16.msra.mxu0 0
    %1501 = vmatprep.subr.bf16.mxu0 0
    %1502 = vmatpush1.bf16.msra.mxu0 0
    %1503 = vmatprep.subr.bf16.mxu0 0
    %1504 = vmatpush1.bf16.msra.mxu0 0
    %1505 = vmatprep.subr.bf16.mxu0 0
    %1506 = vmatpush1.bf16.msra.mxu0 0
    %1507 = vmatprep.subr.bf16.mxu0 0
    %1508 = vmatpush1.bf16.msra.mxu0 0
    %1509 = vmatprep.subr.bf16.mxu0 0
    %1510 = vmatpush1.bf16.msra.mxu0 0
    %1511 = vmatprep.subr.bf16.mxu0 0
    %1512 = vmatpush1.bf16.msra.mxu0 0
    %1513 = vmatprep.subr.bf16.mxu0 0
    %1514 = vmatpush1.bf16.msra.mxu0 0
    %1515 = vmatprep.subr.bf16.mxu0 0
    %1516 = vmatpush1.bf16.msra.mxu0 0
    %1517 = vmatprep.mubr.bf16.mxu0 0
    %1518 = vmatmul.mubr.bf16.gmra.mrb[0].mxu0 %v163
    %v1519 = vpop.f32.mrb[0].mxu0
    %v1520 = vadd.f32 0.0, %v1519
    %v1521 = vpop.f32.mrb[0].mxu0
    %v1522 = vpop.f32.mrb[0].mxu0
    %v1523 = vadd.f32 0.0, %v1522
    %v1524 = vpop.f32.mrb[0].mxu0
    %1525 = vdwg.mxu0
    %v1530 = vunpack.c.l.b16 %v142
    %v1531 = vunpack.c.l.b16 %v143
    %v1532 = vunpack.c.l.b16 %v144
    %v1533 = vunpack.c.l.b16 %v145
    %v1534 = vpack.c.b16 %v1531, %v1530
    %v1535 = vpack.c.b16 %v1533, %v1532
    %1538 = vmatprep.subr.bf16.mxu0 0
    %1539 = vmatpush1.bf16.msra.mxu0 %v1534
    %1540 = vmatprep.subr.bf16.mxu0 0
    %1541 = vmatpush1.bf16.msra.mxu0 %v1535
    %1542 = vmatprep.subr.bf16.mxu0 0
    %1543 = vmatpush1.bf16.msra.mxu0 0
    %1544 = vmatprep.subr.bf16.mxu0 0
    %1545 = vmatpush1.bf16.msra.mxu0 0
    %1546 = vmatprep.subr.bf16.mxu0 0
    %1547 = vmatpush1.bf16.msra.mxu0 0
    %1548 = vmatprep.subr.bf16.mxu0 0
    %1549 = vmatpush1.bf16.msra.mxu0 0
    %1550 = vmatprep.subr.bf16.mxu0 0
    %1551 = vmatpush1.bf16.msra.mxu0 0
    %1552 = vmatprep.subr.bf16.mxu0 0
    %1553 = vmatpush1.bf16.msra.mxu0 0
    %1554 = vmatprep.subr.bf16.mxu0 0
    %1555 = vmatpush1.bf16.msra.mxu0 0
    %1556 = vmatprep.subr.bf16.mxu0 0
    %1557 = vmatpush1.bf16.msra.mxu0 0
    %1558 = vmatprep.subr.bf16.mxu0 0
    %1559 = vmatpush1.bf16.msra.mxu0 0
    %1560 = vmatprep.subr.bf16.mxu0 0
    %1561 = vmatpush1.bf16.msra.mxu0 0
    %1562 = vmatprep.subr.bf16.mxu0 0
    %1563 = vmatpush1.bf16.msra.mxu0 0
    %1564 = vmatprep.subr.bf16.mxu0 0
    %1565 = vmatpush1.bf16.msra.mxu0 0
    %1566 = vmatprep.subr.bf16.mxu0 0
    %1567 = vmatpush1.bf16.msra.mxu0 0
    %1568 = vmatprep.subr.bf16.mxu0 0
    %1569 = vmatpush1.bf16.msra.mxu0 0
    %1570 = vmatprep.mubr.bf16.mxu0 0
    %1571 = vmatmul.mubr.bf16.gmra.mrb[0].mxu0 %v163
    %v1572 = vpop.f32.mrb[0].mxu0
    %v1573 = vadd.f32 0.0, %v1572
    %v1574 = vpop.f32.mrb[0].mxu0
    %v1575 = vpop.f32.mrb[0].mxu0
    %v1576 = vadd.f32 0.0, %v1575
    %v1577 = vpop.f32.mrb[0].mxu0
    %1578 = vdwg.mxu0
    %v1579 = vpack.c.bf16 %v1467, %v1467
    %v1580 = vpack.c.bf16 %v1470, %v1470
    %v1581 = vpack.c.bf16 %v1520, %v1520
    %v1582 = vpack.c.bf16 %v1523, %v1523
    %v1583 = vpack.c.bf16 %v1573, %v1573
    %v1584 = vpack.c.bf16 %v1576, %v1576
    %v1586 = vsel %vm318, %v1579, 0
    %v1589 = vsel %vm318, %v1581, 0
    %1591 = vmatprep.subr.bf16.mxu0 0
    %1592 = vmatpush1.bf16.xpose.msra.mxu0 %v1589
    %1593 = vmatprep.subr.bf16.mxu0 0
    %1594 = vmatpush1.bf16.xpose.msra.mxu0 0
    %1595 = vmatprep.subr.bf16.mxu0 0
    %1596 = vmatpush1.bf16.xpose.msra.mxu0 0
    %1597 = vmatprep.subr.bf16.mxu0 0
    %1598 = vmatpush1.bf16.xpose.msra.mxu0 0
    %1599 = vmatprep.subr.bf16.mxu0 0
    %1600 = vmatpush1.bf16.xpose.msra.mxu0 0
    %1601 = vmatprep.subr.bf16.mxu0 0
    %1602 = vmatpush1.bf16.xpose.msra.mxu0 0
    %1603 = vmatprep.subr.bf16.mxu0 0
    %1604 = vmatpush1.bf16.xpose.msra.mxu0 0
    %1605 = vmatprep.subr.bf16.mxu0 0
    %1606 = vmatpush1.bf16.xpose.msra.mxu0 0
    %1607 = vmatprep.subr.bf16.mxu0 0
    %1608 = vmatpush1.bf16.xpose.msra.mxu0 0
    %1609 = vmatprep.subr.bf16.mxu0 0
    %1610 = vmatpush1.bf16.xpose.msra.mxu0 0
    %1611 = vmatprep.subr.bf16.mxu0 0
    %1612 = vmatpush1.bf16.xpose.msra.mxu0 0
    %1613 = vmatprep.subr.bf16.mxu0 0
    %1614 = vmatpush1.bf16.xpose.msra.mxu0 0
    %1615 = vmatprep.subr.bf16.mxu0 0
    %1616 = vmatpush1.bf16.xpose.msra.mxu0 0
    %1617 = vmatprep.subr.bf16.mxu0 0
    %1618 = vmatpush1.bf16.xpose.msra.mxu0 0
    %1619 = vmatprep.subr.bf16.mxu0 0
    %1620 = vmatpush1.bf16.xpose.msra.mxu0 0
    %1621 = vmatprep.subr.bf16.mxu0 0
    %1622 = vmatpush1.bf16.xpose.msra.mxu0 0
    %1623 = vmatprep.mubr.bf16.mxu0 0
    %1624 = vmatmul.mubr.bf16.gmra.mrb[0].mxu0 %v1586
    %v1625 = vpop.f32.mrb[0].mxu0
    %v1626 = vadd.f32 0.0, %v1625
    %v1627 = vpop.f32.mrb[0].mxu0
    %v1628 = vpop.f32.mrb[0].mxu0
    %v1629 = vpop.f32.mrb[0].mxu0
    %1630 = vdwg.mxu0
    %v1632 = vsel %vm318, %v1580, 0
    %v1635 = vsel %vm318, %v1582, 0
    %1637 = vmatprep.subr.bf16.mxu0 0
    %1638 = vmatpush1.bf16.xpose.msra.mxu0 %v1635
    %1639 = vmatprep.subr.bf16.mxu0 0
    %1640 = vmatpush1.bf16.xpose.msra.mxu0 0
    %1641 = vmatprep.subr.bf16.mxu0 0
    %1642 = vmatpush1.bf16.xpose.msra.mxu0 0
    %1643 = vmatprep.subr.bf16.mxu0 0
    %1644 = vmatpush1.bf16.xpose.msra.mxu0 0
    %1645 = vmatprep.subr.bf16.mxu0 0
    %1646 = vmatpush1.bf16.xpose.msra.mxu0 0
    %1647 = vmatprep.subr.bf16.mxu0 0
    %1648 = vmatpush1.bf16.xpose.msra.mxu0 0
    %1649 = vmatprep.subr.bf16.mxu0 0
    %1650 = vmatpush1.bf16.xpose.msra.mxu0 0
    %1651 = vmatprep.subr.bf16.mxu0 0
    %1652 = vmatpush1.bf16.xpose.msra.mxu0 0
    %1653 = vmatprep.subr.bf16.mxu0 0
    %1654 = vmatpush1.bf16.xpose.msra.mxu0 0
    %1655 = vmatprep.subr.bf16.mxu0 0
    %1656 = vmatpush1.bf16.xpose.msra.mxu0 0
    %1657 = vmatprep.subr.bf16.mxu0 0
    %1658 = vmatpush1.bf16.xpose.msra.mxu0 0
    %1659 = vmatprep.subr.bf16.mxu0 0
    %1660 = vmatpush1.bf16.xpose.msra.mxu0 0
    %1661 = vmatprep.subr.bf16.mxu0 0
    %1662 = vmatpush1.bf16.xpose.msra.mxu0 0
    %1663 = vmatprep.subr.bf16.mxu0 0
    %1664 = vmatpush1.bf16.xpose.msra.mxu0 0
    %1665 = vmatprep.subr.bf16.mxu0 0
    %1666 = vmatpush1.bf16.xpose.msra.mxu0 0
    %1667 = vmatprep.subr.bf16.mxu0 0
    %1668 = vmatpush1.bf16.xpose.msra.mxu0 0
    %1669 = vmatprep.mubr.bf16.mxu0 0
    %1670 = vmatmul.mubr.bf16.gmra.mrb[0].mxu0 %v1632
    %v1671 = vpop.f32.mrb[0].mxu0
    %v1672 = vadd.f32 0.0, %v1671
    %v1673 = vpop.f32.mrb[0].mxu0
    %v1674 = vpop.f32.mrb[0].mxu0
    %v1675 = vpop.f32.mrb[0].mxu0
    %1676 = vdwg.mxu0
    %v1677 = vsel %vm318, %v1626, -inf
    %1678 = vmax.xlane.f32.xlu0 %v1677
    %v1679 = vpop.xlane.xlu0 %1678
    %v1680 = vsel %vm318, %v1672, -inf
    %1681 = vmax.xlane.f32.xlu0 %v1680
    %v1682 = vpop.xlane.xlu0 %1681
    %v1683 = vsub.f32 %v1626, %v1679
    %v1684 = vsub.f32 %v1672, %v1682
    %v1685 = vmul.f32 %v1683, 1.442695
    %v1686 = vpow.pop %v1685
    %v1687 = vmul.f32 %v1684, 1.442695
    %v1688 = vpow.pop %v1687
    %v1689 = vsel %vm318, %v1686, 0.0
    %1690 = vadd.xlane.f32.xlu0 %v1689
    %v1691 = vpop.xlane.xlu0 %1690
    %v1692 = vsel %vm318, %v1688, 0.0
    %1693 = vadd.xlane.f32.xlu0 %v1692
    %v1694 = vpop.xlane.xlu0 %1693
    %v1695 = vrcp.pop %v1691
    %v1696 = vrcp.pop %v1694
    %v1697 = vmul.f32 %v1686, %v1695
    %v1698 = vmul.f32 %v1688, %v1696
    %v1699 = vpack.c.bf16 %v1697, %v1697
    %v1700 = vpack.c.bf16 %v1698, %v1698
    %v1702 = vsel %vm318, %v1699, 0
    %v1705 = vsel %vm438, %v1583, 0
    %1707 = vmatprep.subr.bf16.mxu0 0
    %1708 = vmatpush1.bf16.msra.mxu0 %v1705
    %1709 = vmatprep.subr.bf16.mxu0 0
    %1710 = vmatpush1.bf16.msra.mxu0 0
    %1711 = vmatprep.subr.bf16.mxu0 0
    %1712 = vmatpush1.bf16.msra.mxu0 0
    %1713 = vmatprep.subr.bf16.mxu0 0
    %1714 = vmatpush1.bf16.msra.mxu0 0
    %1715 = vmatprep.subr.bf16.mxu0 0
    %1716 = vmatpush1.bf16.msra.mxu0 0
    %1717 = vmatprep.subr.bf16.mxu0 0
    %1718 = vmatpush1.bf16.msra.mxu0 0
    %1719 = vmatprep.subr.bf16.mxu0 0
    %1720 = vmatpush1.bf16.msra.mxu0 0
    %1721 = vmatprep.subr.bf16.mxu0 0
    %1722 = vmatpush1.bf16.msra.mxu0 0
    %1723 = vmatprep.subr.bf16.mxu0 0
    %1724 = vmatpush1.bf16.msra.mxu0 0
    %1725 = vmatprep.subr.bf16.mxu0 0
    %1726 = vmatpush1.bf16.msra.mxu0 0
    %1727 = vmatprep.subr.bf16.mxu0 0
    %1728 = vmatpush1.bf16.msra.mxu0 0
    %1729 = vmatprep.subr.bf16.mxu0 0
    %1730 = vmatpush1.bf16.msra.mxu0 0
    %1731 = vmatprep.subr.bf16.mxu0 0
    %1732 = vmatpush1.bf16.msra.mxu0 0
    %1733 = vmatprep.subr.bf16.mxu0 0
    %1734 = vmatpush1.bf16.msra.mxu0 0
    %1735 = vmatprep.subr.bf16.mxu0 0
    %1736 = vmatpush1.bf16.msra.mxu0 0
    %1737 = vmatprep.subr.bf16.mxu0 0
    %1738 = vmatpush1.bf16.msra.mxu0 0
    %1739 = vmatprep.mubr.bf16.mxu0 0
    %1740 = vmatmul.mubr.bf16.gmra.mrb[0].mxu0 %v1702
    %v1741 = vpop.f32.mrb[0].mxu0
    %v1742 = vadd.f32 0.0, %v1741
    %v1743 = vpop.f32.mrb[0].mxu0
    %v1744 = vpop.f32.mrb[0].mxu0
    %v1745 = vpop.f32.mrb[0].mxu0
    %1746 = vdwg.mxu0
    %v1748 = vsel %vm318, %v1700, 0
    %v1751 = vsel %vm438, %v1584, 0
    %1753 = vmatprep.subr.bf16.mxu0 0
    %1754 = vmatpush1.bf16.msra.mxu0 %v1751
    %1755 = vmatprep.subr.bf16.mxu0 0
    %1756 = vmatpush1.bf16.msra.mxu0 0
    %1757 = vmatprep.subr.bf16.mxu0 0
    %1758 = vmatpush1.bf16.msra.mxu0 0
    %1759 = vmatprep.subr.bf16.mxu0 0
    %1760 = vmatpush1.bf16.msra.mxu0 0
    %1761 = vmatprep.subr.bf16.mxu0 0
    %1762 = vmatpush1.bf16.msra.mxu0 0
    %1763 = vmatprep.subr.bf16.mxu0 0
    %1764 = vmatpush1.bf16.msra.mxu0 0
    %1765 = vmatprep.subr.bf16.mxu0 0
    %1766 = vmatpush1.bf16.msra.mxu0 0
    %1767 = vmatprep.subr.bf16.mxu0 0
    %1768 = vmatpush1.bf16.msra.mxu0 0
    %1769 = vmatprep.subr.bf16.mxu0 0
    %1770 = vmatpush1.bf16.msra.mxu0 0
    %1771 = vmatprep.subr.bf16.mxu0 0
    %1772 = vmatpush1.bf16.msra.mxu0 0
    %1773 = vmatprep.subr.bf16.mxu0 0
    %1774 = vmatpush1.bf16.msra.mxu0 0
    %1775 = vmatprep.subr.bf16.mxu0 0
    %1776 = vmatpush1.bf16.msra.mxu0 0
    %1777 = vmatprep.subr.bf16.mxu0 0
    %1778 = vmatpush1.bf16.msra.mxu0 0
    %1779 = vmatprep.subr.bf16.mxu0 0
    %1780 = vmatpush1.bf16.msra.mxu0 0
    %1781 = vmatprep.subr.bf16.mxu0 0
    %1782 = vmatpush1.bf16.msra.mxu0 0
    %1783 = vmatprep.subr.bf16.mxu0 0
    %1784 = vmatpush1.bf16.msra.mxu0 0
    %1785 = vmatprep.mubr.bf16.mxu0 0
    %1786 = vmatmul.mubr.bf16.gmra.mrb[0].mxu0 %v1748
    %v1787 = vpop.f32.mrb[0].mxu0
    %v1788 = vadd.f32 0.0, %v1787
    %v1789 = vpop.f32.mrb[0].mxu0
    %v1790 = vpop.f32.mrb[0].mxu0
    %v1791 = vpop.f32.mrb[0].mxu0
    %1792 = vdwg.mxu0
    %v1793 = vpack.c.bf16 %v1788, %v1742
    %v1795 = vsel %vm318, %v1793, 0
    %v1798 = vsel %vm438, %v149, 0
    %1800 = vmatprep.subr.bf16.mxu0 0
    %1801 = vmatpush1.bf16.msra.mxu0 %v1798
    %1802 = vmatprep.subr.bf16.mxu0 0
    %1803 = vmatpush1.bf16.msra.mxu0 0
    %1804 = vmatprep.subr.bf16.mxu0 0
    %1805 = vmatpush1.bf16.msra.mxu0 0
    %1806 = vmatprep.subr.bf16.mxu0 0
    %1807 = vmatpush1.bf16.msra.mxu0 0
    %1808 = vmatprep.subr.bf16.mxu0 0
    %1809 = vmatpush1.bf16.msra.mxu0 0
    %1810 = vmatprep.subr.bf16.mxu0 0
    %1811 = vmatpush1.bf16.msra.mxu0 0
    %1812 = vmatprep.subr.bf16.mxu0 0
    %1813 = vmatpush1.bf16.msra.mxu0 0
    %1814 = vmatprep.subr.bf16.mxu0 0
    %1815 = vmatpush1.bf16.msra.mxu0 0
    %1816 = vmatprep.subr.bf16.mxu0 0
    %1817 = vmatpush1.bf16.msra.mxu0 0
    %1818 = vmatprep.subr.bf16.mxu0 0
    %1819 = vmatpush1.bf16.msra.mxu0 0
    %1820 = vmatprep.subr.bf16.mxu0 0
    %1821 = vmatpush1.bf16.msra.mxu0 0
    %1822 = vmatprep.subr.bf16.mxu0 0
    %1823 = vmatpush1.bf16.msra.mxu0 0
    %1824 = vmatprep.subr.bf16.mxu0 0
    %1825 = vmatpush1.bf16.msra.mxu0 0
    %1826 = vmatprep.subr.bf16.mxu0 0
    %1827 = vmatpush1.bf16.msra.mxu0 0
    %1828 = vmatprep.subr.bf16.mxu0 0
    %1829 = vmatpush1.bf16.msra.mxu0 0
    %1830 = vmatprep.subr.bf16.mxu0 0
    %1831 = vmatpush1.bf16.msra.mxu0 0
    %1832 = vmatprep.mubr.bf16.mxu0 0
    %1833 = vmatmul.mubr.bf16.gmra.mrb[0].mxu0 %v1795
    %v1834 = vpop.f32.mrb[0].mxu0
    %v1835 = vadd.f32 0.0, %v1834
    %v1836 = vpop.f32.mrb[0].mxu0
    %v1837 = vpop.f32.mrb[0].mxu0
    %v1838 = vadd.f32 0.0, %v1837
    %v1839 = vpop.f32.mrb[0].mxu0
    %1840 = vdwg.mxu0
    %v1841 = vadd.f32 %v1418, %v1835
    %v1842 = vadd.f32 %v1419, %v1838
    %v1843 = vld [vmem:[%s7] sm:$0x1]
    %v1845 = vlaneseq
    %v1846 = vshrl.u32 %v1845, 7
    %v1847 = vsub.s32 0, %v1846
    %v1848 = vrot.slane %v1843, %v1847
    %v1850 = vadd.f32 %v1841, %v1848
    %v1851 = vadd.f32 %v1842, %v1848
    %v1852 = vadd.f32 %v1850, %v49
    %v1853 = vadd.f32 %v1851, %v50
    %v1854 = vld [vmem:[%s8] sm:$0x1]
    %v1855 = vld [vmem:[%s9] sm:$0x1]
    %v1856 = vsel %vm53, %v1852, 0.0
    %1857 = vadd.xlane.f32.xlu0 %v1856
    %v1858 = vpop.xlane.xlu0 %1857
    %v1859 = vsel %vm53, %v1853, 0.0
    %1860 = vadd.xlane.f32.xlu0 %v1859
    %v1861 = vpop.xlane.xlu0 %1860
    %v1862 = vmul.f32 %v1858, %v60
    %v1863 = vmul.f32 %v1861, %v60
    %v1864 = vsub.f32 %v1852, %v1862
    %v1865 = vsub.f32 %v1853, %v1863
    %v1866 = vmul.f32 %v1864, %v1864
    %v1867 = vmul.f32 %v1865, %v1865
    %v1868 = vsel %vm53, %v1866, 0.0
    %1869 = vadd.xlane.f32.xlu0 %v1868
    %v1870 = vpop.xlane.xlu0 %1869
    %v1871 = vsel %vm53, %v1867, 0.0
    %1872 = vadd.xlane.f32.xlu0 %v1871
    %v1873 = vpop.xlane.xlu0 %1872
    %v1874 = vmul.f32 %v1870, %v60
    %v1875 = vmul.f32 %v1873, %v60
    %v1876 = vadd.f32 %v1874, 1e-05
    %v1877 = vadd.f32 %v1875, 1e-05
    %v1878 = vrsqrt.pop %v1876
    %v1879 = vrsqrt.pop %v1877
    %v1880 = vmul.f32 %v1864, %v1878
    %v1881 = vmul.f32 %v1865, %v1879
    %v1883 = vlaneseq
    %v1884 = vshrl.u32 %v1883, 7
    %v1885 = vsub.s32 0, %v1884
    %v1886 = vrot.slane %v1854, %v1885
    %v1888 = vmul.f32 %v1880, %v1886
    %v1889 = vmul.f32 %v1881, %v1886
    %v1891 = vlaneseq
    %v1892 = vshrl.u32 %v1891, 7
    %v1893 = vsub.s32 0, %v1892
    %v1894 = vrot.slane %v1855, %v1893
    %v1896 = vadd.f32 %v1888, %v1894
    %v1897 = vadd.f32 %v1889, %v1894
    %v1898 = vpack.c.bf16 %v1897, %v1896
    %v1899 = vld [vmem:[%s10] sm:$0xf]
    %v1900 = vld [vmem:[%s10 + $0x4] sm:$0xf]
    %v1901 = vld [vmem:[%s10 + $0x8] sm:$0xf]
    %v1902 = vld [vmem:[%s10 + $0xc] sm:$0xf]
    %v1903 = vld [vmem:[%s11] sm:$0x1]
    %v1905 = vlaneseq
    %v1906 = vshrl.u32 %v1905, 7
    %v1907 = vsub.s32 0, %v1906
    %v1908 = vrot.slane %v1903, %v1907
    %v1914 = vunpack.c.l.b16 %v1899
    %v1915 = vunpack.c.l.b16 %v1900
    %v1916 = vunpack.c.l.b16 %v1901
    %v1917 = vunpack.c.l.b16 %v1902
    %v1918 = vpack.c.b16 %v1915, %v1914
    %v1919 = vpack.c.b16 %v1917, %v1916
    %v1923 = vsel %vm53, %v1898, 0
    %1925 = vmatprep.subr.bf16.mxu0 0
    %1926 = vmatpush1.bf16.msra.mxu0 %v1918
    %1927 = vmatprep.subr.bf16.mxu0 0
    %1928 = vmatpush1.bf16.msra.mxu0 %v1919
    %1929 = vmatprep.subr.bf16.mxu0 0
    %1930 = vmatpush1.bf16.msra.mxu0 0
    %1931 = vmatprep.subr.bf16.mxu0 0
    %1932 = vmatpush1.bf16.msra.mxu0 0
    %1933 = vmatprep.subr.bf16.mxu0 0
    %1934 = vmatpush1.bf16.msra.mxu0 0
    %1935 = vmatprep.subr.bf16.mxu0 0
    %1936 = vmatpush1.bf16.msra.mxu0 0
    %1937 = vmatprep.subr.bf16.mxu0 0
    %1938 = vmatpush1.bf16.msra.mxu0 0
    %1939 = vmatprep.subr.bf16.mxu0 0
    %1940 = vmatpush1.bf16.msra.mxu0 0
    %1941 = vmatprep.subr.bf16.mxu0 0
    %1942 = vmatpush1.bf16.msra.mxu0 0
    %1943 = vmatprep.subr.bf16.mxu0 0
    %1944 = vmatpush1.bf16.msra.mxu0 0
    %1945 = vmatprep.subr.bf16.mxu0 0
    %1946 = vmatpush1.bf16.msra.mxu0 0
    %1947 = vmatprep.subr.bf16.mxu0 0
    %1948 = vmatpush1.bf16.msra.mxu0 0
    %1949 = vmatprep.subr.bf16.mxu0 0
    %1950 = vmatpush1.bf16.msra.mxu0 0
    %1951 = vmatprep.subr.bf16.mxu0 0
    %1952 = vmatpush1.bf16.msra.mxu0 0
    %1953 = vmatprep.subr.bf16.mxu0 0
    %1954 = vmatpush1.bf16.msra.mxu0 0
    %1955 = vmatprep.subr.bf16.mxu0 0
    %1956 = vmatpush1.bf16.msra.mxu0 0
    %1957 = vmatprep.mubr.bf16.mxu0 0
    %1958 = vmatmul.mubr.bf16.gmra.mrb[0].mxu0 %v1923
    %v1959 = vpop.f32.mrb[0].mxu0
    %v1960 = vadd.f32 %v1908, %v1959
    %v1961 = vpop.f32.mrb[0].mxu0
    %v1962 = vpop.f32.mrb[0].mxu0
    %v1963 = vadd.f32 %v1908, %v1962
    %v1964 = vpop.f32.mrb[0].mxu0
    %1965 = vdwg.mxu0
    %v1966 = vmul.f32 %v1960, 0.5
    %v1967 = vmul.f32 %v1963, 0.5
    %v1968 = vmul.f32 %v1960, 0.70710677
    %v1969 = vmul.f32 %v1963, 0.70710677
    %v1970 = verf.f32.pop %v1968
    %v1971 = verf.f32.pop %v1969
    %v1972 = vadd.f32 %v1970, 1.0
    %v1973 = vadd.f32 %v1971, 1.0
    %v1974 = vmul.f32 %v1966, %v1972
    %v1975 = vmul.f32 %v1967, %v1973
    %v1976 = vpack.c.bf16 %v1975, %v1974
    %v1977 = vld [vmem:[%s12] sm:$0xf]
    %v1978 = vld [vmem:[%s12 + $0x4] sm:$0xf]
    %v1979 = vld [vmem:[%s12 + $0x8] sm:$0xf]
    %v1980 = vld [vmem:[%s12 + $0xc] sm:$0xf]
    %v1981 = vld [vmem:[%s12 + $0x10] sm:$0xf]
    %v1982 = vld [vmem:[%s12 + $0x14] sm:$0xf]
    %v1983 = vld [vmem:[%s12 + $0x18] sm:$0xf]
    %v1984 = vld [vmem:[%s12 + $0x1c] sm:$0xf]
    %v1985 = vld [vmem:[%s12 + $0x20] sm:$0xf]
    %v1986 = vld [vmem:[%s12 + $0x24] sm:$0xf]
    %v1987 = vld [vmem:[%s12 + $0x28] sm:$0xf]
    %v1988 = vld [vmem:[%s12 + $0x2c] sm:$0xf]
    %v1989 = vld [vmem:[%s12 + $0x30] sm:$0xf]
    %v1990 = vld [vmem:[%s12 + $0x34] sm:$0xf]
    %v1991 = vld [vmem:[%s12 + $0x38] sm:$0xf]
    %v1992 = vld [vmem:[%s12 + $0x3c] sm:$0xf]
    %v1993 = vld [vmem:[%s13] sm:$0x1]
    %v1995 = vlaneseq
    %v1996 = vshrl.u32 %v1995, 7
    %v1997 = vsub.s32 0, %v1996
    %v1998 = vrot.slane %v1993, %v1997
    %v2016 = vunpack.c.l.b16 %v1977
    %v2017 = vunpack.c.l.b16 %v1978
    %v2018 = vunpack.c.l.b16 %v1979
    %v2019 = vunpack.c.l.b16 %v1980
    %v2020 = vunpack.c.l.b16 %v1981
    %v2021 = vunpack.c.l.b16 %v1982
    %v2022 = vunpack.c.l.b16 %v1983
    %v2023 = vunpack.c.l.b16 %v1984
    %v2024 = vunpack.c.l.b16 %v1985
    %v2025 = vunpack.c.l.b16 %v1986
    %v2026 = vunpack.c.l.b16 %v1987
    %v2027 = vunpack.c.l.b16 %v1988
    %v2028 = vunpack.c.l.b16 %v1989
    %v2029 = vunpack.c.l.b16 %v1990
    %v2030 = vunpack.c.l.b16 %v1991
    %v2031 = vunpack.c.l.b16 %v1992
    %v2032 = vpack.c.b16 %v2017, %v2016
    %v2033 = vpack.c.b16 %v2019, %v2018
    %v2034 = vpack.c.b16 %v2021, %v2020
    %v2035 = vpack.c.b16 %v2023, %v2022
    %v2036 = vpack.c.b16 %v2025, %v2024
    %v2037 = vpack.c.b16 %v2027, %v2026
    %v2038 = vpack.c.b16 %v2029, %v2028
    %v2039 = vpack.c.b16 %v2031, %v2030
    %2048 = vmatprep.subr.bf16.mxu0 0
    %2049 = vmatpush1.bf16.msra.mxu0 %v2032
    %2050 = vmatprep.subr.bf16.mxu0 0
    %2051 = vmatpush1.bf16.msra.mxu0 %v2033
    %2052 = vmatprep.subr.bf16.mxu0 0
    %2053 = vmatpush1.bf16.msra.mxu0 %v2034
    %2054 = vmatprep.subr.bf16.mxu0 0
    %2055 = vmatpush1.bf16.msra.mxu0 %v2035
    %2056 = vmatprep.subr.bf16.mxu0 0
    %2057 = vmatpush1.bf16.msra.mxu0 %v2036
    %2058 = vmatprep.subr.bf16.mxu0 0
    %2059 = vmatpush1.bf16.msra.mxu0 %v2037
    %2060 = vmatprep.subr.bf16.mxu0 0
    %2061 = vmatpush1.bf16.msra.mxu0 %v2038
    %2062 = vmatprep.subr.bf16.mxu0 0
    %2063 = vmatpush1.bf16.msra.mxu0 %v2039
    %2064 = vmatprep.subr.bf16.mxu0 0
    %2065 = vmatpush1.bf16.msra.mxu0 0
    %2066 = vmatprep.subr.bf16.mxu0 0
    %2067 = vmatpush1.bf16.msra.mxu0 0
    %2068 = vmatprep.subr.bf16.mxu0 0
    %2069 = vmatpush1.bf16.msra.mxu0 0
    %2070 = vmatprep.subr.bf16.mxu0 0
    %2071 = vmatpush1.bf16.msra.mxu0 0
    %2072 = vmatprep.subr.bf16.mxu0 0
    %2073 = vmatpush1.bf16.msra.mxu0 0
    %2074 = vmatprep.subr.bf16.mxu0 0
    %2075 = vmatpush1.bf16.msra.mxu0 0
    %2076 = vmatprep.subr.bf16.mxu0 0
    %2077 = vmatpush1.bf16.msra.mxu0 0
    %2078 = vmatprep.subr.bf16.mxu0 0
    %2079 = vmatpush1.bf16.msra.mxu0 0
    %2080 = vmatprep.mubr.bf16.mxu0 0
    %2081 = vmatmul.mubr.bf16.gmra.mrb[0].mxu0 %v1976
    %v2082 = vpop.f32.mrb[0].mxu0
    %v2083 = vadd.f32 %v1998, %v2082
    %v2084 = vpop.f32.mrb[0].mxu0
    %v2085 = vpop.f32.mrb[0].mxu0
    %v2086 = vadd.f32 %v1998, %v2085
    %v2087 = vpop.f32.mrb[0].mxu0
    %2088 = vdwg.mxu0
    %v2089 = vadd.f32 %v2083, %v1852
    %v2090 = vadd.f32 %v2086, %v1853
    %s2091 = scalar_lea.vmem %s1, 1
    %v2092 = vld [vmem:[%s2091] sm:$0x1]
    %s2093 = scalar_lea.vmem %s2, 1
    %v2094 = vld [vmem:[%s2093] sm:$0x1]
    %v2095 = vsel %vm53, %v2089, 0.0
    %2096 = vadd.xlane.f32.xlu0 %v2095
    %v2097 = vpop.xlane.xlu0 %2096
    %v2098 = vsel %vm53, %v2090, 0.0
    %2099 = vadd.xlane.f32.xlu0 %v2098
    %v2100 = vpop.xlane.xlu0 %2099
    %v2101 = vmul.f32 %v2097, %v60
    %v2102 = vmul.f32 %v2100, %v60
    %v2103 = vsub.f32 %v2089, %v2101
    %v2104 = vsub.f32 %v2090, %v2102
    %v2105 = vmul.f32 %v2103, %v2103
    %v2106 = vmul.f32 %v2104, %v2104
    %v2107 = vsel %vm53, %v2105, 0.0
    %2108 = vadd.xlane.f32.xlu0 %v2107
    %v2109 = vpop.xlane.xlu0 %2108
    %v2110 = vsel %vm53, %v2106, 0.0
    %2111 = vadd.xlane.f32.xlu0 %v2110
    %v2112 = vpop.xlane.xlu0 %2111
    %v2113 = vmul.f32 %v2109, %v60
    %v2114 = vmul.f32 %v2112, %v60
    %v2115 = vadd.f32 %v2113, 1e-05
    %v2116 = vadd.f32 %v2114, 1e-05
    %v2117 = vrsqrt.pop %v2115
    %v2118 = vrsqrt.pop %v2116
    %v2119 = vmul.f32 %v2103, %v2117
    %v2120 = vmul.f32 %v2104, %v2118
    %v2122 = vlaneseq
    %v2123 = vshrl.u32 %v2122, 7
    %v2124 = vsub.s32 0, %v2123
    %v2125 = vrot.slane %v2092, %v2124
    %v2127 = vmul.f32 %v2119, %v2125
    %v2128 = vmul.f32 %v2120, %v2125
    %v2130 = vlaneseq
    %v2131 = vshrl.u32 %v2130, 7
    %v2132 = vsub.s32 0, %v2131
    %v2133 = vrot.slane %v2094, %v2132
    %v2135 = vadd.f32 %v2127, %v2133
    %v2136 = vadd.f32 %v2128, %v2133
    %v2137 = vpack.c.bf16 %v2136, %v2135
    %s2138 = scalar_lea.vmem %s3, 64
    %v2139 = vld [vmem:[%s2138] sm:$0xf]
    %v2140 = vld [vmem:[%s2138 + $0x4] sm:$0xf]
    %v2141 = vld [vmem:[%s2138 + $0x8] sm:$0xf]
    %v2142 = vld [vmem:[%s2138 + $0xc] sm:$0xf]
    %v2143 = vld [vmem:[%s2138 + $0x10] sm:$0xf]
    %v2144 = vld [vmem:[%s2138 + $0x14] sm:$0xf]
    %v2145 = vld [vmem:[%s2138 + $0x18] sm:$0xf]
    %v2146 = vld [vmem:[%s2138 + $0x1c] sm:$0xf]
    %v2147 = vld [vmem:[%s2138 + $0x20] sm:$0xf]
    %v2148 = vld [vmem:[%s2138 + $0x24] sm:$0xf]
    %v2149 = vld [vmem:[%s2138 + $0x28] sm:$0xf]
    %v2150 = vld [vmem:[%s2138 + $0x2c] sm:$0xf]
    %v2151 = vld [vmem:[%s2138 + $0x30] sm:$0xf]
    %v2152 = vld [vmem:[%s2138 + $0x34] sm:$0xf]
    %v2153 = vld [vmem:[%s2138 + $0x38] sm:$0xf]
    %v2154 = vld [vmem:[%s2138 + $0x3c] sm:$0xf]
    %s2155 = scalar_lea.vmem %s4, 64
    %v2156 = vld [vmem:[%s2155] sm:$0xf]
    %v2157 = vld [vmem:[%s2155 + $0x4] sm:$0xf]
    %v2158 = vld [vmem:[%s2155 + $0x8] sm:$0xf]
    %v2159 = vld [vmem:[%s2155 + $0xc] sm:$0xf]
    %v2160 = vld [vmem:[%s2155 + $0x10] sm:$0xf]
    %v2161 = vld [vmem:[%s2155 + $0x14] sm:$0xf]
    %v2162 = vld [vmem:[%s2155 + $0x18] sm:$0xf]
    %v2163 = vld [vmem:[%s2155 + $0x1c] sm:$0xf]
    %v2164 = vld [vmem:[%s2155 + $0x20] sm:$0xf]
    %v2165 = vld [vmem:[%s2155 + $0x24] sm:$0xf]
    %v2166 = vld [vmem:[%s2155 + $0x28] sm:$0xf]
    %v2167 = vld [vmem:[%s2155 + $0x2c] sm:$0xf]
    %v2168 = vld [vmem:[%s2155 + $0x30] sm:$0xf]
    %v2169 = vld [vmem:[%s2155 + $0x34] sm:$0xf]
    %v2170 = vld [vmem:[%s2155 + $0x38] sm:$0xf]
    %v2171 = vld [vmem:[%s2155 + $0x3c] sm:$0xf]
    %s2172 = scalar_lea.vmem %s5, 64
    %v2173 = vld [vmem:[%s2172] sm:$0xf]
    %v2174 = vld [vmem:[%s2172 + $0x4] sm:$0xf]
    %v2175 = vld [vmem:[%s2172 + $0x8] sm:$0xf]
    %v2176 = vld [vmem:[%s2172 + $0xc] sm:$0xf]
    %v2177 = vld [vmem:[%s2172 + $0x10] sm:$0xf]
    %v2178 = vld [vmem:[%s2172 + $0x14] sm:$0xf]
    %v2179 = vld [vmem:[%s2172 + $0x18] sm:$0xf]
    %v2180 = vld [vmem:[%s2172 + $0x1c] sm:$0xf]
    %v2181 = vld [vmem:[%s2172 + $0x20] sm:$0xf]
    %v2182 = vld [vmem:[%s2172 + $0x24] sm:$0xf]
    %v2183 = vld [vmem:[%s2172 + $0x28] sm:$0xf]
    %v2184 = vld [vmem:[%s2172 + $0x2c] sm:$0xf]
    %v2185 = vld [vmem:[%s2172 + $0x30] sm:$0xf]
    %v2186 = vld [vmem:[%s2172 + $0x34] sm:$0xf]
    %v2187 = vld [vmem:[%s2172 + $0x38] sm:$0xf]
    %v2188 = vld [vmem:[%s2172 + $0x3c] sm:$0xf]
    %s2189 = scalar_lea.vmem %s6, 16
    %v2190 = vld [vmem:[%s2189] sm:$0xf]
    %v2191 = vld [vmem:[%s2189 + $0x4] sm:$0xf]
    %v2192 = vld [vmem:[%s2189 + $0x8] sm:$0xf]
    %v2193 = vld [vmem:[%s2189 + $0xc] sm:$0xf]
    %v2198 = vunpack.c.l.b16 %v2139
    %v2199 = vunpack.c.l.b16 %v2140
    %v2200 = vunpack.c.l.b16 %v2141
    %v2201 = vunpack.c.l.b16 %v2142
    %v2202 = vpack.c.b16 %v2199, %v2198
    %v2203 = vpack.c.b16 %v2201, %v2200
    %v2207 = vsel %vm53, %v2137, 0
    %2209 = vmatprep.subr.bf16.mxu0 0
    %2210 = vmatpush1.bf16.msra.mxu0 %v2202
    %2211 = vmatprep.subr.bf16.mxu0 0
    %2212 = vmatpush1.bf16.msra.mxu0 %v2203
    %2213 = vmatprep.subr.bf16.mxu0 0
    %2214 = vmatpush1.bf16.msra.mxu0 0
    %2215 = vmatprep.subr.bf16.mxu0 0
    %2216 = vmatpush1.bf16.msra.mxu0 0
    %2217 = vmatprep.subr.bf16.mxu0 0
    %2218 = vmatpush1.bf16.msra.mxu0 0
    %2219 = vmatprep.subr.bf16.mxu0 0
    %2220 = vmatpush1.bf16.msra.mxu0 0
    %2221 = vmatprep.subr.bf16.mxu0 0
    %2222 = vmatpush1.bf16.msra.mxu0 0
    %2223 = vmatprep.subr.bf16.mxu0 0
    %2224 = vmatpush1.bf16.msra.mxu0 0
    %2225 = vmatprep.subr.bf16.mxu0 0
    %2226 = vmatpush1.bf16.msra.mxu0 0
    %2227 = vmatprep.subr.bf16.mxu0 0
    %2228 = vmatpush1.bf16.msra.mxu0 0
    %2229 = vmatprep.subr.bf16.mxu0 0
    %2230 = vmatpush1.bf16.msra.mxu0 0
    %2231 = vmatprep.subr.bf16.mxu0 0
    %2232 = vmatpush1.bf16.msra.mxu0 0
    %2233 = vmatprep.subr.bf16.mxu0 0
    %2234 = vmatpush1.bf16.msra.mxu0 0
    %2235 = vmatprep.subr.bf16.mxu0 0
    %2236 = vmatpush1.bf16.msra.mxu0 0
    %2237 = vmatprep.subr.bf16.mxu0 0
    %2238 = vmatpush1.bf16.msra.mxu0 0
    %2239 = vmatprep.subr.bf16.mxu0 0
    %2240 = vmatpush1.bf16.msra.mxu0 0
    %2241 = vmatprep.mubr.bf16.mxu0 0
    %2242 = vmatmul.mubr.bf16.gmra.mrb[0].mxu0 %v2207
    %v2243 = vpop.f32.mrb[0].mxu0
    %v2244 = vadd.f32 0.0, %v2243
    %v2245 = vpop.f32.mrb[0].mxu0
    %v2246 = vpop.f32.mrb[0].mxu0
    %v2247 = vadd.f32 0.0, %v2246
    %v2248 = vpop.f32.mrb[0].mxu0
    %2249 = vdwg.mxu0
    %v2254 = vunpack.c.l.b16 %v2156
    %v2255 = vunpack.c.l.b16 %v2157
    %v2256 = vunpack.c.l.b16 %v2158
    %v2257 = vunpack.c.l.b16 %v2159
    %v2258 = vpack.c.b16 %v2255, %v2254
    %v2259 = vpack.c.b16 %v2257, %v2256
    %2262 = vmatprep.subr.bf16.mxu0 0
    %2263 = vmatpush1.bf16.msra.mxu0 %v2258
    %2264 = vmatprep.subr.bf16.mxu0 0
    %2265 = vmatpush1.bf16.msra.mxu0 %v2259
    %2266 = vmatprep.subr.bf16.mxu0 0
    %2267 = vmatpush1.bf16.msra.mxu0 0
    %2268 = vmatprep.subr.bf16.mxu0 0
    %2269 = vmatpush1.bf16.msra.mxu0 0
    %2270 = vmatprep.subr.bf16.mxu0 0
    %2271 = vmatpush1.bf16.msra.mxu0 0
    %2272 = vmatprep.subr.bf16.mxu0 0
    %2273 = vmatpush1.bf16.msra.mxu0 0
    %2274 = vmatprep.subr.bf16.mxu0 0
    %2275 = vmatpush1.bf16.msra.mxu0 0
    %2276 = vmatprep.subr.bf16.mxu0 0
    %2277 = vmatpush1.bf16.msra.mxu0 0
    %2278 = vmatprep.subr.bf16.mxu0 0
    %2279 = vmatpush1.bf16.msra.mxu0 0
    %2280 = vmatprep.subr.bf16.mxu0 0
    %2281 = vmatpush1.bf16.msra.mxu0 0
    %2282 = vmatprep.subr.bf16.mxu0 0
    %2283 = vmatpush1.bf16.msra.mxu0 0
    %2284 = vmatprep.subr.bf16.mxu0 0
    %2285 = vmatpush1.bf16.msra.mxu0 0
    %2286 = vmatprep.subr.bf16.mxu0 0
    %2287 = vmatpush1.bf16.msra.mxu0 0
    %2288 = vmatprep.subr.bf16.mxu0 0
    %2289 = vmatpush1.bf16.msra.mxu0 0
    %2290 = vmatprep.subr.bf16.mxu0 0
    %2291 = vmatpush1.bf16.msra.mxu0 0
    %2292 = vmatprep.subr.bf16.mxu0 0
    %2293 = vmatpush1.bf16.msra.mxu0 0
    %2294 = vmatprep.mubr.bf16.mxu0 0
    %2295 = vmatmul.mubr.bf16.gmra.mrb[0].mxu0 %v2207
    %v2296 = vpop.f32.mrb[0].mxu0
    %v2297 = vadd.f32 0.0, %v2296
    %v2298 = vpop.f32.mrb[0].mxu0
    %v2299 = vpop.f32.mrb[0].mxu0
    %v2300 = vadd.f32 0.0, %v2299
    %v2301 = vpop.f32.mrb[0].mxu0
    %2302 = vdwg.mxu0
    %v2307 = vunpack.c.l.b16 %v2173
    %v2308 = vunpack.c.l.b16 %v2174
    %v2309 = vunpack.c.l.b16 %v2175
    %v2310 = vunpack.c.l.b16 %v2176
    %v2311 = vpack.c.b16 %v2308, %v2307
    %v2312 = vpack.c.b16 %v2310, %v2309
    %2315 = vmatprep.subr.bf16.mxu0 0
    %2316 = vmatpush1.bf16.msra.mxu0 %v2311
    %2317 = vmatprep.subr.bf16.mxu0 0
    %2318 = vmatpush1.bf16.msra.mxu0 %v2312
    %2319 = vmatprep.subr.bf16.mxu0 0
    %2320 = vmatpush1.bf16.msra.mxu0 0
    %2321 = vmatprep.subr.bf16.mxu0 0
    %2322 = vmatpush1.bf16.msra.mxu0 0
    %2323 = vmatprep.subr.bf16.mxu0 0
    %2324 = vmatpush1.bf16.msra.mxu0 0
    %2325 = vmatprep.subr.bf16.mxu0 0
    %2326 = vmatpush1.bf16.msra.mxu0 0
    %2327 = vmatprep.subr.bf16.mxu0 0
    %2328 = vmatpush1.bf16.msra.mxu0 0
    %2329 = vmatprep.subr.bf16.mxu0 0
    %2330 = vmatpush1.bf16.msra.mxu0 0
    %2331 = vmatprep.subr.bf16.mxu0 0
    %2332 = vmatpush1.bf16.msra.mxu0 0
    %2333 = vmatprep.subr.bf16.mxu0 0
    %2334 = vmatpush1.bf16.msra.mxu0 0
    %2335 = vmatprep.subr.bf16.mxu0 0
    %2336 = vmatpush1.bf16.msra.mxu0 0
    %2337 = vmatprep.subr.bf16.mxu0 0
    %2338 = vmatpush1.bf16.msra.mxu0 0
    %2339 = vmatprep.subr.bf16.mxu0 0
    %2340 = vmatpush1.bf16.msra.mxu0 0
    %2341 = vmatprep.subr.bf16.mxu0 0
    %2342 = vmatpush1.bf16.msra.mxu0 0
    %2343 = vmatprep.subr.bf16.mxu0 0
    %2344 = vmatpush1.bf16.msra.mxu0 0
    %2345 = vmatprep.subr.bf16.mxu0 0
    %2346 = vmatpush1.bf16.msra.mxu0 0
    %2347 = vmatprep.mubr.bf16.mxu0 0
    %2348 = vmatmul.mubr.bf16.gmra.mrb[0].mxu0 %v2207
    %v2349 = vpop.f32.mrb[0].mxu0
    %v2350 = vadd.f32 0.0, %v2349
    %v2351 = vpop.f32.mrb[0].mxu0
    %v2352 = vpop.f32.mrb[0].mxu0
    %v2353 = vadd.f32 0.0, %v2352
    %v2354 = vpop.f32.mrb[0].mxu0
    %2355 = vdwg.mxu0
    %v2356 = vpack.c.bf16 %v2244, %v2244
    %v2357 = vpack.c.bf16 %v2247, %v2247
    %v2358 = vpack.c.bf16 %v2297, %v2297
    %v2359 = vpack.c.bf16 %v2300, %v2300
    %v2360 = vpack.c.bf16 %v2350, %v2350
    %v2361 = vpack.c.bf16 %v2353, %v2353
    %v2363 = vsel %vm318, %v2356, 0
    %v2366 = vsel %vm318, %v2358, 0
    %2368 = vmatprep.subr.bf16.mxu0 0
    %2369 = vmatpush1.bf16.xpose.msra.mxu0 %v2366
    %2370 = vmatprep.subr.bf16.mxu0 0
    %2371 = vmatpush1.bf16.xpose.msra.mxu0 0
    %2372 = vmatprep.subr.bf16.mxu0 0
    %2373 = vmatpush1.bf16.xpose.msra.mxu0 0
    %2374 = vmatprep.subr.bf16.mxu0 0
    %2375 = vmatpush1.bf16.xpose.msra.mxu0 0
    %2376 = vmatprep.subr.bf16.mxu0 0
    %2377 = vmatpush1.bf16.xpose.msra.mxu0 0
    %2378 = vmatprep.subr.bf16.mxu0 0
    %2379 = vmatpush1.bf16.xpose.msra.mxu0 0
    %2380 = vmatprep.subr.bf16.mxu0 0
    %2381 = vmatpush1.bf16.xpose.msra.mxu0 0
    %2382 = vmatprep.subr.bf16.mxu0 0
    %2383 = vmatpush1.bf16.xpose.msra.mxu0 0
    %2384 = vmatprep.subr.bf16.mxu0 0
    %2385 = vmatpush1.bf16.xpose.msra.mxu0 0
    %2386 = vmatprep.subr.bf16.mxu0 0
    %2387 = vmatpush1.bf16.xpose.msra.mxu0 0
    %2388 = vmatprep.subr.bf16.mxu0 0
    %2389 = vmatpush1.bf16.xpose.msra.mxu0 0
    %2390 = vmatprep.subr.bf16.mxu0 0
    %2391 = vmatpush1.bf16.xpose.msra.mxu0 0
    %2392 = vmatprep.subr.bf16.mxu0 0
    %2393 = vmatpush1.bf16.xpose.msra.mxu0 0
    %2394 = vmatprep.subr.bf16.mxu0 0
    %2395 = vmatpush1.bf16.xpose.msra.mxu0 0
    %2396 = vmatprep.subr.bf16.mxu0 0
    %2397 = vmatpush1.bf16.xpose.msra.mxu0 0
    %2398 = vmatprep.subr.bf16.mxu0 0
    %2399 = vmatpush1.bf16.xpose.msra.mxu0 0
    %2400 = vmatprep.mubr.bf16.mxu0 0
    %2401 = vmatmul.mubr.bf16.gmra.mrb[0].mxu0 %v2363
    %v2402 = vpop.f32.mrb[0].mxu0
    %v2403 = vadd.f32 0.0, %v2402
    %v2404 = vpop.f32.mrb[0].mxu0
    %v2405 = vpop.f32.mrb[0].mxu0
    %v2406 = vpop.f32.mrb[0].mxu0
    %2407 = vdwg.mxu0
    %v2409 = vsel %vm318, %v2357, 0
    %v2412 = vsel %vm318, %v2359, 0
    %2414 = vmatprep.subr.bf16.mxu0 0
    %2415 = vmatpush1.bf16.xpose.msra.mxu0 %v2412
    %2416 = vmatprep.subr.bf16.mxu0 0
    %2417 = vmatpush1.bf16.xpose.msra.mxu0 0
    %2418 = vmatprep.subr.bf16.mxu0 0
    %2419 = vmatpush1.bf16.xpose.msra.mxu0 0
    %2420 = vmatprep.subr.bf16.mxu0 0
    %2421 = vmatpush1.bf16.xpose.msra.mxu0 0
    %2422 = vmatprep.subr.bf16.mxu0 0
    %2423 = vmatpush1.bf16.xpose.msra.mxu0 0
    %2424 = vmatprep.subr.bf16.mxu0 0
    %2425 = vmatpush1.bf16.xpose.msra.mxu0 0
    %2426 = vmatprep.subr.bf16.mxu0 0
    %2427 = vmatpush1.bf16.xpose.msra.mxu0 0
    %2428 = vmatprep.subr.bf16.mxu0 0
    %2429 = vmatpush1.bf16.xpose.msra.mxu0 0
    %2430 = vmatprep.subr.bf16.mxu0 0
    %2431 = vmatpush1.bf16.xpose.msra.mxu0 0
    %2432 = vmatprep.subr.bf16.mxu0 0
    %2433 = vmatpush1.bf16.xpose.msra.mxu0 0
    %2434 = vmatprep.subr.bf16.mxu0 0
    %2435 = vmatpush1.bf16.xpose.msra.mxu0 0
    %2436 = vmatprep.subr.bf16.mxu0 0
    %2437 = vmatpush1.bf16.xpose.msra.mxu0 0
    %2438 = vmatprep.subr.bf16.mxu0 0
    %2439 = vmatpush1.bf16.xpose.msra.mxu0 0
    %2440 = vmatprep.subr.bf16.mxu0 0
    %2441 = vmatpush1.bf16.xpose.msra.mxu0 0
    %2442 = vmatprep.subr.bf16.mxu0 0
    %2443 = vmatpush1.bf16.xpose.msra.mxu0 0
    %2444 = vmatprep.subr.bf16.mxu0 0
    %2445 = vmatpush1.bf16.xpose.msra.mxu0 0
    %2446 = vmatprep.mubr.bf16.mxu0 0
    %2447 = vmatmul.mubr.bf16.gmra.mrb[0].mxu0 %v2409
    %v2448 = vpop.f32.mrb[0].mxu0
    %v2449 = vadd.f32 0.0, %v2448
    %v2450 = vpop.f32.mrb[0].mxu0
    %v2451 = vpop.f32.mrb[0].mxu0
    %v2452 = vpop.f32.mrb[0].mxu0
    %2453 = vdwg.mxu0
    %v2454 = vsel %vm318, %v2403, -inf
    %2455 = vmax.xlane.f32.xlu0 %v2454
    %v2456 = vpop.xlane.xlu0 %2455
    %v2457 = vsel %vm318, %v2449, -inf
    %2458 = vmax.xlane.f32.xlu0 %v2457
    %v2459 = vpop.xlane.xlu0 %2458
    %v2460 = vsub.f32 %v2403, %v2456
    %v2461 = vsub.f32 %v2449, %v2459
    %v2462 = vmul.f32 %v2460, 1.442695
    %v2463 = vpow.pop %v2462
    %v2464 = vmul.f32 %v2461, 1.442695
    %v2465 = vpow.pop %v2464
    %v2466 = vsel %vm318, %v2463, 0.0
    %2467 = vadd.xlane.f32.xlu0 %v2466
    %v2468 = vpop.xlane.xlu0 %2467
    %v2469 = vsel %vm318, %v2465, 0.0
    %2470 = vadd.xlane.f32.xlu0 %v2469
    %v2471 = vpop.xlane.xlu0 %2470
    %v2472 = vrcp.pop %v2468
    %v2473 = vrcp.pop %v2471
    %v2474 = vmul.f32 %v2463, %v2472
    %v2475 = vmul.f32 %v2465, %v2473
    %v2476 = vpack.c.bf16 %v2474, %v2474
    %v2477 = vpack.c.bf16 %v2475, %v2475
    %v2479 = vsel %vm318, %v2476, 0
    %v2482 = vsel %vm438, %v2360, 0
    %2484 = vmatprep.subr.bf16.mxu0 0
    %2485 = vmatpush1.bf16.msra.mxu0 %v2482
    %2486 = vmatprep.subr.bf16.mxu0 0
    %2487 = vmatpush1.bf16.msra.mxu0 0
    %2488 = vmatprep.subr.bf16.mxu0 0
    %2489 = vmatpush1.bf16.msra.mxu0 0
    %2490 = vmatprep.subr.bf16.mxu0 0
    %2491 = vmatpush1.bf16.msra.mxu0 0
    %2492 = vmatprep.subr.bf16.mxu0 0
    %2493 = vmatpush1.bf16.msra.mxu0 0
    %2494 = vmatprep.subr.bf16.mxu0 0
    %2495 = vmatpush1.bf16.msra.mxu0 0
    %2496 = vmatprep.subr.bf16.mxu0 0
    %2497 = vmatpush1.bf16.msra.mxu0 0
    %2498 = vmatprep.subr.bf16.mxu0 0
    %2499 = vmatpush1.bf16.msra.mxu0 0
    %2500 = vmatprep.subr.bf16.mxu0 0
    %2501 = vmatpush1.bf16.msra.mxu0 0
    %2502 = vmatprep.subr.bf16.mxu0 0
    %2503 = vmatpush1.bf16.msra.mxu0 0
    %2504 = vmatprep.subr.bf16.mxu0 0
    %2505 = vmatpush1.bf16.msra.mxu0 0
    %2506 = vmatprep.subr.bf16.mxu0 0
    %2507 = vmatpush1.bf16.msra.mxu0 0
    %2508 = vmatprep.subr.bf16.mxu0 0
    %2509 = vmatpush1.bf16.msra.mxu0 0
    %2510 = vmatprep.subr.bf16.mxu0 0
    %2511 = vmatpush1.bf16.msra.mxu0 0
    %2512 = vmatprep.subr.bf16.mxu0 0
    %2513 = vmatpush1.bf16.msra.mxu0 0
    %2514 = vmatprep.subr.bf16.mxu0 0
    %2515 = vmatpush1.bf16.msra.mxu0 0
    %2516 = vmatprep.mubr.bf16.mxu0 0
    %2517 = vmatmul.mubr.bf16.gmra.mrb[0].mxu0 %v2479
    %v2518 = vpop.f32.mrb[0].mxu0
    %v2519 = vadd.f32 0.0, %v2518
    %v2520 = vpop.f32.mrb[0].mxu0
    %v2521 = vpop.f32.mrb[0].mxu0
    %v2522 = vpop.f32.mrb[0].mxu0
    %2523 = vdwg.mxu0
    %v2525 = vsel %vm318, %v2477, 0
    %v2528 = vsel %vm438, %v2361, 0
    %2530 = vmatprep.subr.bf16.mxu0 0
    %2531 = vmatpush1.bf16.msra.mxu0 %v2528
    %2532 = vmatprep.subr.bf16.mxu0 0
    %2533 = vmatpush1.bf16.msra.mxu0 0
    %2534 = vmatprep.subr.bf16.mxu0 0
    %2535 = vmatpush1.bf16.msra.mxu0 0
    %2536 = vmatprep.subr.bf16.mxu0 0
    %2537 = vmatpush1.bf16.msra.mxu0 0
    %2538 = vmatprep.subr.bf16.mxu0 0
    %2539 = vmatpush1.bf16.msra.mxu0 0
    %2540 = vmatprep.subr.bf16.mxu0 0
    %2541 = vmatpush1.bf16.msra.mxu0 0
    %2542 = vmatprep.subr.bf16.mxu0 0
    %2543 = vmatpush1.bf16.msra.mxu0 0
    %2544 = vmatprep.subr.bf16.mxu0 0
    %2545 = vmatpush1.bf16.msra.mxu0 0
    %2546 = vmatprep.subr.bf16.mxu0 0
    %2547 = vmatpush1.bf16.msra.mxu0 0
    %2548 = vmatprep.subr.bf16.mxu0 0
    %2549 = vmatpush1.bf16.msra.mxu0 0
    %2550 = vmatprep.subr.bf16.mxu0 0
    %2551 = vmatpush1.bf16.msra.mxu0 0
    %2552 = vmatprep.subr.bf16.mxu0 0
    %2553 = vmatpush1.bf16.msra.mxu0 0
    %2554 = vmatprep.subr.bf16.mxu0 0
    %2555 = vmatpush1.bf16.msra.mxu0 0
    %2556 = vmatprep.subr.bf16.mxu0 0
    %2557 = vmatpush1.bf16.msra.mxu0 0
    %2558 = vmatprep.subr.bf16.mxu0 0
    %2559 = vmatpush1.bf16.msra.mxu0 0
    %2560 = vmatprep.subr.bf16.mxu0 0
    %2561 = vmatpush1.bf16.msra.mxu0 0
    %2562 = vmatprep.mubr.bf16.mxu0 0
    %2563 = vmatmul.mubr.bf16.gmra.mrb[0].mxu0 %v2525
    %v2564 = vpop.f32.mrb[0].mxu0
    %v2565 = vadd.f32 0.0, %v2564
    %v2566 = vpop.f32.mrb[0].mxu0
    %v2567 = vpop.f32.mrb[0].mxu0
    %v2568 = vpop.f32.mrb[0].mxu0
    %2569 = vdwg.mxu0
    %v2570 = vpack.c.bf16 %v2565, %v2519
    %v2575 = vunpack.c.l.b16 %v2143
    %v2576 = vunpack.c.l.b16 %v2144
    %v2577 = vunpack.c.l.b16 %v2145
    %v2578 = vunpack.c.l.b16 %v2146
    %v2579 = vpack.c.b16 %v2576, %v2575
    %v2580 = vpack.c.b16 %v2578, %v2577
    %2583 = vmatprep.subr.bf16.mxu0 0
    %2584 = vmatpush1.bf16.msra.mxu0 %v2579
    %2585 = vmatprep.subr.bf16.mxu0 0
    %2586 = vmatpush1.bf16.msra.mxu0 %v2580
    %2587 = vmatprep.subr.bf16.mxu0 0
    %2588 = vmatpush1.bf16.msra.mxu0 0
    %2589 = vmatprep.subr.bf16.mxu0 0
    %2590 = vmatpush1.bf16.msra.mxu0 0
    %2591 = vmatprep.subr.bf16.mxu0 0
    %2592 = vmatpush1.bf16.msra.mxu0 0
    %2593 = vmatprep.subr.bf16.mxu0 0
    %2594 = vmatpush1.bf16.msra.mxu0 0
    %2595 = vmatprep.subr.bf16.mxu0 0
    %2596 = vmatpush1.bf16.msra.mxu0 0
    %2597 = vmatprep.subr.bf16.mxu0 0
    %2598 = vmatpush1.bf16.msra.mxu0 0
    %2599 = vmatprep.subr.bf16.mxu0 0
    %2600 = vmatpush1.bf16.msra.mxu0 0
    %2601 = vmatprep.subr.bf16.mxu0 0
    %2602 = vmatpush1.bf16.msra.mxu0 0
    %2603 = vmatprep.subr.bf16.mxu0 0
    %2604 = vmatpush1.bf16.msra.mxu0 0
    %2605 = vmatprep.subr.bf16.mxu0 0
    %2606 = vmatpush1.bf16.msra.mxu0 0
    %2607 = vmatprep.subr.bf16.mxu0 0
    %2608 = vmatpush1.bf16.msra.mxu0 0
    %2609 = vmatprep.subr.bf16.mxu0 0
    %2610 = vmatpush1.bf16.msra.mxu0 0
    %2611 = vmatprep.subr.bf16.mxu0 0
    %2612 = vmatpush1.bf16.msra.mxu0 0
    %2613 = vmatprep.subr.bf16.mxu0 0
    %2614 = vmatpush1.bf16.msra.mxu0 0
    %2615 = vmatprep.mubr.bf16.mxu0 0
    %2616 = vmatmul.mubr.bf16.gmra.mrb[0].mxu0 %v2207
    %v2617 = vpop.f32.mrb[0].mxu0
    %v2618 = vadd.f32 0.0, %v2617
    %v2619 = vpop.f32.mrb[0].mxu0
    %v2620 = vpop.f32.mrb[0].mxu0
    %v2621 = vadd.f32 0.0, %v2620
    %v2622 = vpop.f32.mrb[0].mxu0
    %2623 = vdwg.mxu0
    %v2628 = vunpack.c.l.b16 %v2160
    %v2629 = vunpack.c.l.b16 %v2161
    %v2630 = vunpack.c.l.b16 %v2162
    %v2631 = vunpack.c.l.b16 %v2163
    %v2632 = vpack.c.b16 %v2629, %v2628
    %v2633 = vpack.c.b16 %v2631, %v2630
    %2636 = vmatprep.subr.bf16.mxu0 0
    %2637 = vmatpush1.bf16.msra.mxu0 %v2632
    %2638 = vmatprep.subr.bf16.mxu0 0
    %2639 = vmatpush1.bf16.msra.mxu0 %v2633
    %2640 = vmatprep.subr.bf16.mxu0 0
    %2641 = vmatpush1.bf16.msra.mxu0 0
    %2642 = vmatprep.subr.bf16.mxu0 0
    %2643 = vmatpush1.bf16.msra.mxu0 0
    %2644 = vmatprep.subr.bf16.mxu0 0
    %2645 = vmatpush1.bf16.msra.mxu0 0
    %2646 = vmatprep.subr.bf16.mxu0 0
    %2647 = vmatpush1.bf16.msra.mxu0 0
    %2648 = vmatprep.subr.bf16.mxu0 0
    %2649 = vmatpush1.bf16.msra.mxu0 0
    %2650 = vmatprep.subr.bf16.mxu0 0
    %2651 = vmatpush1.bf16.msra.mxu0 0
    %2652 = vmatprep.subr.bf16.mxu0 0
    %2653 = vmatpush1.bf16.msra.mxu0 0
    %2654 = vmatprep.subr.bf16.mxu0 0
    %2655 = vmatpush1.bf16.msra.mxu0 0
    %2656 = vmatprep.subr.bf16.mxu0 0
    %2657 = vmatpush1.bf16.msra.mxu0 0
    %2658 = vmatprep.subr.bf16.mxu0 0
    %2659 = vmatpush1.bf16.msra.mxu0 0
    %2660 = vmatprep.subr.bf16.mxu0 0
    %2661 = vmatpush1.bf16.msra.mxu0 0
    %2662 = vmatprep.subr.bf16.mxu0 0
    %2663 = vmatpush1.bf16.msra.mxu0 0
    %2664 = vmatprep.subr.bf16.mxu0 0
    %2665 = vmatpush1.bf16.msra.mxu0 0
    %2666 = vmatprep.subr.bf16.mxu0 0
    %2667 = vmatpush1.bf16.msra.mxu0 0
    %2668 = vmatprep.mubr.bf16.mxu0 0
    %2669 = vmatmul.mubr.bf16.gmra.mrb[0].mxu0 %v2207
    %v2670 = vpop.f32.mrb[0].mxu0
    %v2671 = vadd.f32 0.0, %v2670
    %v2672 = vpop.f32.mrb[0].mxu0
    %v2673 = vpop.f32.mrb[0].mxu0
    %v2674 = vadd.f32 0.0, %v2673
    %v2675 = vpop.f32.mrb[0].mxu0
    %2676 = vdwg.mxu0
    %v2681 = vunpack.c.l.b16 %v2177
    %v2682 = vunpack.c.l.b16 %v2178
    %v2683 = vunpack.c.l.b16 %v2179
    %v2684 = vunpack.c.l.b16 %v2180
    %v2685 = vpack.c.b16 %v2682, %v2681
    %v2686 = vpack.c.b16 %v2684, %v2683
    %2689 = vmatprep.subr.bf16.mxu0 0
    %2690 = vmatpush1.bf16.msra.mxu0 %v2685
    %2691 = vmatprep.subr.bf16.mxu0 0
    %2692 = vmatpush1.bf16.msra.mxu0 %v2686
    %2693 = vmatprep.subr.bf16.mxu0 0
    %2694 = vmatpush1.bf16.msra.mxu0 0
    %2695 = vmatprep.subr.bf16.mxu0 0
    %2696 = vmatpush1.bf16.msra.mxu0 0
    %2697 = vmatprep.subr.bf16.mxu0 0
    %2698 = vmatpush1.bf16.msra.mxu0 0
    %2699 = vmatprep.subr.bf16.mxu0 0
    %2700 = vmatpush1.bf16.msra.mxu0 0
    %2701 = vmatprep.subr.bf16.mxu0 0
    %2702 = vmatpush1.bf16.msra.mxu0 0
    %2703 = vmatprep.subr.bf16.mxu0 0
    %2704 = vmatpush1.bf16.msra.mxu0 0
    %2705 = vmatprep.subr.bf16.mxu0 0
    %2706 = vmatpush1.bf16.msra.mxu0 0
    %2707 = vmatprep.subr.bf16.mxu0 0
    %2708 = vmatpush1.bf16.msra.mxu0 0
    %2709 = vmatprep.subr.bf16.mxu0 0
    %2710 = vmatpush1.bf16.msra.mxu0 0
    %2711 = vmatprep.subr.bf16.mxu0 0
    %2712 = vmatpush1.bf16.msra.mxu0 0
    %2713 = vmatprep.subr.bf16.mxu0 0
    %2714 = vmatpush1.bf16.msra.mxu0 0
    %2715 = vmatprep.subr.bf16.mxu0 0
    %2716 = vmatpush1.bf16.msra.mxu0 0
    %2717 = vmatprep.subr.bf16.mxu0 0
    %2718 = vmatpush1.bf16.msra.mxu0 0
    %2719 = vmatprep.subr.bf16.mxu0 0
    %2720 = vmatpush1.bf16.msra.mxu0 0
    %2721 = vmatprep.mubr.bf16.mxu0 0
    %2722 = vmatmul.mubr.bf16.gmra.mrb[0].mxu0 %v2207
    %v2723 = vpop.f32.mrb[0].mxu0
    %v2724 = vadd.f32 0.0, %v2723
    %v2725 = vpop.f32.mrb[0].mxu0
    %v2726 = vpop.f32.mrb[0].mxu0
    %v2727 = vadd.f32 0.0, %v2726
    %v2728 = vpop.f32.mrb[0].mxu0
    %2729 = vdwg.mxu0
    %v2730 = vpack.c.bf16 %v2618, %v2618
    %v2731 = vpack.c.bf16 %v2621, %v2621
    %v2732 = vpack.c.bf16 %v2671, %v2671
    %v2733 = vpack.c.bf16 %v2674, %v2674
    %v2734 = vpack.c.bf16 %v2724, %v2724
    %v2735 = vpack.c.bf16 %v2727, %v2727
    %v2737 = vsel %vm318, %v2730, 0
    %v2740 = vsel %vm318, %v2732, 0
    %2742 = vmatprep.subr.bf16.mxu0 0
    %2743 = vmatpush1.bf16.xpose.msra.mxu0 %v2740
    %2744 = vmatprep.subr.bf16.mxu0 0
    %2745 = vmatpush1.bf16.xpose.msra.mxu0 0
    %2746 = vmatprep.subr.bf16.mxu0 0
    %2747 = vmatpush1.bf16.xpose.msra.mxu0 0
    %2748 = vmatprep.subr.bf16.mxu0 0
    %2749 = vmatpush1.bf16.xpose.msra.mxu0 0
    %2750 = vmatprep.subr.bf16.mxu0 0
    %2751 = vmatpush1.bf16.xpose.msra.mxu0 0
    %2752 = vmatprep.subr.bf16.mxu0 0
    %2753 = vmatpush1.bf16.xpose.msra.mxu0 0
    %2754 = vmatprep.subr.bf16.mxu0 0
    %2755 = vmatpush1.bf16.xpose.msra.mxu0 0
    %2756 = vmatprep.subr.bf16.mxu0 0
    %2757 = vmatpush1.bf16.xpose.msra.mxu0 0
    %2758 = vmatprep.subr.bf16.mxu0 0
    %2759 = vmatpush1.bf16.xpose.msra.mxu0 0
    %2760 = vmatprep.subr.bf16.mxu0 0
    %2761 = vmatpush1.bf16.xpose.msra.mxu0 0
    %2762 = vmatprep.subr.bf16.mxu0 0
    %2763 = vmatpush1.bf16.xpose.msra.mxu0 0
    %2764 = vmatprep.subr.bf16.mxu0 0
    %2765 = vmatpush1.bf16.xpose.msra.mxu0 0
    %2766 = vmatprep.subr.bf16.mxu0 0
    %2767 = vmatpush1.bf16.xpose.msra.mxu0 0
    %2768 = vmatprep.subr.bf16.mxu0 0
    %2769 = vmatpush1.bf16.xpose.msra.mxu0 0
    %2770 = vmatprep.subr.bf16.mxu0 0
    %2771 = vmatpush1.bf16.xpose.msra.mxu0 0
    %2772 = vmatprep.subr.bf16.mxu0 0
    %2773 = vmatpush1.bf16.xpose.msra.mxu0 0
    %2774 = vmatprep.mubr.bf16.mxu0 0
    %2775 = vmatmul.mubr.bf16.gmra.mrb[0].mxu0 %v2737
    %v2776 = vpop.f32.mrb[0].mxu0
    %v2777 = vadd.f32 0.0, %v2776
    %v2778 = vpop.f32.mrb[0].mxu0
    %v2779 = vpop.f32.mrb[0].mxu0
    %v2780 = vpop.f32.mrb[0].mxu0
    %2781 = vdwg.mxu0
    %v2783 = vsel %vm318, %v2731, 0
    %v2786 = vsel %vm318, %v2733, 0
    %2788 = vmatprep.subr.bf16.mxu0 0
    %2789 = vmatpush1.bf16.xpose.msra.mxu0 %v2786
    %2790 = vmatprep.subr.bf16.mxu0 0
    %2791 = vmatpush1.bf16.xpose.msra.mxu0 0
    %2792 = vmatprep.subr.bf16.mxu0 0
    %2793 = vmatpush1.bf16.xpose.msra.mxu0 0
    %2794 = vmatprep.subr.bf16.mxu0 0
    %2795 = vmatpush1.bf16.xpose.msra.mxu0 0
    %2796 = vmatprep.subr.bf16.mxu0 0
    %2797 = vmatpush1.bf16.xpose.msra.mxu0 0
    %2798 = vmatprep.subr.bf16.mxu0 0
    %2799 = vmatpush1.bf16.xpose.msra.mxu0 0
    %2800 = vmatprep.subr.bf16.mxu0 0
    %2801 = vmatpush1.bf16.xpose.msra.mxu0 0
    %2802 = vmatprep.subr.bf16.mxu0 0
    %2803 = vmatpush1.bf16.xpose.msra.mxu0 0
    %2804 = vmatprep.subr.bf16.mxu0 0
    %2805 = vmatpush1.bf16.xpose.msra.mxu0 0
    %2806 = vmatprep.subr.bf16.mxu0 0
    %2807 = vmatpush1.bf16.xpose.msra.mxu0 0
    %2808 = vmatprep.subr.bf16.mxu0 0
    %2809 = vmatpush1.bf16.xpose.msra.mxu0 0
    %2810 = vmatprep.subr.bf16.mxu0 0
    %2811 = vmatpush1.bf16.xpose.msra.mxu0 0
    %2812 = vmatprep.subr.bf16.mxu0 0
    %2813 = vmatpush1.bf16.xpose.msra.mxu0 0
    %2814 = vmatprep.subr.bf16.mxu0 0
    %2815 = vmatpush1.bf16.xpose.msra.mxu0 0
    %2816 = vmatprep.subr.bf16.mxu0 0
    %2817 = vmatpush1.bf16.xpose.msra.mxu0 0
    %2818 = vmatprep.subr.bf16.mxu0 0
    %2819 = vmatpush1.bf16.xpose.msra.mxu0 0
    %2820 = vmatprep.mubr.bf16.mxu0 0
    %2821 = vmatmul.mubr.bf16.gmra.mrb[0].mxu0 %v2783
    %v2822 = vpop.f32.mrb[0].mxu0
    %v2823 = vadd.f32 0.0, %v2822
    %v2824 = vpop.f32.mrb[0].mxu0
    %v2825 = vpop.f32.mrb[0].mxu0
    %v2826 = vpop.f32.mrb[0].mxu0
    %2827 = vdwg.mxu0
    %v2828 = vsel %vm318, %v2777, -inf
    %2829 = vmax.xlane.f32.xlu0 %v2828
    %v2830 = vpop.xlane.xlu0 %2829
    %v2831 = vsel %vm318, %v2823, -inf
    %2832 = vmax.xlane.f32.xlu0 %v2831
    %v2833 = vpop.xlane.xlu0 %2832
    %v2834 = vsub.f32 %v2777, %v2830
    %v2835 = vsub.f32 %v2823, %v2833
    %v2836 = vmul.f32 %v2834, 1.442695
    %v2837 = vpow.pop %v2836
    %v2838 = vmul.f32 %v2835, 1.442695
    %v2839 = vpow.pop %v2838
    %v2840 = vsel %vm318, %v2837, 0.0
    %2841 = vadd.xlane.f32.xlu0 %v2840
    %v2842 = vpop.xlane.xlu0 %2841
    %v2843 = vsel %vm318, %v2839, 0.0
    %2844 = vadd.xlane.f32.xlu0 %v2843
    %v2845 = vpop.xlane.xlu0 %2844
    %v2846 = vrcp.pop %v2842
    %v2847 = vrcp.pop %v2845
    %v2848 = vmul.f32 %v2837, %v2846
    %v2849 = vmul.f32 %v2839, %v2847
    %v2850 = vpack.c.bf16 %v2848, %v2848
    %v2851 = vpack.c.bf16 %v2849, %v2849
    %v2853 = vsel %vm318, %v2850, 0
    %v2856 = vsel %vm438, %v2734, 0
    %2858 = vmatprep.subr.bf16.mxu0 0
    %2859 = vmatpush1.bf16.msra.mxu0 %v2856
    %2860 = vmatprep.subr.bf16.mxu0 0
    %2861 = vmatpush1.bf16.msra.mxu0 0
    %2862 = vmatprep.subr.bf16.mxu0 0
    %2863 = vmatpush1.bf16.msra.mxu0 0
    %2864 = vmatprep.subr.bf16.mxu0 0
    %2865 = vmatpush1.bf16.msra.mxu0 0
    %2866 = vmatprep.subr.bf16.mxu0 0
    %2867 = vmatpush1.bf16.msra.mxu0 0
    %2868 = vmatprep.subr.bf16.mxu0 0
    %2869 = vmatpush1.bf16.msra.mxu0 0
    %2870 = vmatprep.subr.bf16.mxu0 0
    %2871 = vmatpush1.bf16.msra.mxu0 0
    %2872 = vmatprep.subr.bf16.mxu0 0
    %2873 = vmatpush1.bf16.msra.mxu0 0
    %2874 = vmatprep.subr.bf16.mxu0 0
    %2875 = vmatpush1.bf16.msra.mxu0 0
    %2876 = vmatprep.subr.bf16.mxu0 0
    %2877 = vmatpush1.bf16.msra.mxu0 0
    %2878 = vmatprep.subr.bf16.mxu0 0
    %2879 = vmatpush1.bf16.msra.mxu0 0
    %2880 = vmatprep.subr.bf16.mxu0 0
    %2881 = vmatpush1.bf16.msra.mxu0 0
    %2882 = vmatprep.subr.bf16.mxu0 0
    %2883 = vmatpush1.bf16.msra.mxu0 0
    %2884 = vmatprep.subr.bf16.mxu0 0
    %2885 = vmatpush1.bf16.msra.mxu0 0
    %2886 = vmatprep.subr.bf16.mxu0 0
    %2887 = vmatpush1.bf16.msra.mxu0 0
    %2888 = vmatprep.subr.bf16.mxu0 0
    %2889 = vmatpush1.bf16.msra.mxu0 0
    %2890 = vmatprep.mubr.bf16.mxu0 0
    %2891 = vmatmul.mubr.bf16.gmra.mrb[0].mxu0 %v2853
    %v2892 = vpop.f32.mrb[0].mxu0
    %v2893 = vadd.f32 0.0, %v2892
    %v2894 = vpop.f32.mrb[0].mxu0
    %v2895 = vpop.f32.mrb[0].mxu0
    %v2896 = vpop.f32.mrb[0].mxu0
    %2897 = vdwg.mxu0
    %v2899 = vsel %vm318, %v2851, 0
    %v2902 = vsel %vm438, %v2735, 0
    %2904 = vmatprep.subr.bf16.mxu0 0
    %2905 = vmatpush1.bf16.msra.mxu0 %v2902
    %2906 = vmatprep.subr.bf16.mxu0 0
    %2907 = vmatpush1.bf16.msra.mxu0 0
    %2908 = vmatprep.subr.bf16.mxu0 0
    %2909 = vmatpush1.bf16.msra.mxu0 0
    %2910 = vmatprep.subr.bf16.mxu0 0
    %2911 = vmatpush1.bf16.msra.mxu0 0
    %2912 = vmatprep.subr.bf16.mxu0 0
    %2913 = vmatpush1.bf16.msra.mxu0 0
    %2914 = vmatprep.subr.bf16.mxu0 0
    %2915 = vmatpush1.bf16.msra.mxu0 0
    %2916 = vmatprep.subr.bf16.mxu0 0
    %2917 = vmatpush1.bf16.msra.mxu0 0
    %2918 = vmatprep.subr.bf16.mxu0 0
    %2919 = vmatpush1.bf16.msra.mxu0 0
    %2920 = vmatprep.subr.bf16.mxu0 0
    %2921 = vmatpush1.bf16.msra.mxu0 0
    %2922 = vmatprep.subr.bf16.mxu0 0
    %2923 = vmatpush1.bf16.msra.mxu0 0
    %2924 = vmatprep.subr.bf16.mxu0 0
    %2925 = vmatpush1.bf16.msra.mxu0 0
    %2926 = vmatprep.subr.bf16.mxu0 0
    %2927 = vmatpush1.bf16.msra.mxu0 0
    %2928 = vmatprep.subr.bf16.mxu0 0
    %2929 = vmatpush1.bf16.msra.mxu0 0
    %2930 = vmatprep.subr.bf16.mxu0 0
    %2931 = vmatpush1.bf16.msra.mxu0 0
    %2932 = vmatprep.subr.bf16.mxu0 0
    %2933 = vmatpush1.bf16.msra.mxu0 0
    %2934 = vmatprep.subr.bf16.mxu0 0
    %2935 = vmatpush1.bf16.msra.mxu0 0
    %2936 = vmatprep.mubr.bf16.mxu0 0
    %2937 = vmatmul.mubr.bf16.gmra.mrb[0].mxu0 %v2899
    %v2938 = vpop.f32.mrb[0].mxu0
    %v2939 = vadd.f32 0.0, %v2938
    %v2940 = vpop.f32.mrb[0].mxu0
    %v2941 = vpop.f32.mrb[0].mxu0
    %v2942 = vpop.f32.mrb[0].mxu0
    %2943 = vdwg.mxu0
    %v2944 = vpack.c.bf16 %v2939, %v2893
    %v2946 = vsel %vm318, %v2944, 0
    %v2949 = vsel %vm438, %v2191, 0
    %2951 = vmatprep.subr.bf16.mxu0 0
    %2952 = vmatpush1.bf16.msra.mxu0 %v2949
    %2953 = vmatprep.subr.bf16.mxu0 0
    %2954 = vmatpush1.bf16.msra.mxu0 0
    %2955 = vmatprep.subr.bf16.mxu0 0
    %2956 = vmatpush1.bf16.msra.mxu0 0
    %2957 = vmatprep.subr.bf16.mxu0 0
    %2958 = vmatpush1.bf16.msra.mxu0 0
    %2959 = vmatprep.subr.bf16.mxu0 0
    %2960 = vmatpush1.bf16.msra.mxu0 0
    %2961 = vmatprep.subr.bf16.mxu0 0
    %2962 = vmatpush1.bf16.msra.mxu0 0
    %2963 = vmatprep.subr.bf16.mxu0 0
    %2964 = vmatpush1.bf16.msra.mxu0 0
    %2965 = vmatprep.subr.bf16.mxu0 0
    %2966 = vmatpush1.bf16.msra.mxu0 0
    %2967 = vmatprep.subr.bf16.mxu0 0
    %2968 = vmatpush1.bf16.msra.mxu0 0
    %2969 = vmatprep.subr.bf16.mxu0 0
    %2970 = vmatpush1.bf16.msra.mxu0 0
    %2971 = vmatprep.subr.bf16.mxu0 0
    %2972 = vmatpush1.bf16.msra.mxu0 0
    %2973 = vmatprep.subr.bf16.mxu0 0
    %2974 = vmatpush1.bf16.msra.mxu0 0
    %2975 = vmatprep.subr.bf16.mxu0 0
    %2976 = vmatpush1.bf16.msra.mxu0 0
    %2977 = vmatprep.subr.bf16.mxu0 0
    %2978 = vmatpush1.bf16.msra.mxu0 0
    %2979 = vmatprep.subr.bf16.mxu0 0
    %2980 = vmatpush1.bf16.msra.mxu0 0
    %2981 = vmatprep.subr.bf16.mxu0 0
    %2982 = vmatpush1.bf16.msra.mxu0 0
    %2983 = vmatprep.mubr.bf16.mxu0 0
    %2984 = vmatmul.mubr.bf16.gmra.mrb[0].mxu0 %v2946
    %v2985 = vpop.f32.mrb[0].mxu0
    %v2986 = vadd.f32 0.0, %v2985
    %v2987 = vpop.f32.mrb[0].mxu0
    %v2988 = vpop.f32.mrb[0].mxu0
    %v2989 = vadd.f32 0.0, %v2988
    %v2990 = vpop.f32.mrb[0].mxu0
    %2991 = vdwg.mxu0
    %v2993 = vsel %vm318, %v2570, 0
    %v2996 = vsel %vm438, %v2190, 0
    %2998 = vmatprep.subr.bf16.mxu0 0
    %2999 = vmatpush1.bf16.msra.mxu0 %v2996
    %3000 = vmatprep.subr.bf16.mxu0 0
    %3001 = vmatpush1.bf16.msra.mxu0 0
    %3002 = vmatprep.subr.bf16.mxu0 0
    %3003 = vmatpush1.bf16.msra.mxu0 0
    %3004 = vmatprep.subr.bf16.mxu0 0
    %3005 = vmatpush1.bf16.msra.mxu0 0
    %3006 = vmatprep.subr.bf16.mxu0 0
    %3007 = vmatpush1.bf16.msra.mxu0 0
    %3008 = vmatprep.subr.bf16.mxu0 0
    %3009 = vmatpush1.bf16.msra.mxu0 0
    %3010 = vmatprep.subr.bf16.mxu0 0
    %3011 = vmatpush1.bf16.msra.mxu0 0
    %3012 = vmatprep.subr.bf16.mxu0 0
    %3013 = vmatpush1.bf16.msra.mxu0 0
    %3014 = vmatprep.subr.bf16.mxu0 0
    %3015 = vmatpush1.bf16.msra.mxu0 0
    %3016 = vmatprep.subr.bf16.mxu0 0
    %3017 = vmatpush1.bf16.msra.mxu0 0
    %3018 = vmatprep.subr.bf16.mxu0 0
    %3019 = vmatpush1.bf16.msra.mxu0 0
    %3020 = vmatprep.subr.bf16.mxu0 0
    %3021 = vmatpush1.bf16.msra.mxu0 0
    %3022 = vmatprep.subr.bf16.mxu0 0
    %3023 = vmatpush1.bf16.msra.mxu0 0
    %3024 = vmatprep.subr.bf16.mxu0 0
    %3025 = vmatpush1.bf16.msra.mxu0 0
    %3026 = vmatprep.subr.bf16.mxu0 0
    %3027 = vmatpush1.bf16.msra.mxu0 0
    %3028 = vmatprep.subr.bf16.mxu0 0
    %3029 = vmatpush1.bf16.msra.mxu0 0
    %3030 = vmatprep.mubr.bf16.mxu0 0
    %3031 = vmatmul.mubr.bf16.gmra.mrb[0].mxu0 %v2993
    %v3032 = vpop.f32.mrb[0].mxu0
    %v3033 = vadd.f32 %v2986, %v3032
    %v3034 = vpop.f32.mrb[0].mxu0
    %v3035 = vpop.f32.mrb[0].mxu0
    %v3036 = vadd.f32 %v2989, %v3035
    %v3037 = vpop.f32.mrb[0].mxu0
    %3038 = vdwg.mxu0
    %v3043 = vunpack.c.l.b16 %v2147
    %v3044 = vunpack.c.l.b16 %v2148
    %v3045 = vunpack.c.l.b16 %v2149
    %v3046 = vunpack.c.l.b16 %v2150
    %v3047 = vpack.c.b16 %v3044, %v3043
    %v3048 = vpack.c.b16 %v3046, %v3045
    %3051 = vmatprep.subr.bf16.mxu0 0
    %3052 = vmatpush1.bf16.msra.mxu0 %v3047
    %3053 = vmatprep.subr.bf16.mxu0 0
    %3054 = vmatpush1.bf16.msra.mxu0 %v3048
    %3055 = vmatprep.subr.bf16.mxu0 0
    %3056 = vmatpush1.bf16.msra.mxu0 0
    %3057 = vmatprep.subr.bf16.mxu0 0
    %3058 = vmatpush1.bf16.msra.mxu0 0
    %3059 = vmatprep.subr.bf16.mxu0 0
    %3060 = vmatpush1.bf16.msra.mxu0 0
    %3061 = vmatprep.subr.bf16.mxu0 0
    %3062 = vmatpush1.bf16.msra.mxu0 0
    %3063 = vmatprep.subr.bf16.mxu0 0
    %3064 = vmatpush1.bf16.msra.mxu0 0
    %3065 = vmatprep.subr.bf16.mxu0 0
    %3066 = vmatpush1.bf16.msra.mxu0 0
    %3067 = vmatprep.subr.bf16.mxu0 0
    %3068 = vmatpush1.bf16.msra.mxu0 0
    %3069 = vmatprep.subr.bf16.mxu0 0
    %3070 = vmatpush1.bf16.msra.mxu0 0
    %3071 = vmatprep.subr.bf16.mxu0 0
    %3072 = vmatpush1.bf16.msra.mxu0 0
    %3073 = vmatprep.subr.bf16.mxu0 0
    %3074 = vmatpush1.bf16.msra.mxu0 0
    %3075 = vmatprep.subr.bf16.mxu0 0
    %3076 = vmatpush1.bf16.msra.mxu0 0
    %3077 = vmatprep.subr.bf16.mxu0 0
    %3078 = vmatpush1.bf16.msra.mxu0 0
    %3079 = vmatprep.subr.bf16.mxu0 0
    %3080 = vmatpush1.bf16.msra.mxu0 0
    %3081 = vmatprep.subr.bf16.mxu0 0
    %3082 = vmatpush1.bf16.msra.mxu0 0
    %3083 = vmatprep.mubr.bf16.mxu0 0
    %3084 = vmatmul.mubr.bf16.gmra.mrb[0].mxu0 %v2207
    %v3085 = vpop.f32.mrb[0].mxu0
    %v3086 = vadd.f32 0.0, %v3085
    %v3087 = vpop.f32.mrb[0].mxu0
    %v3088 = vpop.f32.mrb[0].mxu0
    %v3089 = vadd.f32 0.0, %v3088
    %v3090 = vpop.f32.mrb[0].mxu0
    %3091 = vdwg.mxu0
    %v3096 = vunpack.c.l.b16 %v2164
    %v3097 = vunpack.c.l.b16 %v2165
    %v3098 = vunpack.c.l.b16 %v2166
    %v3099 = vunpack.c.l.b16 %v2167
    %v3100 = vpack.c.b16 %v3097, %v3096
    %v3101 = vpack.c.b16 %v3099, %v3098
    %3104 = vmatprep.subr.bf16.mxu0 0
    %3105 = vmatpush1.bf16.msra.mxu0 %v3100
    %3106 = vmatprep.subr.bf16.mxu0 0
    %3107 = vmatpush1.bf16.msra.mxu0 %v3101
    %3108 = vmatprep.subr.bf16.mxu0 0
    %3109 = vmatpush1.bf16.msra.mxu0 0
    %3110 = vmatprep.subr.bf16.mxu0 0
    %3111 = vmatpush1.bf16.msra.mxu0 0
    %3112 = vmatprep.subr.bf16.mxu0 0
    %3113 = vmatpush1.bf16.msra.mxu0 0
    %3114 = vmatprep.subr.bf16.mxu0 0
    %3115 = vmatpush1.bf16.msra.mxu0 0
    %3116 = vmatprep.subr.bf16.mxu0 0
    %3117 = vmatpush1.bf16.msra.mxu0 0
    %3118 = vmatprep.subr.bf16.mxu0 0
    %3119 = vmatpush1.bf16.msra.mxu0 0
    %3120 = vmatprep.subr.bf16.mxu0 0
    %3121 = vmatpush1.bf16.msra.mxu0 0
    %3122 = vmatprep.subr.bf16.mxu0 0
    %3123 = vmatpush1.bf16.msra.mxu0 0
    %3124 = vmatprep.subr.bf16.mxu0 0
    %3125 = vmatpush1.bf16.msra.mxu0 0
    %3126 = vmatprep.subr.bf16.mxu0 0
    %3127 = vmatpush1.bf16.msra.mxu0 0
    %3128 = vmatprep.subr.bf16.mxu0 0
    %3129 = vmatpush1.bf16.msra.mxu0 0
    %3130 = vmatprep.subr.bf16.mxu0 0
    %3131 = vmatpush1.bf16.msra.mxu0 0
    %3132 = vmatprep.subr.bf16.mxu0 0
    %3133 = vmatpush1.bf16.msra.mxu0 0
    %3134 = vmatprep.subr.bf16.mxu0 0
    %3135 = vmatpush1.bf16.msra.mxu0 0
    %3136 = vmatprep.mubr.bf16.mxu0 0
    %3137 = vmatmul.mubr.bf16.gmra.mrb[0].mxu0 %v2207
    %v3138 = vpop.f32.mrb[0].mxu0
    %v3139 = vadd.f32 0.0, %v3138
    %v3140 = vpop.f32.mrb[0].mxu0
    %v3141 = vpop.f32.mrb[0].mxu0
    %v3142 = vadd.f32 0.0, %v3141
    %v3143 = vpop.f32.mrb[0].mxu0
    %3144 = vdwg.mxu0
    %v3149 = vunpack.c.l.b16 %v2181
    %v3150 = vunpack.c.l.b16 %v2182
    %v3151 = vunpack.c.l.b16 %v2183
    %v3152 = vunpack.c.l.b16 %v2184
    %v3153 = vpack.c.b16 %v3150, %v3149
    %v3154 = vpack.c.b16 %v3152, %v3151
    %3157 = vmatprep.subr.bf16.mxu0 0
    %3158 = vmatpush1.bf16.msra.mxu0 %v3153
    %3159 = vmatprep.subr.bf16.mxu0 0
    %3160 = vmatpush1.bf16.msra.mxu0 %v3154
    %3161 = vmatprep.subr.bf16.mxu0 0
    %3162 = vmatpush1.bf16.msra.mxu0 0
    %3163 = vmatprep.subr.bf16.mxu0 0
    %3164 = vmatpush1.bf16.msra.mxu0 0
    %3165 = vmatprep.subr.bf16.mxu0 0
    %3166 = vmatpush1.bf16.msra.mxu0 0
    %3167 = vmatprep.subr.bf16.mxu0 0
    %3168 = vmatpush1.bf16.msra.mxu0 0
    %3169 = vmatprep.subr.bf16.mxu0 0
    %3170 = vmatpush1.bf16.msra.mxu0 0
    %3171 = vmatprep.subr.bf16.mxu0 0
    %3172 = vmatpush1.bf16.msra.mxu0 0
    %3173 = vmatprep.subr.bf16.mxu0 0
    %3174 = vmatpush1.bf16.msra.mxu0 0
    %3175 = vmatprep.subr.bf16.mxu0 0
    %3176 = vmatpush1.bf16.msra.mxu0 0
    %3177 = vmatprep.subr.bf16.mxu0 0
    %3178 = vmatpush1.bf16.msra.mxu0 0
    %3179 = vmatprep.subr.bf16.mxu0 0
    %3180 = vmatpush1.bf16.msra.mxu0 0
    %3181 = vmatprep.subr.bf16.mxu0 0
    %3182 = vmatpush1.bf16.msra.mxu0 0
    %3183 = vmatprep.subr.bf16.mxu0 0
    %3184 = vmatpush1.bf16.msra.mxu0 0
    %3185 = vmatprep.subr.bf16.mxu0 0
    %3186 = vmatpush1.bf16.msra.mxu0 0
    %3187 = vmatprep.subr.bf16.mxu0 0
    %3188 = vmatpush1.bf16.msra.mxu0 0
    %3189 = vmatprep.mubr.bf16.mxu0 0
    %3190 = vmatmul.mubr.bf16.gmra.mrb[0].mxu0 %v2207
    %v3191 = vpop.f32.mrb[0].mxu0
    %v3192 = vadd.f32 0.0, %v3191
    %v3193 = vpop.f32.mrb[0].mxu0
    %v3194 = vpop.f32.mrb[0].mxu0
    %v3195 = vadd.f32 0.0, %v3194
    %v3196 = vpop.f32.mrb[0].mxu0
    %3197 = vdwg.mxu0
    %v3198 = vpack.c.bf16 %v3086, %v3086
    %v3199 = vpack.c.bf16 %v3089, %v3089
    %v3200 = vpack.c.bf16 %v3139, %v3139
    %v3201 = vpack.c.bf16 %v3142, %v3142
    %v3202 = vpack.c.bf16 %v3192, %v3192
    %v3203 = vpack.c.bf16 %v3195, %v3195
    %v3205 = vsel %vm318, %v3198, 0
    %v3208 = vsel %vm318, %v3200, 0
    %3210 = vmatprep.subr.bf16.mxu0 0
    %3211 = vmatpush1.bf16.xpose.msra.mxu0 %v3208
    %3212 = vmatprep.subr.bf16.mxu0 0
    %3213 = vmatpush1.bf16.xpose.msra.mxu0 0
    %3214 = vmatprep.subr.bf16.mxu0 0
    %3215 = vmatpush1.bf16.xpose.msra.mxu0 0
    %3216 = vmatprep.subr.bf16.mxu0 0
    %3217 = vmatpush1.bf16.xpose.msra.mxu0 0
    %3218 = vmatprep.subr.bf16.mxu0 0
    %3219 = vmatpush1.bf16.xpose.msra.mxu0 0
    %3220 = vmatprep.subr.bf16.mxu0 0
    %3221 = vmatpush1.bf16.xpose.msra.mxu0 0
    %3222 = vmatprep.subr.bf16.mxu0 0
    %3223 = vmatpush1.bf16.xpose.msra.mxu0 0
    %3224 = vmatprep.subr.bf16.mxu0 0
    %3225 = vmatpush1.bf16.xpose.msra.mxu0 0
    %3226 = vmatprep.subr.bf16.mxu0 0
    %3227 = vmatpush1.bf16.xpose.msra.mxu0 0
    %3228 = vmatprep.subr.bf16.mxu0 0
    %3229 = vmatpush1.bf16.xpose.msra.mxu0 0
    %3230 = vmatprep.subr.bf16.mxu0 0
    %3231 = vmatpush1.bf16.xpose.msra.mxu0 0
    %3232 = vmatprep.subr.bf16.mxu0 0
    %3233 = vmatpush1.bf16.xpose.msra.mxu0 0
    %3234 = vmatprep.subr.bf16.mxu0 0
    %3235 = vmatpush1.bf16.xpose.msra.mxu0 0
    %3236 = vmatprep.subr.bf16.mxu0 0
    %3237 = vmatpush1.bf16.xpose.msra.mxu0 0
    %3238 = vmatprep.subr.bf16.mxu0 0
    %3239 = vmatpush1.bf16.xpose.msra.mxu0 0
    %3240 = vmatprep.subr.bf16.mxu0 0
    %3241 = vmatpush1.bf16.xpose.msra.mxu0 0
    %3242 = vmatprep.mubr.bf16.mxu0 0
    %3243 = vmatmul.mubr.bf16.gmra.mrb[0].mxu0 %v3205
    %v3244 = vpop.f32.mrb[0].mxu0
    %v3245 = vadd.f32 0.0, %v3244
    %v3246 = vpop.f32.mrb[0].mxu0
    %v3247 = vpop.f32.mrb[0].mxu0
    %v3248 = vpop.f32.mrb[0].mxu0
    %3249 = vdwg.mxu0
    %v3251 = vsel %vm318, %v3199, 0
    %v3254 = vsel %vm318, %v3201, 0
    %3256 = vmatprep.subr.bf16.mxu0 0
    %3257 = vmatpush1.bf16.xpose.msra.mxu0 %v3254
    %3258 = vmatprep.subr.bf16.mxu0 0
    %3259 = vmatpush1.bf16.xpose.msra.mxu0 0
    %3260 = vmatprep.subr.bf16.mxu0 0
    %3261 = vmatpush1.bf16.xpose.msra.mxu0 0
    %3262 = vmatprep.subr.bf16.mxu0 0
    %3263 = vmatpush1.bf16.xpose.msra.mxu0 0
    %3264 = vmatprep.subr.bf16.mxu0 0
    %3265 = vmatpush1.bf16.xpose.msra.mxu0 0
    %3266 = vmatprep.subr.bf16.mxu0 0
    %3267 = vmatpush1.bf16.xpose.msra.mxu0 0
    %3268 = vmatprep.subr.bf16.mxu0 0
    %3269 = vmatpush1.bf16.xpose.msra.mxu0 0
    %3270 = vmatprep.subr.bf16.mxu0 0
    %3271 = vmatpush1.bf16.xpose.msra.mxu0 0
    %3272 = vmatprep.subr.bf16.mxu0 0
    %3273 = vmatpush1.bf16.xpose.msra.mxu0 0
    %3274 = vmatprep.subr.bf16.mxu0 0
    %3275 = vmatpush1.bf16.xpose.msra.mxu0 0
    %3276 = vmatprep.subr.bf16.mxu0 0
    %3277 = vmatpush1.bf16.xpose.msra.mxu0 0
    %3278 = vmatprep.subr.bf16.mxu0 0
    %3279 = vmatpush1.bf16.xpose.msra.mxu0 0
    %3280 = vmatprep.subr.bf16.mxu0 0
    %3281 = vmatpush1.bf16.xpose.msra.mxu0 0
    %3282 = vmatprep.subr.bf16.mxu0 0
    %3283 = vmatpush1.bf16.xpose.msra.mxu0 0
    %3284 = vmatprep.subr.bf16.mxu0 0
    %3285 = vmatpush1.bf16.xpose.msra.mxu0 0
    %3286 = vmatprep.subr.bf16.mxu0 0
    %3287 = vmatpush1.bf16.xpose.msra.mxu0 0
    %3288 = vmatprep.mubr.bf16.mxu0 0
    %3289 = vmatmul.mubr.bf16.gmra.mrb[0].mxu0 %v3251
    %v3290 = vpop.f32.mrb[0].mxu0
    %v3291 = vadd.f32 0.0, %v3290
    %v3292 = vpop.f32.mrb[0].mxu0
    %v3293 = vpop.f32.mrb[0].mxu0
    %v3294 = vpop.f32.mrb[0].mxu0
    %3295 = vdwg.mxu0
    %v3296 = vsel %vm318, %v3245, -inf
    %3297 = vmax.xlane.f32.xlu0 %v3296
    %v3298 = vpop.xlane.xlu0 %3297
    %v3299 = vsel %vm318, %v3291, -inf
    %3300 = vmax.xlane.f32.xlu0 %v3299
    %v3301 = vpop.xlane.xlu0 %3300
    %v3302 = vsub.f32 %v3245, %v3298
    %v3303 = vsub.f32 %v3291, %v3301
    %v3304 = vmul.f32 %v3302, 1.442695
    %v3305 = vpow.pop %v3304
    %v3306 = vmul.f32 %v3303, 1.442695
    %v3307 = vpow.pop %v3306
    %v3308 = vsel %vm318, %v3305, 0.0
    %3309 = vadd.xlane.f32.xlu0 %v3308
    %v3310 = vpop.xlane.xlu0 %3309
    %v3311 = vsel %vm318, %v3307, 0.0
    %3312 = vadd.xlane.f32.xlu0 %v3311
    %v3313 = vpop.xlane.xlu0 %3312
    %v3314 = vrcp.pop %v3310
    %v3315 = vrcp.pop %v3313
    %v3316 = vmul.f32 %v3305, %v3314
    %v3317 = vmul.f32 %v3307, %v3315
    %v3318 = vpack.c.bf16 %v3316, %v3316
    %v3319 = vpack.c.bf16 %v3317, %v3317
    %v3321 = vsel %vm318, %v3318, 0
    %v3324 = vsel %vm438, %v3202, 0
    %3326 = vmatprep.subr.bf16.mxu0 0
    %3327 = vmatpush1.bf16.msra.mxu0 %v3324
    %3328 = vmatprep.subr.bf16.mxu0 0
    %3329 = vmatpush1.bf16.msra.mxu0 0
    %3330 = vmatprep.subr.bf16.mxu0 0
    %3331 = vmatpush1.bf16.msra.mxu0 0
    %3332 = vmatprep.subr.bf16.mxu0 0
    %3333 = vmatpush1.bf16.msra.mxu0 0
    %3334 = vmatprep.subr.bf16.mxu0 0
    %3335 = vmatpush1.bf16.msra.mxu0 0
    %3336 = vmatprep.subr.bf16.mxu0 0
    %3337 = vmatpush1.bf16.msra.mxu0 0
    %3338 = vmatprep.subr.bf16.mxu0 0
    %3339 = vmatpush1.bf16.msra.mxu0 0
    %3340 = vmatprep.subr.bf16.mxu0 0
    %3341 = vmatpush1.bf16.msra.mxu0 0
    %3342 = vmatprep.subr.bf16.mxu0 0
    %3343 = vmatpush1.bf16.msra.mxu0 0
    %3344 = vmatprep.subr.bf16.mxu0 0
    %3345 = vmatpush1.bf16.msra.mxu0 0
    %3346 = vmatprep.subr.bf16.mxu0 0
    %3347 = vmatpush1.bf16.msra.mxu0 0
    %3348 = vmatprep.subr.bf16.mxu0 0
    %3349 = vmatpush1.bf16.msra.mxu0 0
    %3350 = vmatprep.subr.bf16.mxu0 0
    %3351 = vmatpush1.bf16.msra.mxu0 0
    %3352 = vmatprep.subr.bf16.mxu0 0
    %3353 = vmatpush1.bf16.msra.mxu0 0
    %3354 = vmatprep.subr.bf16.mxu0 0
    %3355 = vmatpush1.bf16.msra.mxu0 0
    %3356 = vmatprep.subr.bf16.mxu0 0
    %3357 = vmatpush1.bf16.msra.mxu0 0
    %3358 = vmatprep.mubr.bf16.mxu0 0
    %3359 = vmatmul.mubr.bf16.gmra.mrb[0].mxu0 %v3321
    %v3360 = vpop.f32.mrb[0].mxu0
    %v3361 = vadd.f32 0.0, %v3360
    %v3362 = vpop.f32.mrb[0].mxu0
    %v3363 = vpop.f32.mrb[0].mxu0
    %v3364 = vpop.f32.mrb[0].mxu0
    %3365 = vdwg.mxu0
    %v3367 = vsel %vm318, %v3319, 0
    %v3370 = vsel %vm438, %v3203, 0
    %3372 = vmatprep.subr.bf16.mxu0 0
    %3373 = vmatpush1.bf16.msra.mxu0 %v3370
    %3374 = vmatprep.subr.bf16.mxu0 0
    %3375 = vmatpush1.bf16.msra.mxu0 0
    %3376 = vmatprep.subr.bf16.mxu0 0
    %3377 = vmatpush1.bf16.msra.mxu0 0
    %3378 = vmatprep.subr.bf16.mxu0 0
    %3379 = vmatpush1.bf16.msra.mxu0 0
    %3380 = vmatprep.subr.bf16.mxu0 0
    %3381 = vmatpush1.bf16.msra.mxu0 0
    %3382 = vmatprep.subr.bf16.mxu0 0
    %3383 = vmatpush1.bf16.msra.mxu0 0
    %3384 = vmatprep.subr.bf16.mxu0 0
    %3385 = vmatpush1.bf16.msra.mxu0 0
    %3386 = vmatprep.subr.bf16.mxu0 0
    %3387 = vmatpush1.bf16.msra.mxu0 0
    %3388 = vmatprep.subr.bf16.mxu0 0
    %3389 = vmatpush1.bf16.msra.mxu0 0
    %3390 = vmatprep.subr.bf16.mxu0 0
    %3391 = vmatpush1.bf16.msra.mxu0 0
    %3392 = vmatprep.subr.bf16.mxu0 0
    %3393 = vmatpush1.bf16.msra.mxu0 0
    %3394 = vmatprep.subr.bf16.mxu0 0
    %3395 = vmatpush1.bf16.msra.mxu0 0
    %3396 = vmatprep.subr.bf16.mxu0 0
    %3397 = vmatpush1.bf16.msra.mxu0 0
    %3398 = vmatprep.subr.bf16.mxu0 0
    %3399 = vmatpush1.bf16.msra.mxu0 0
    %3400 = vmatprep.subr.bf16.mxu0 0
    %3401 = vmatpush1.bf16.msra.mxu0 0
    %3402 = vmatprep.subr.bf16.mxu0 0
    %3403 = vmatpush1.bf16.msra.mxu0 0
    %3404 = vmatprep.mubr.bf16.mxu0 0
    %3405 = vmatmul.mubr.bf16.gmra.mrb[0].mxu0 %v3367
    %v3406 = vpop.f32.mrb[0].mxu0
    %v3407 = vadd.f32 0.0, %v3406
    %v3408 = vpop.f32.mrb[0].mxu0
    %v3409 = vpop.f32.mrb[0].mxu0
    %v3410 = vpop.f32.mrb[0].mxu0
    %3411 = vdwg.mxu0
    %v3412 = vpack.c.bf16 %v3407, %v3361
    %v3414 = vsel %vm318, %v3412, 0
    %v3417 = vsel %vm438, %v2192, 0
    %3419 = vmatprep.subr.bf16.mxu0 0
    %3420 = vmatpush1.bf16.msra.mxu0 %v3417
    %3421 = vmatprep.subr.bf16.mxu0 0
    %3422 = vmatpush1.bf16.msra.mxu0 0
    %3423 = vmatprep.subr.bf16.mxu0 0
    %3424 = vmatpush1.bf16.msra.mxu0 0
    %3425 = vmatprep.subr.bf16.mxu0 0
    %3426 = vmatpush1.bf16.msra.mxu0 0
    %3427 = vmatprep.subr.bf16.mxu0 0
    %3428 = vmatpush1.bf16.msra.mxu0 0
    %3429 = vmatprep.subr.bf16.mxu0 0
    %3430 = vmatpush1.bf16.msra.mxu0 0
    %3431 = vmatprep.subr.bf16.mxu0 0
    %3432 = vmatpush1.bf16.msra.mxu0 0
    %3433 = vmatprep.subr.bf16.mxu0 0
    %3434 = vmatpush1.bf16.msra.mxu0 0
    %3435 = vmatprep.subr.bf16.mxu0 0
    %3436 = vmatpush1.bf16.msra.mxu0 0
    %3437 = vmatprep.subr.bf16.mxu0 0
    %3438 = vmatpush1.bf16.msra.mxu0 0
    %3439 = vmatprep.subr.bf16.mxu0 0
    %3440 = vmatpush1.bf16.msra.mxu0 0
    %3441 = vmatprep.subr.bf16.mxu0 0
    %3442 = vmatpush1.bf16.msra.mxu0 0
    %3443 = vmatprep.subr.bf16.mxu0 0
    %3444 = vmatpush1.bf16.msra.mxu0 0
    %3445 = vmatprep.subr.bf16.mxu0 0
    %3446 = vmatpush1.bf16.msra.mxu0 0
    %3447 = vmatprep.subr.bf16.mxu0 0
    %3448 = vmatpush1.bf16.msra.mxu0 0
    %3449 = vmatprep.subr.bf16.mxu0 0
    %3450 = vmatpush1.bf16.msra.mxu0 0
    %3451 = vmatprep.mubr.bf16.mxu0 0
    %3452 = vmatmul.mubr.bf16.gmra.mrb[0].mxu0 %v3414
    %v3453 = vpop.f32.mrb[0].mxu0
    %v3454 = vadd.f32 0.0, %v3453
    %v3455 = vpop.f32.mrb[0].mxu0
    %v3456 = vpop.f32.mrb[0].mxu0
    %v3457 = vadd.f32 0.0, %v3456
    %v3458 = vpop.f32.mrb[0].mxu0
    %3459 = vdwg.mxu0
    %v3460 = vadd.f32 %v3033, %v3454
    %v3461 = vadd.f32 %v3036, %v3457
    %v3466 = vunpack.c.l.b16 %v2151
    %v3467 = vunpack.c.l.b16 %v2152
    %v3468 = vunpack.c.l.b16 %v2153
    %v3469 = vunpack.c.l.b16 %v2154
    %v3470 = vpack.c.b16 %v3467, %v3466
    %v3471 = vpack.c.b16 %v3469, %v3468
    %3474 = vmatprep.subr.bf16.mxu0 0
    %3475 = vmatpush1.bf16.msra.mxu0 %v3470
    %3476 = vmatprep.subr.bf16.mxu0 0
    %3477 = vmatpush1.bf16.msra.mxu0 %v3471
    %3478 = vmatprep.subr.bf16.mxu0 0
    %3479 = vmatpush1.bf16.msra.mxu0 0
    %3480 = vmatprep.subr.bf16.mxu0 0
    %3481 = vmatpush1.bf16.msra.mxu0 0
    %3482 = vmatprep.subr.bf16.mxu0 0
    %3483 = vmatpush1.bf16.msra.mxu0 0
    %3484 = vmatprep.subr.bf16.mxu0 0
    %3485 = vmatpush1.bf16.msra.mxu0 0
    %3486 = vmatprep.subr.bf16.mxu0 0
    %3487 = vmatpush1.bf16.msra.mxu0 0
    %3488 = vmatprep.subr.bf16.mxu0 0
    %3489 = vmatpush1.bf16.msra.mxu0 0
    %3490 = vmatprep.subr.bf16.mxu0 0
    %3491 = vmatpush1.bf16.msra.mxu0 0
    %3492 = vmatprep.subr.bf16.mxu0 0
    %3493 = vmatpush1.bf16.msra.mxu0 0
    %3494 = vmatprep.subr.bf16.mxu0 0
    %3495 = vmatpush1.bf16.msra.mxu0 0
    %3496 = vmatprep.subr.bf16.mxu0 0
    %3497 = vmatpush1.bf16.msra.mxu0 0
    %3498 = vmatprep.subr.bf16.mxu0 0
    %3499 = vmatpush1.bf16.msra.mxu0 0
    %3500 = vmatprep.subr.bf16.mxu0 0
    %3501 = vmatpush1.bf16.msra.mxu0 0
    %3502 = vmatprep.subr.bf16.mxu0 0
    %3503 = vmatpush1.bf16.msra.mxu0 0
    %3504 = vmatprep.subr.bf16.mxu0 0
    %3505 = vmatpush1.bf16.msra.mxu0 0
    %3506 = vmatprep.mubr.bf16.mxu0 0
    %3507 = vmatmul.mubr.bf16.gmra.mrb[0].mxu0 %v2207
    %v3508 = vpop.f32.mrb[0].mxu0
    %v3509 = vadd.f32 0.0, %v3508
    %v3510 = vpop.f32.mrb[0].mxu0
    %v3511 = vpop.f32.mrb[0].mxu0
    %v3512 = vadd.f32 0.0, %v3511
    %v3513 = vpop.f32.mrb[0].mxu0
    %3514 = vdwg.mxu0
    %v3519 = vunpack.c.l.b16 %v2168
    %v3520 = vunpack.c.l.b16 %v2169
    %v3521 = vunpack.c.l.b16 %v2170
    %v3522 = vunpack.c.l.b16 %v2171
    %v3523 = vpack.c.b16 %v3520, %v3519
    %v3524 = vpack.c.b16 %v3522, %v3521
    %3527 = vmatprep.subr.bf16.mxu0 0
    %3528 = vmatpush1.bf16.msra.mxu0 %v3523
    %3529 = vmatprep.subr.bf16.mxu0 0
    %3530 = vmatpush1.bf16.msra.mxu0 %v3524
    %3531 = vmatprep.subr.bf16.mxu0 0
    %3532 = vmatpush1.bf16.msra.mxu0 0
    %3533 = vmatprep.subr.bf16.mxu0 0
    %3534 = vmatpush1.bf16.msra.mxu0 0
    %3535 = vmatprep.subr.bf16.mxu0 0
    %3536 = vmatpush1.bf16.msra.mxu0 0
    %3537 = vmatprep.subr.bf16.mxu0 0
    %3538 = vmatpush1.bf16.msra.mxu0 0
    %3539 = vmatprep.subr.bf16.mxu0 0
    %3540 = vmatpush1.bf16.msra.mxu0 0
    %3541 = vmatprep.subr.bf16.mxu0 0
    %3542 = vmatpush1.bf16.msra.mxu0 0
    %3543 = vmatprep.subr.bf16.mxu0 0
    %3544 = vmatpush1.bf16.msra.mxu0 0
    %3545 = vmatprep.subr.bf16.mxu0 0
    %3546 = vmatpush1.bf16.msra.mxu0 0
    %3547 = vmatprep.subr.bf16.mxu0 0
    %3548 = vmatpush1.bf16.msra.mxu0 0
    %3549 = vmatprep.subr.bf16.mxu0 0
    %3550 = vmatpush1.bf16.msra.mxu0 0
    %3551 = vmatprep.subr.bf16.mxu0 0
    %3552 = vmatpush1.bf16.msra.mxu0 0
    %3553 = vmatprep.subr.bf16.mxu0 0
    %3554 = vmatpush1.bf16.msra.mxu0 0
    %3555 = vmatprep.subr.bf16.mxu0 0
    %3556 = vmatpush1.bf16.msra.mxu0 0
    %3557 = vmatprep.subr.bf16.mxu0 0
    %3558 = vmatpush1.bf16.msra.mxu0 0
    %3559 = vmatprep.mubr.bf16.mxu0 0
    %3560 = vmatmul.mubr.bf16.gmra.mrb[0].mxu0 %v2207
    %v3561 = vpop.f32.mrb[0].mxu0
    %v3562 = vadd.f32 0.0, %v3561
    %v3563 = vpop.f32.mrb[0].mxu0
    %v3564 = vpop.f32.mrb[0].mxu0
    %v3565 = vadd.f32 0.0, %v3564
    %v3566 = vpop.f32.mrb[0].mxu0
    %3567 = vdwg.mxu0
    %v3572 = vunpack.c.l.b16 %v2185
    %v3573 = vunpack.c.l.b16 %v2186
    %v3574 = vunpack.c.l.b16 %v2187
    %v3575 = vunpack.c.l.b16 %v2188
    %v3576 = vpack.c.b16 %v3573, %v3572
    %v3577 = vpack.c.b16 %v3575, %v3574
    %3580 = vmatprep.subr.bf16.mxu0 0
    %3581 = vmatpush1.bf16.msra.mxu0 %v3576
    %3582 = vmatprep.subr.bf16.mxu0 0
    %3583 = vmatpush1.bf16.msra.mxu0 %v3577
    %3584 = vmatprep.subr.bf16.mxu0 0
    %3585 = vmatpush1.bf16.msra.mxu0 0
    %3586 = vmatprep.subr.bf16.mxu0 0
    %3587 = vmatpush1.bf16.msra.mxu0 0
    %3588 = vmatprep.subr.bf16.mxu0 0
    %3589 = vmatpush1.bf16.msra.mxu0 0
    %3590 = vmatprep.subr.bf16.mxu0 0
    %3591 = vmatpush1.bf16.msra.mxu0 0
    %3592 = vmatprep.subr.bf16.mxu0 0
    %3593 = vmatpush1.bf16.msra.mxu0 0
    %3594 = vmatprep.subr.bf16.mxu0 0
    %3595 = vmatpush1.bf16.msra.mxu0 0
    %3596 = vmatprep.subr.bf16.mxu0 0
    %3597 = vmatpush1.bf16.msra.mxu0 0
    %3598 = vmatprep.subr.bf16.mxu0 0
    %3599 = vmatpush1.bf16.msra.mxu0 0
    %3600 = vmatprep.subr.bf16.mxu0 0
    %3601 = vmatpush1.bf16.msra.mxu0 0
    %3602 = vmatprep.subr.bf16.mxu0 0
    %3603 = vmatpush1.bf16.msra.mxu0 0
    %3604 = vmatprep.subr.bf16.mxu0 0
    %3605 = vmatpush1.bf16.msra.mxu0 0
    %3606 = vmatprep.subr.bf16.mxu0 0
    %3607 = vmatpush1.bf16.msra.mxu0 0
    %3608 = vmatprep.subr.bf16.mxu0 0
    %3609 = vmatpush1.bf16.msra.mxu0 0
    %3610 = vmatprep.subr.bf16.mxu0 0
    %3611 = vmatpush1.bf16.msra.mxu0 0
    %3612 = vmatprep.mubr.bf16.mxu0 0
    %3613 = vmatmul.mubr.bf16.gmra.mrb[0].mxu0 %v2207
    %v3614 = vpop.f32.mrb[0].mxu0
    %v3615 = vadd.f32 0.0, %v3614
    %v3616 = vpop.f32.mrb[0].mxu0
    %v3617 = vpop.f32.mrb[0].mxu0
    %v3618 = vadd.f32 0.0, %v3617
    %v3619 = vpop.f32.mrb[0].mxu0
    %3620 = vdwg.mxu0
    %v3621 = vpack.c.bf16 %v3509, %v3509
    %v3622 = vpack.c.bf16 %v3512, %v3512
    %v3623 = vpack.c.bf16 %v3562, %v3562
    %v3624 = vpack.c.bf16 %v3565, %v3565
    %v3625 = vpack.c.bf16 %v3615, %v3615
    %v3626 = vpack.c.bf16 %v3618, %v3618
    %v3628 = vsel %vm318, %v3621, 0
    %v3631 = vsel %vm318, %v3623, 0
    %3633 = vmatprep.subr.bf16.mxu0 0
    %3634 = vmatpush1.bf16.xpose.msra.mxu0 %v3631
    %3635 = vmatprep.subr.bf16.mxu0 0
    %3636 = vmatpush1.bf16.xpose.msra.mxu0 0
    %3637 = vmatprep.subr.bf16.mxu0 0
    %3638 = vmatpush1.bf16.xpose.msra.mxu0 0
    %3639 = vmatprep.subr.bf16.mxu0 0
    %3640 = vmatpush1.bf16.xpose.msra.mxu0 0
    %3641 = vmatprep.subr.bf16.mxu0 0
    %3642 = vmatpush1.bf16.xpose.msra.mxu0 0
    %3643 = vmatprep.subr.bf16.mxu0 0
    %3644 = vmatpush1.bf16.xpose.msra.mxu0 0
    %3645 = vmatprep.subr.bf16.mxu0 0
    %3646 = vmatpush1.bf16.xpose.msra.mxu0 0
    %3647 = vmatprep.subr.bf16.mxu0 0
    %3648 = vmatpush1.bf16.xpose.msra.mxu0 0
    %3649 = vmatprep.subr.bf16.mxu0 0
    %3650 = vmatpush1.bf16.xpose.msra.mxu0 0
    %3651 = vmatprep.subr.bf16.mxu0 0
    %3652 = vmatpush1.bf16.xpose.msra.mxu0 0
    %3653 = vmatprep.subr.bf16.mxu0 0
    %3654 = vmatpush1.bf16.xpose.msra.mxu0 0
    %3655 = vmatprep.subr.bf16.mxu0 0
    %3656 = vmatpush1.bf16.xpose.msra.mxu0 0
    %3657 = vmatprep.subr.bf16.mxu0 0
    %3658 = vmatpush1.bf16.xpose.msra.mxu0 0
    %3659 = vmatprep.subr.bf16.mxu0 0
    %3660 = vmatpush1.bf16.xpose.msra.mxu0 0
    %3661 = vmatprep.subr.bf16.mxu0 0
    %3662 = vmatpush1.bf16.xpose.msra.mxu0 0
    %3663 = vmatprep.subr.bf16.mxu0 0
    %3664 = vmatpush1.bf16.xpose.msra.mxu0 0
    %3665 = vmatprep.mubr.bf16.mxu0 0
    %3666 = vmatmul.mubr.bf16.gmra.mrb[0].mxu0 %v3628
    %v3667 = vpop.f32.mrb[0].mxu0
    %v3668 = vadd.f32 0.0, %v3667
    %v3669 = vpop.f32.mrb[0].mxu0
    %v3670 = vpop.f32.mrb[0].mxu0
    %v3671 = vpop.f32.mrb[0].mxu0
    %3672 = vdwg.mxu0
    %v3674 = vsel %vm318, %v3622, 0
    %v3677 = vsel %vm318, %v3624, 0
    %3679 = vmatprep.subr.bf16.mxu0 0
    %3680 = vmatpush1.bf16.xpose.msra.mxu0 %v3677
    %3681 = vmatprep.subr.bf16.mxu0 0
    %3682 = vmatpush1.bf16.xpose.msra.mxu0 0
    %3683 = vmatprep.subr.bf16.mxu0 0
    %3684 = vmatpush1.bf16.xpose.msra.mxu0 0
    %3685 = vmatprep.subr.bf16.mxu0 0
    %3686 = vmatpush1.bf16.xpose.msra.mxu0 0
    %3687 = vmatprep.subr.bf16.mxu0 0
    %3688 = vmatpush1.bf16.xpose.msra.mxu0 0
    %3689 = vmatprep.subr.bf16.mxu0 0
    %3690 = vmatpush1.bf16.xpose.msra.mxu0 0
    %3691 = vmatprep.subr.bf16.mxu0 0
    %3692 = vmatpush1.bf16.xpose.msra.mxu0 0
    %3693 = vmatprep.subr.bf16.mxu0 0
    %3694 = vmatpush1.bf16.xpose.msra.mxu0 0
    %3695 = vmatprep.subr.bf16.mxu0 0
    %3696 = vmatpush1.bf16.xpose.msra.mxu0 0
    %3697 = vmatprep.subr.bf16.mxu0 0
    %3698 = vmatpush1.bf16.xpose.msra.mxu0 0
    %3699 = vmatprep.subr.bf16.mxu0 0
    %3700 = vmatpush1.bf16.xpose.msra.mxu0 0
    %3701 = vmatprep.subr.bf16.mxu0 0
    %3702 = vmatpush1.bf16.xpose.msra.mxu0 0
    %3703 = vmatprep.subr.bf16.mxu0 0
    %3704 = vmatpush1.bf16.xpose.msra.mxu0 0
    %3705 = vmatprep.subr.bf16.mxu0 0
    %3706 = vmatpush1.bf16.xpose.msra.mxu0 0
    %3707 = vmatprep.subr.bf16.mxu0 0
    %3708 = vmatpush1.bf16.xpose.msra.mxu0 0
    %3709 = vmatprep.subr.bf16.mxu0 0
    %3710 = vmatpush1.bf16.xpose.msra.mxu0 0
    %3711 = vmatprep.mubr.bf16.mxu0 0
    %3712 = vmatmul.mubr.bf16.gmra.mrb[0].mxu0 %v3674
    %v3713 = vpop.f32.mrb[0].mxu0
    %v3714 = vadd.f32 0.0, %v3713
    %v3715 = vpop.f32.mrb[0].mxu0
    %v3716 = vpop.f32.mrb[0].mxu0
    %v3717 = vpop.f32.mrb[0].mxu0
    %3718 = vdwg.mxu0
    %v3719 = vsel %vm318, %v3668, -inf
    %3720 = vmax.xlane.f32.xlu0 %v3719
    %v3721 = vpop.xlane.xlu0 %3720
    %v3722 = vsel %vm318, %v3714, -inf
    %3723 = vmax.xlane.f32.xlu0 %v3722
    %v3724 = vpop.xlane.xlu0 %3723
    %v3725 = vsub.f32 %v3668, %v3721
    %v3726 = vsub.f32 %v3714, %v3724
    %v3727 = vmul.f32 %v3725, 1.442695
    %v3728 = vpow.pop %v3727
    %v3729 = vmul.f32 %v3726, 1.442695
    %v3730 = vpow.pop %v3729
    %v3731 = vsel %vm318, %v3728, 0.0
    %3732 = vadd.xlane.f32.xlu0 %v3731
    %v3733 = vpop.xlane.xlu0 %3732
    %v3734 = vsel %vm318, %v3730, 0.0
    %3735 = vadd.xlane.f32.xlu0 %v3734
    %v3736 = vpop.xlane.xlu0 %3735
    %v3737 = vrcp.pop %v3733
    %v3738 = vrcp.pop %v3736
    %v3739 = vmul.f32 %v3728, %v3737
    %v3740 = vmul.f32 %v3730, %v3738
    %v3741 = vpack.c.bf16 %v3739, %v3739
    %v3742 = vpack.c.bf16 %v3740, %v3740
    %v3744 = vsel %vm318, %v3741, 0
    %v3747 = vsel %vm438, %v3625, 0
    %3749 = vmatprep.subr.bf16.mxu0 0
    %3750 = vmatpush1.bf16.msra.mxu0 %v3747
    %3751 = vmatprep.subr.bf16.mxu0 0
    %3752 = vmatpush1.bf16.msra.mxu0 0
    %3753 = vmatprep.subr.bf16.mxu0 0
    %3754 = vmatpush1.bf16.msra.mxu0 0
    %3755 = vmatprep.subr.bf16.mxu0 0
    %3756 = vmatpush1.bf16.msra.mxu0 0
    %3757 = vmatprep.subr.bf16.mxu0 0
    %3758 = vmatpush1.bf16.msra.mxu0 0
    %3759 = vmatprep.subr.bf16.mxu0 0
    %3760 = vmatpush1.bf16.msra.mxu0 0
    %3761 = vmatprep.subr.bf16.mxu0 0
    %3762 = vmatpush1.bf16.msra.mxu0 0
    %3763 = vmatprep.subr.bf16.mxu0 0
    %3764 = vmatpush1.bf16.msra.mxu0 0
    %3765 = vmatprep.subr.bf16.mxu0 0
    %3766 = vmatpush1.bf16.msra.mxu0 0
    %3767 = vmatprep.subr.bf16.mxu0 0
    %3768 = vmatpush1.bf16.msra.mxu0 0
    %3769 = vmatprep.subr.bf16.mxu0 0
    %3770 = vmatpush1.bf16.msra.mxu0 0
    %3771 = vmatprep.subr.bf16.mxu0 0
    %3772 = vmatpush1.bf16.msra.mxu0 0
    %3773 = vmatprep.subr.bf16.mxu0 0
    %3774 = vmatpush1.bf16.msra.mxu0 0
    %3775 = vmatprep.subr.bf16.mxu0 0
    %3776 = vmatpush1.bf16.msra.mxu0 0
    %3777 = vmatprep.subr.bf16.mxu0 0
    %3778 = vmatpush1.bf16.msra.mxu0 0
    %3779 = vmatprep.subr.bf16.mxu0 0
    %3780 = vmatpush1.bf16.msra.mxu0 0
    %3781 = vmatprep.mubr.bf16.mxu0 0
    %3782 = vmatmul.mubr.bf16.gmra.mrb[0].mxu0 %v3744
    %v3783 = vpop.f32.mrb[0].mxu0
    %v3784 = vadd.f32 0.0, %v3783
    %v3785 = vpop.f32.mrb[0].mxu0
    %v3786 = vpop.f32.mrb[0].mxu0
    %v3787 = vpop.f32.mrb[0].mxu0
    %3788 = vdwg.mxu0
    %v3790 = vsel %vm318, %v3742, 0
    %v3793 = vsel %vm438, %v3626, 0
    %3795 = vmatprep.subr.bf16.mxu0 0
    %3796 = vmatpush1.bf16.msra.mxu0 %v3793
    %3797 = vmatprep.subr.bf16.mxu0 0
    %3798 = vmatpush1.bf16.msra.mxu0 0
    %3799 = vmatprep.subr.bf16.mxu0 0
    %3800 = vmatpush1.bf16.msra.mxu0 0
    %3801 = vmatprep.subr.bf16.mxu0 0
    %3802 = vmatpush1.bf16.msra.mxu0 0
    %3803 = vmatprep.subr.bf16.mxu0 0
    %3804 = vmatpush1.bf16.msra.mxu0 0
    %3805 = vmatprep.subr.bf16.mxu0 0
    %3806 = vmatpush1.bf16.msra.mxu0 0
    %3807 = vmatprep.subr.bf16.mxu0 0
    %3808 = vmatpush1.bf16.msra.mxu0 0
    %3809 = vmatprep.subr.bf16.mxu0 0
    %3810 = vmatpush1.bf16.msra.mxu0 0
    %3811 = vmatprep.subr.bf16.mxu0 0
    %3812 = vmatpush1.bf16.msra.mxu0 0
    %3813 = vmatprep.subr.bf16.mxu0 0
    %3814 = vmatpush1.bf16.msra.mxu0 0
    %3815 = vmatprep.subr.bf16.mxu0 0
    %3816 = vmatpush1.bf16.msra.mxu0 0
    %3817 = vmatprep.subr.bf16.mxu0 0
    %3818 = vmatpush1.bf16.msra.mxu0 0
    %3819 = vmatprep.subr.bf16.mxu0 0
    %3820 = vmatpush1.bf16.msra.mxu0 0
    %3821 = vmatprep.subr.bf16.mxu0 0
    %3822 = vmatpush1.bf16.msra.mxu0 0
    %3823 = vmatprep.subr.bf16.mxu0 0
    %3824 = vmatpush1.bf16.msra.mxu0 0
    %3825 = vmatprep.subr.bf16.mxu0 0
    %3826 = vmatpush1.bf16.msra.mxu0 0
    %3827 = vmatprep.mubr.bf16.mxu0 0
    %3828 = vmatmul.mubr.bf16.gmra.mrb[0].mxu0 %v3790
    %v3829 = vpop.f32.mrb[0].mxu0
    %v3830 = vadd.f32 0.0, %v3829
    %v3831 = vpop.f32.mrb[0].mxu0
    %v3832 = vpop.f32.mrb[0].mxu0
    %v3833 = vpop.f32.mrb[0].mxu0
    %3834 = vdwg.mxu0
    %v3835 = vpack.c.bf16 %v3830, %v3784
    %v3837 = vsel %vm318, %v3835, 0
    %v3840 = vsel %vm438, %v2193, 0
    %3842 = vmatprep.subr.bf16.mxu0 0
    %3843 = vmatpush1.bf16.msra.mxu0 %v3840
    %3844 = vmatprep.subr.bf16.mxu0 0
    %3845 = vmatpush1.bf16.msra.mxu0 0
    %3846 = vmatprep.subr.bf16.mxu0 0
    %3847 = vmatpush1.bf16.msra.mxu0 0
    %3848 = vmatprep.subr.bf16.mxu0 0
    %3849 = vmatpush1.bf16.msra.mxu0 0
    %3850 = vmatprep.subr.bf16.mxu0 0
    %3851 = vmatpush1.bf16.msra.mxu0 0
    %3852 = vmatprep.subr.bf16.mxu0 0
    %3853 = vmatpush1.bf16.msra.mxu0 0
    %3854 = vmatprep.subr.bf16.mxu0 0
    %3855 = vmatpush1.bf16.msra.mxu0 0
    %3856 = vmatprep.subr.bf16.mxu0 0
    %3857 = vmatpush1.bf16.msra.mxu0 0
    %3858 = vmatprep.subr.bf16.mxu0 0
    %3859 = vmatpush1.bf16.msra.mxu0 0
    %3860 = vmatprep.subr.bf16.mxu0 0
    %3861 = vmatpush1.bf16.msra.mxu0 0
    %3862 = vmatprep.subr.bf16.mxu0 0
    %3863 = vmatpush1.bf16.msra.mxu0 0
    %3864 = vmatprep.subr.bf16.mxu0 0
    %3865 = vmatpush1.bf16.msra.mxu0 0
    %3866 = vmatprep.subr.bf16.mxu0 0
    %3867 = vmatpush1.bf16.msra.mxu0 0
    %3868 = vmatprep.subr.bf16.mxu0 0
    %3869 = vmatpush1.bf16.msra.mxu0 0
    %3870 = vmatprep.subr.bf16.mxu0 0
    %3871 = vmatpush1.bf16.msra.mxu0 0
    %3872 = vmatprep.subr.bf16.mxu0 0
    %3873 = vmatpush1.bf16.msra.mxu0 0
    %3874 = vmatprep.mubr.bf16.mxu0 0
    %3875 = vmatmul.mubr.bf16.gmra.mrb[0].mxu0 %v3837
    %v3876 = vpop.f32.mrb[0].mxu0
    %v3877 = vadd.f32 0.0, %v3876
    %v3878 = vpop.f32.mrb[0].mxu0
    %v3879 = vpop.f32.mrb[0].mxu0
    %v3880 = vadd.f32 0.0, %v3879
    %v3881 = vpop.f32.mrb[0].mxu0
    %3882 = vdwg.mxu0
    %v3883 = vadd.f32 %v3460, %v3877
    %v3884 = vadd.f32 %v3461, %v3880
    %s3885 = scalar_lea.vmem %s7, 1
    %v3886 = vld [vmem:[%s3885] sm:$0x1]
    %v3888 = vlaneseq
    %v3889 = vshrl.u32 %v3888, 7
    %v3890 = vsub.s32 0, %v3889
    %v3891 = vrot.slane %v3886, %v3890
    %v3893 = vadd.f32 %v3883, %v3891
    %v3894 = vadd.f32 %v3884, %v3891
    %v3895 = vadd.f32 %v3893, %v2089
    %v3896 = vadd.f32 %v3894, %v2090
    %s3897 = scalar_lea.vmem %s8, 1
    %v3898 = vld [vmem:[%s3897] sm:$0x1]
    %s3899 = scalar_lea.vmem %s9, 1
    %v3900 = vld [vmem:[%s3899] sm:$0x1]
    %v3901 = vsel %vm53, %v3895, 0.0
    %3902 = vadd.xlane.f32.xlu0 %v3901
    %v3903 = vpop.xlane.xlu0 %3902
    %v3904 = vsel %vm53, %v3896, 0.0
    %3905 = vadd.xlane.f32.xlu0 %v3904
    %v3906 = vpop.xlane.xlu0 %3905
    %v3907 = vmul.f32 %v3903, %v60
    %v3908 = vmul.f32 %v3906, %v60
    %v3909 = vsub.f32 %v3895, %v3907
    %v3910 = vsub.f32 %v3896, %v3908
    %v3911 = vmul.f32 %v3909, %v3909
    %v3912 = vmul.f32 %v3910, %v3910
    %v3913 = vsel %vm53, %v3911, 0.0
    %3914 = vadd.xlane.f32.xlu0 %v3913
    %v3915 = vpop.xlane.xlu0 %3914
    %v3916 = vsel %vm53, %v3912, 0.0
    %3917 = vadd.xlane.f32.xlu0 %v3916
    %v3918 = vpop.xlane.xlu0 %3917
    %v3919 = vmul.f32 %v3915, %v60
    %v3920 = vmul.f32 %v3918, %v60
    %v3921 = vadd.f32 %v3919, 1e-05
    %v3922 = vadd.f32 %v3920, 1e-05
    %v3923 = vrsqrt.pop %v3921
    %v3924 = vrsqrt.pop %v3922
    %v3925 = vmul.f32 %v3909, %v3923
    %v3926 = vmul.f32 %v3910, %v3924
    %v3928 = vlaneseq
    %v3929 = vshrl.u32 %v3928, 7
    %v3930 = vsub.s32 0, %v3929
    %v3931 = vrot.slane %v3898, %v3930
    %v3933 = vmul.f32 %v3925, %v3931
    %v3934 = vmul.f32 %v3926, %v3931
    %v3936 = vlaneseq
    %v3937 = vshrl.u32 %v3936, 7
    %v3938 = vsub.s32 0, %v3937
    %v3939 = vrot.slane %v3900, %v3938
    %v3941 = vadd.f32 %v3933, %v3939
    %v3942 = vadd.f32 %v3934, %v3939
    %v3943 = vpack.c.bf16 %v3942, %v3941
    %s3944 = scalar_lea.vmem %s10, 16
    %v3945 = vld [vmem:[%s3944] sm:$0xf]
    %v3946 = vld [vmem:[%s3944 + $0x4] sm:$0xf]
    %v3947 = vld [vmem:[%s3944 + $0x8] sm:$0xf]
    %v3948 = vld [vmem:[%s3944 + $0xc] sm:$0xf]
    %s3949 = scalar_lea.vmem %s11, 1
    %v3950 = vld [vmem:[%s3949] sm:$0x1]
    %v3952 = vlaneseq
    %v3953 = vshrl.u32 %v3952, 7
    %v3954 = vsub.s32 0, %v3953
    %v3955 = vrot.slane %v3950, %v3954
    %v3961 = vunpack.c.l.b16 %v3945
    %v3962 = vunpack.c.l.b16 %v3946
    %v3963 = vunpack.c.l.b16 %v3947
    %v3964 = vunpack.c.l.b16 %v3948
    %v3965 = vpack.c.b16 %v3962, %v3961
    %v3966 = vpack.c.b16 %v3964, %v3963
    %v3970 = vsel %vm53, %v3943, 0
    %3972 = vmatprep.subr.bf16.mxu0 0
    %3973 = vmatpush1.bf16.msra.mxu0 %v3965
    %3974 = vmatprep.subr.bf16.mxu0 0
    %3975 = vmatpush1.bf16.msra.mxu0 %v3966
    %3976 = vmatprep.subr.bf16.mxu0 0
    %3977 = vmatpush1.bf16.msra.mxu0 0
    %3978 = vmatprep.subr.bf16.mxu0 0
    %3979 = vmatpush1.bf16.msra.mxu0 0
    %3980 = vmatprep.subr.bf16.mxu0 0
    %3981 = vmatpush1.bf16.msra.mxu0 0
    %3982 = vmatprep.subr.bf16.mxu0 0
    %3983 = vmatpush1.bf16.msra.mxu0 0
    %3984 = vmatprep.subr.bf16.mxu0 0
    %3985 = vmatpush1.bf16.msra.mxu0 0
    %3986 = vmatprep.subr.bf16.mxu0 0
    %3987 = vmatpush1.bf16.msra.mxu0 0
    %3988 = vmatprep.subr.bf16.mxu0 0
    %3989 = vmatpush1.bf16.msra.mxu0 0
    %3990 = vmatprep.subr.bf16.mxu0 0
    %3991 = vmatpush1.bf16.msra.mxu0 0
    %3992 = vmatprep.subr.bf16.mxu0 0
    %3993 = vmatpush1.bf16.msra.mxu0 0
    %3994 = vmatprep.subr.bf16.mxu0 0
    %3995 = vmatpush1.bf16.msra.mxu0 0
    %3996 = vmatprep.subr.bf16.mxu0 0
    %3997 = vmatpush1.bf16.msra.mxu0 0
    %3998 = vmatprep.subr.bf16.mxu0 0
    %3999 = vmatpush1.bf16.msra.mxu0 0
    %4000 = vmatprep.subr.bf16.mxu0 0
    %4001 = vmatpush1.bf16.msra.mxu0 0
    %4002 = vmatprep.subr.bf16.mxu0 0
    %4003 = vmatpush1.bf16.msra.mxu0 0
    %4004 = vmatprep.mubr.bf16.mxu0 0
    %4005 = vmatmul.mubr.bf16.gmra.mrb[0].mxu0 %v3970
    %v4006 = vpop.f32.mrb[0].mxu0
    %v4007 = vadd.f32 %v3955, %v4006
    %v4008 = vpop.f32.mrb[0].mxu0
    %v4009 = vpop.f32.mrb[0].mxu0
    %v4010 = vadd.f32 %v3955, %v4009
    %v4011 = vpop.f32.mrb[0].mxu0
    %4012 = vdwg.mxu0
    %v4013 = vmul.f32 %v4007, 0.5
    %v4014 = vmul.f32 %v4010, 0.5
    %v4015 = vmul.f32 %v4007, 0.70710677
    %v4016 = vmul.f32 %v4010, 0.70710677
    %v4017 = verf.f32.pop %v4015
    %v4018 = verf.f32.pop %v4016
    %v4019 = vadd.f32 %v4017, 1.0
    %v4020 = vadd.f32 %v4018, 1.0
    %v4021 = vmul.f32 %v4013, %v4019
    %v4022 = vmul.f32 %v4014, %v4020
    %v4023 = vpack.c.bf16 %v4022, %v4021
    %s4024 = scalar_lea.vmem %s12, 64
    %v4025 = vld [vmem:[%s4024] sm:$0xf]
    %v4026 = vld [vmem:[%s4024 + $0x4] sm:$0xf]
    %v4027 = vld [vmem:[%s4024 + $0x8] sm:$0xf]
    %v4028 = vld [vmem:[%s4024 + $0xc] sm:$0xf]
    %v4029 = vld [vmem:[%s4024 + $0x10] sm:$0xf]
    %v4030 = vld [vmem:[%s4024 + $0x14] sm:$0xf]
    %v4031 = vld [vmem:[%s4024 + $0x18] sm:$0xf]
    %v4032 = vld [vmem:[%s4024 + $0x1c] sm:$0xf]
    %v4033 = vld [vmem:[%s4024 + $0x20] sm:$0xf]
    %v4034 = vld [vmem:[%s4024 + $0x24] sm:$0xf]
    %v4035 = vld [vmem:[%s4024 + $0x28] sm:$0xf]
    %v4036 = vld [vmem:[%s4024 + $0x2c] sm:$0xf]
    %v4037 = vld [vmem:[%s4024 + $0x30] sm:$0xf]
    %v4038 = vld [vmem:[%s4024 + $0x34] sm:$0xf]
    %v4039 = vld [vmem:[%s4024 + $0x38] sm:$0xf]
    %v4040 = vld [vmem:[%s4024 + $0x3c] sm:$0xf]
    %s4041 = scalar_lea.vmem %s13, 1
    %v4042 = vld [vmem:[%s4041] sm:$0x1]
    %v4044 = vlaneseq
    %v4045 = vshrl.u32 %v4044, 7
    %v4046 = vsub.s32 0, %v4045
    %v4047 = vrot.slane %v4042, %v4046
    %v4065 = vunpack.c.l.b16 %v4025
    %v4066 = vunpack.c.l.b16 %v4026
    %v4067 = vunpack.c.l.b16 %v4027
    %v4068 = vunpack.c.l.b16 %v4028
    %v4069 = vunpack.c.l.b16 %v4029
    %v4070 = vunpack.c.l.b16 %v4030
    %v4071 = vunpack.c.l.b16 %v4031
    %v4072 = vunpack.c.l.b16 %v4032
    %v4073 = vunpack.c.l.b16 %v4033
    %v4074 = vunpack.c.l.b16 %v4034
    %v4075 = vunpack.c.l.b16 %v4035
    %v4076 = vunpack.c.l.b16 %v4036
    %v4077 = vunpack.c.l.b16 %v4037
    %v4078 = vunpack.c.l.b16 %v4038
    %v4079 = vunpack.c.l.b16 %v4039
    %v4080 = vunpack.c.l.b16 %v4040
    %v4081 = vpack.c.b16 %v4066, %v4065
    %v4082 = vpack.c.b16 %v4068, %v4067
    %v4083 = vpack.c.b16 %v4070, %v4069
    %v4084 = vpack.c.b16 %v4072, %v4071
    %v4085 = vpack.c.b16 %v4074, %v4073
    %v4086 = vpack.c.b16 %v4076, %v4075
    %v4087 = vpack.c.b16 %v4078, %v4077
    %v4088 = vpack.c.b16 %v4080, %v4079
    %4097 = vmatprep.subr.bf16.mxu0 0
    %4098 = vmatpush1.bf16.msra.mxu0 %v4081
    %4099 = vmatprep.subr.bf16.mxu0 0
    %4100 = vmatpush1.bf16.msra.mxu0 %v4082
    %4101 = vmatprep.subr.bf16.mxu0 0
    %4102 = vmatpush1.bf16.msra.mxu0 %v4083
    %4103 = vmatprep.subr.bf16.mxu0 0
    %4104 = vmatpush1.bf16.msra.mxu0 %v4084
    %4105 = vmatprep.subr.bf16.mxu0 0
    %4106 = vmatpush1.bf16.msra.mxu0 %v4085
    %4107 = vmatprep.subr.bf16.mxu0 0
    %4108 = vmatpush1.bf16.msra.mxu0 %v4086
    %4109 = vmatprep.subr.bf16.mxu0 0
    %4110 = vmatpush1.bf16.msra.mxu0 %v4087
    %4111 = vmatprep.subr.bf16.mxu0 0
    %4112 = vmatpush1.bf16.msra.mxu0 %v4088
    %4113 = vmatprep.subr.bf16.mxu0 0
    %4114 = vmatpush1.bf16.msra.mxu0 0
    %4115 = vmatprep.subr.bf16.mxu0 0
    %4116 = vmatpush1.bf16.msra.mxu0 0
    %4117 = vmatprep.subr.bf16.mxu0 0
    %4118 = vmatpush1.bf16.msra.mxu0 0
    %4119 = vmatprep.subr.bf16.mxu0 0
    %4120 = vmatpush1.bf16.msra.mxu0 0
    %4121 = vmatprep.subr.bf16.mxu0 0
    %4122 = vmatpush1.bf16.msra.mxu0 0
    %4123 = vmatprep.subr.bf16.mxu0 0
    %4124 = vmatpush1.bf16.msra.mxu0 0
    %4125 = vmatprep.subr.bf16.mxu0 0
    %4126 = vmatpush1.bf16.msra.mxu0 0
    %4127 = vmatprep.subr.bf16.mxu0 0
    %4128 = vmatpush1.bf16.msra.mxu0 0
    %4129 = vmatprep.mubr.bf16.mxu0 0
    %4130 = vmatmul.mubr.bf16.gmra.mrb[0].mxu0 %v4023
    %v4131 = vpop.f32.mrb[0].mxu0
    %v4132 = vadd.f32 %v4047, %v4131
    %v4133 = vpop.f32.mrb[0].mxu0
    %v4134 = vpop.f32.mrb[0].mxu0
    %v4135 = vadd.f32 %v4047, %v4134
    %v4136 = vpop.f32.mrb[0].mxu0
    %4137 = vdwg.mxu0
    %v4138 = vadd.f32 %v4132, %v3895
    %v4139 = vadd.f32 %v4135, %v3896
    %4140 = vst.msk [vmem:[#allocation2] sm:$0xff] %vm53, %v4138
    %4141 = vst.msk [vmem:[#allocation2 + $0x8] sm:$0xff] %vm53, %v4139
    // Predicated region
    $region58: #{tpu_custom_call.1} parent=1 // pred_check
      _
    $region59: #{tpu_custom_call.1} parent=1 // pred_check_branch
      %4143 = sbr.rel (0) target = $region61
    $region60: #{tpu_custom_call.1} parent=1 // pred_region
      %s4145 = ssub.s32 256, 256
      %4146 = vsyncadd [#allocation3], %s4145
      %s4147 = sshll.u32 [#allocation2], 4
      %s4148 = int_to_ptr.vmem [resolvable:$true] %s4147
      %4153 = dma.vmem_to_hbm [thread:$0]  %s4148, 256, %s14, [#allocation3], 128, 128, 8
    $region61: #{tpu_custom_call.1} parent=1 // pred_fallthru
      _
    // Predicated region
    $region62: #{tpu_custom_call.1} parent=1 // pred_check
      _
    $region63: #{tpu_custom_call.1} parent=1 // pred_check_branch
      %4155 = sbr.rel (0) target = $region65
    $region64: #{tpu_custom_call.1} parent=1 // pred_region
      %4156 = dma.done [#allocation3], 256
    $region65: #{tpu_custom_call.1} parent=1 // pred_fallthru
      _
    %4157 = vsyncpa [#allocation3], 1

</llo_original>
